<compile_context>
chip_gen: v5e
topology: v5e:2x2
jax: 0.10.0
libtpu: 0.0.40
codegen_flags: <defaults>
</compile_context>

<pallas_src>
import functools

import jax
import jax.numpy as jnp
from jax.experimental import pallas as pl
from jax.experimental.pallas import tpu as pltpu


def _fused_kernel(gate_ref, x93_ref, x87_ref, w_ref, gamma_ref, beta_ref,
                  o_ref,
                  m0_ref, sum_ref, sq_ref, shift_ref, wsc_ref,
                  *, n_cols, eps, use_bf16):
    # grid = (2, N): axis 0 = pass (0: batch statistics, 1: normalize+residual+relu),
    #                axis 1 = image index (one (C, H*W) slab per step).
    p = pl.program_id(0)
    i = pl.program_id(1)
    nt = pl.num_programs(1)

    # x99 = sigmoid(x97) * x93 : per-channel gate broadcast across the spatial lanes.
    g = jax.nn.sigmoid(gate_ref[...])                 # (C, 1)
    xg = g * x93_ref[...]                             # (C, HW)
    if use_bf16:
        xg = xg.astype(jnp.bfloat16)

    @pl.when(p == 0)
    def _stats_pass():
        w = w_ref[...]
        if use_bf16:
            w = w.astype(jnp.bfloat16)
        # x100 = 1x1 conv == (Cout, Cin) @ (Cin, HW) on the MXU.
        y = jnp.dot(w, xg, preferred_element_type=jnp.float32)   # (Cout, HW)

        @pl.when(i == 0)
        def _init():
            # Shift by the first image's per-channel mean so the one-pass variance
            # E[(y-m0)^2] - (E[y-m0])^2 does not suffer catastrophic cancellation.
            m0_ref[...] = jnp.mean(y, axis=1, keepdims=True)
            sum_ref[...] = jnp.zeros_like(sum_ref)
            sq_ref[...] = jnp.zeros_like(sq_ref)
            # Defensive: the resident output block is only written back after pass 1
            # overwrites it (out index only advances in pass 1), but give it a
            # defined value anyway so no uninitialized VMEM can ever leak out.
            o_ref[...] = jnp.zeros_like(o_ref)

        yc = y - m0_ref[...]
        sum_ref[...] += jnp.sum(yc, axis=1, keepdims=True)
        sq_ref[...] += jnp.sum(yc * yc, axis=1, keepdims=True)

        @pl.when(i == nt - 1)
        def _finalize():
            inv_n = jnp.float32(1.0 / n_cols)
            dmean = sum_ref[...] * inv_n
            var = jnp.maximum(sq_ref[...] * inv_n - dmean * dmean, 0.0)
            mean = m0_ref[...] + dmean
            scale = gamma_ref[...] * jax.lax.rsqrt(var + eps)    # fold BN affine
            shift_ref[...] = beta_ref[...] - mean * scale
            # Fold the BN scale into the resident 1x1-conv weight so pass 1 needs no
            # per-element multiply by `scale`.
            wsc_ref[...] = w_ref[...] * scale

    @pl.when(p == 1)
    def _apply_pass():
        w = wsc_ref[...]
        if use_bf16:
            w = w.astype(jnp.bfloat16)
        y = jnp.dot(w, xg, preferred_element_type=jnp.float32)   # BN-scaled conv out
        # x101 = BN(x100); x102 = x87 + x101; x103 = relu(x102)
        o_ref[...] = jnp.maximum(x87_ref[...] + y + shift_ref[...], 0.0)


def fused_forward(x97, x93, x87, conv_w, gamma, beta, eps=1e-5,
                  use_bf16_matmul=False):
    """x97: (N, C, 1, 1), x93/x87: (N, C, H, W), conv_w: (Cout, Cin, 1, 1).

    use_bf16_matmul: cast MXU operands to bf16 (keep f32 stats/output). Worthwhile on
    v5e where the doubled f32 matmul can become the bottleneck; off by default to hold
    the 1e-4 accuracy tolerance.
    """
    N, C, H, W = x93.shape
    Cout = conv_w.shape[0]
    assert conv_w.shape[1] == C and x87.shape[1] == Cout
    HW = H * W
    n_cols = N * HW

    # NCHW-native layout plumbing: pure reshapes only (no transpose, no channel pad,
    # no post-kernel slice) -> zero extra HBM passes outside the kernel.
    x93_r = x93.reshape(N, C, HW)
    x87_r = x87.reshape(N, Cout, HW)
    gate = x97.reshape(N, C, 1)
    w2d = conv_w.reshape(Cout, C)
    gamma2d = gamma.reshape(Cout, 1)
    beta2d = beta.reshape(Cout, 1)

    # TODO(synk): tile H*W (and/or pack several images per block) if C*H*W slabs ever
    # outgrow VMEM; for this module (216 x 784 f32 ~ 0.7 MiB per operand) a full-image
    # block is already the largest/most DMA-efficient tile.
    kernel = functools.partial(_fused_kernel, n_cols=n_cols, eps=eps,
                               use_bf16=use_bf16_matmul)

    out_r = pl.pallas_call(
        kernel,
        out_shape=jax.ShapeDtypeStruct((N, Cout, HW), jnp.float32),
        grid_spec=pltpu.PrefetchScalarGridSpec(
            num_scalar_prefetch=0,
            grid=(2, N),
            in_specs=[
                # per-image SE gate (tiny block, re-fetched per step)
                pl.BlockSpec((None, C, 1), lambda p, i: (i, 0, 0)),
                # x93 image slab: needed in both passes
                pl.BlockSpec((None, C, HW), lambda p, i: (i, 0, 0)),
                # x87 image slab: only needed in pass 1 (index pinned to 0 in pass 0)
                pl.BlockSpec((None, Cout, HW), lambda p, i: (i * p, 0, 0)),
                # 1x1 conv weight, fully resident
                pl.BlockSpec((Cout, C), lambda p, i: (0, 0)),
                pl.BlockSpec((Cout, 1), lambda p, i: (0, 0)),   # gamma
                pl.BlockSpec((Cout, 1), lambda p, i: (0, 0)),   # beta
            ],
            # Output block index only advances in pass 1 -> no garbage writebacks in
            # pass 0 (and the block is zero-initialized there defensively).
            out_specs=pl.BlockSpec((None, Cout, HW), lambda p, i: (i * p, 0, 0)),
            scratch_shapes=[
                pltpu.VMEM((Cout, 1), jnp.float32),     # m0: variance shift
                pltpu.VMEM((Cout, 1), jnp.float32),     # shifted per-channel sum
                pltpu.VMEM((Cout, 1), jnp.float32),     # shifted per-channel sumsq
                pltpu.VMEM((Cout, 1), jnp.float32),     # folded BN shift
                pltpu.VMEM((Cout, C), jnp.float32),     # BN-scale-folded conv weight
            ]),
        compiler_params=pltpu.CompilerParams(
            # Both axes sequential: batch stats must complete over ALL images (shared
            # scratch accumulators) before any slab is normalized.
            # TODO(synk): on v7x (2 TCs) split stats/apply into two pallas_calls so
            # the image axis can be marked "parallel" across TensorCores.
            dimension_semantics=("arbitrary", "arbitrary"),
            vmem_limit_bytes=48 * 1024 * 1024),
    )(gate, x93_r, x87_r, w2d, gamma2d, beta2d)

    return out_r.reshape(N, Cout, H, W)


def reference_forward(x97, x93, x87, conv_w, gamma, beta, eps=1e-5):
    """Pure-JAX reference mirroring the PyTorch forward (train-mode BN)."""
    x98 = jax.nn.sigmoid(x97)
    x99 = x98 * x93
    w2d = conv_w.reshape(conv_w.shape[0], conv_w.shape[1])
    x100 = jnp.einsum("nchw,oc->nohw", x99, w2d,
                      precision=jax.lax.Precision.HIGHEST)
    mean = jnp.mean(x100, axis=(0, 2, 3), keepdims=True)
    var = jnp.mean((x100 - mean) ** 2, axis=(0, 2, 3), keepdims=True)
    x101 = (x100 - mean) * jax.lax.rsqrt(var + eps)
    x101 = x101 * gamma.reshape(1, -1, 1, 1) + beta.reshape(1, -1, 1, 1)
    return jnp.maximum(x87 + x101, 0.0)


if __name__ == "__main__":
    # Small shapes consistent with the module: the conv is fixed at 216 -> 216.
    N, C, H, W = 2, 216, 14, 14

    key = jax.random.PRNGKey(0)
    k1, k2, k3, k4, k5, k6 = jax.random.split(key, 6)
    x97 = jax.random.normal(k1, (N, C, 1, 1), dtype=jnp.float32)
    x93 = jax.random.normal(k2, (N, C, H, W), dtype=jnp.float32)
    x87 = jax.random.normal(k3, (N, C, H, W), dtype=jnp.float32)

    # Deterministic synthetic parameters (not a checkpoint load).
    conv_w = jax.random.normal(k4, (C, C, 1, 1), dtype=jnp.float32) / jnp.sqrt(C)
    gamma = 1.0 + 0.1 * jax.random.normal(k5, (C,), dtype=jnp.float32)
    beta = 0.1 * jax.random.normal(k6, (C,), dtype=jnp.float32)

    out = fused_forward(x97, x93, x87, conv_w, gamma, beta)
    out = jax.block_until_ready(out)

    ref = reference_forward(x97, x93, x87, conv_w, gamma, beta)
    assert out.shape == (N, C, H, W)
    err = float(jnp.max(jnp.abs(out - ref)))
    assert jnp.allclose(out, ref, atol=1e-4, rtol=1e-4), f"mismatch vs reference (max abs err {err})"

    print("KERNEL_OK")
</pallas_src>

<mosaic_0001>
module attributes {stable_mosaic.version = 11 : i64} {
  func.func @_fused_kernel(%arg0: i32, %arg1: i32, %arg2: memref<1x216x1xf32, #tpu.memory_space<vmem>>, %arg3: memref<1x216x196xf32, #tpu.memory_space<vmem>>, %arg4: memref<1x216x196xf32, #tpu.memory_space<vmem>>, %arg5: memref<216x216xf32, #tpu.memory_space<vmem>>, %arg6: memref<216x1xf32, #tpu.memory_space<vmem>>, %arg7: memref<216x1xf32, #tpu.memory_space<vmem>>, %arg8: memref<1x216x196xf32, #tpu.memory_space<vmem>>, %arg9: memref<216x1xf32, #tpu.memory_space<vmem>>, %arg10: memref<216x1xf32, #tpu.memory_space<vmem>>, %arg11: memref<216x1xf32, #tpu.memory_space<vmem>>, %arg12: memref<216x1xf32, #tpu.memory_space<vmem>>, %arg13: memref<216x216xf32, #tpu.memory_space<vmem>>) attributes {dimension_semantics = [#tpu.dimension_semantics<arbitrary>, #tpu.dimension_semantics<arbitrary>], iteration_bounds = array<i64: 2, 2>, scalar_prefetch = 0 : i64, scratch_operands = 5 : i64, tpu.core_type = #tpu.core_type<tc>, window_params = [{transform_indices = @transform_0, window_bounds = array<i64: 1, 216, 1>}, {transform_indices = @transform_1, window_bounds = array<i64: 1, 216, 196>}, {transform_indices = @transform_2, window_bounds = array<i64: 1, 216, 196>}, {pipeline_mode = #tpu.pipeline_mode<synchronous>, transform_indices = @transform_3, window_bounds = array<i64: 216, 216>}, {pipeline_mode = #tpu.pipeline_mode<synchronous>, transform_indices = @transform_4, window_bounds = array<i64: 216, 1>}, {pipeline_mode = #tpu.pipeline_mode<synchronous>, transform_indices = @transform_5, window_bounds = array<i64: 216, 1>}, {transform_indices = @transform_6, window_bounds = array<i64: 1, 216, 196>}]} {
    %c0 = arith.constant 0 : index
    %c0_0 = arith.constant 0 : index
    %c0_1 = arith.constant 0 : index
    %0 = vector.load %arg2[%c0, %c0_0, %c0_1] : memref<1x216x1xf32, #tpu.memory_space<vmem>>, vector<1x216x1xf32>
    %1 = vector.shape_cast %0 : vector<1x216x1xf32> to vector<216x1xf32>
    %2 = arith.negf %1 : vector<216x1xf32>
    %3 = math.exp %2 : vector<216x1xf32>
    %cst = arith.constant 1.000000e+00 : f32
    %4 = vector.broadcast %cst : f32 to vector<216x1xf32>
    %5 = arith.addf %4, %3 : vector<216x1xf32>
    %6 = arith.divf %4, %5 : vector<216x1xf32>
    %c0_2 = arith.constant 0 : index
    %c0_3 = arith.constant 0 : index
    %c0_4 = arith.constant 0 : index
    %7 = vector.load %arg3[%c0_2, %c0_3, %c0_4] : memref<1x216x196xf32, #tpu.memory_space<vmem>>, vector<1x216x196xf32>
    %8 = vector.shape_cast %7 : vector<1x216x196xf32> to vector<216x196xf32>
    %9 = vector.broadcast %6 : vector<216x1xf32> to vector<216x196xf32>
    %10 = arith.mulf %9, %8 : vector<216x196xf32>
    %c0_i32 = arith.constant 0 : i32
    %11 = arith.cmpi eq, %arg0, %c0_i32 : i32
    %12 = arith.extui %11 : i1 to i32
    %c0_i32_5 = arith.constant 0 : i32
    %13 = arith.cmpi ne, %12, %c0_i32_5 : i32
    scf.if %13 {
      %c0_7 = arith.constant 0 : index
      %c0_8 = arith.constant 0 : index
      %17 = vector.load %arg5[%c0_7, %c0_8] : memref<216x216xf32, #tpu.memory_space<vmem>>, vector<216x216xf32>
      %cst_9 = arith.constant dense<0.000000e+00> : vector<216x196xf32>
      %18 = tpu.matmul %17, %10, %cst_9 {dimension_numbers = #tpu.dot_dimension_numbers<[1], [0], [0], [1], [0, 0, 1, 1], [], []>} : vector<216x216xf32>, vector<216x196xf32>, vector<216x196xf32> -> vector<216x196xf32>
      %c0_i32_10 = arith.constant 0 : i32
      %19 = arith.cmpi eq, %arg1, %c0_i32_10 : i32
      %20 = arith.extui %19 : i1 to i32
      %c0_i32_11 = arith.constant 0 : i32
      %21 = arith.cmpi ne, %20, %c0_i32_11 : i32
      scf.if %21 {
        %cst_26 = arith.constant dense<0.000000e+00> : vector<216xf32>
        %39 = vector.multi_reduction <add>, %18, %cst_26 [1] : vector<216x196xf32> to vector<216xf32>
        %40 = vector.shape_cast %39 : vector<216xf32> to vector<216x1xf32>
        %cst_27 = arith.constant 1.960000e+02 : f32
        %41 = vector.broadcast %cst_27 : f32 to vector<216x1xf32>
        %42 = arith.divf %40, %41 : vector<216x1xf32>
        %c0_28 = arith.constant 0 : index
        %c0_29 = arith.constant 0 : index
        %43 = vector.load %arg9[%c0_28, %c0_29] : memref<216x1xf32, #tpu.memory_space<vmem>>, vector<216x1xf32>
        tpu.vector_store %arg9[%c0_28, %c0_29], %42 {strides = array<i32>} : memref<216x1xf32, #tpu.memory_space<vmem>>, vector<216x1xf32>,
        %cst_30 = arith.constant 0.000000e+00 : f32
        %44 = vector.broadcast %cst_30 : f32 to vector<216x1xf32>
        %c0_31 = arith.constant 0 : index
        %c0_32 = arith.constant 0 : index
        %45 = vector.load %arg10[%c0_31, %c0_32] : memref<216x1xf32, #tpu.memory_space<vmem>>, vector<216x1xf32>
        tpu.vector_store %arg10[%c0_31, %c0_32], %44 {strides = array<i32>} : memref<216x1xf32, #tpu.memory_space<vmem>>, vector<216x1xf32>,
        %cst_33 = arith.constant 0.000000e+00 : f32
        %46 = vector.broadcast %cst_33 : f32 to vector<216x1xf32>
        %c0_34 = arith.constant 0 : index
        %c0_35 = arith.constant 0 : index
        %47 = vector.load %arg11[%c0_34, %c0_35] : memref<216x1xf32, #tpu.memory_space<vmem>>, vector<216x1xf32>
        tpu.vector_store %arg11[%c0_34, %c0_35], %46 {strides = array<i32>} : memref<216x1xf32, #tpu.memory_space<vmem>>, vector<216x1xf32>,
        %cst_36 = arith.constant 0.000000e+00 : f32
        %48 = vector.broadcast %cst_36 : f32 to vector<216x196xf32>
        %c0_37 = arith.constant 0 : index
        %c0_38 = arith.constant 0 : index
        %c0_39 = arith.constant 0 : index
        %49 = vector.load %arg8[%c0_37, %c0_38, %c0_39] : memref<1x216x196xf32, #tpu.memory_space<vmem>>, vector<1x216x196xf32>
        %50 = vector.shape_cast %49 : vector<1x216x196xf32> to vector<216x196xf32>
        %51 = vector.shape_cast %48 : vector<216x196xf32> to vector<1x216x196xf32>
        tpu.vector_store %arg8[%c0_37, %c0_38, %c0_39], %51 {strides = array<i32>} : memref<1x216x196xf32, #tpu.memory_space<vmem>>, vector<1x216x196xf32>,
      } else {
      }
      %c0_12 = arith.constant 0 : index
      %c0_13 = arith.constant 0 : index
      %22 = vector.load %arg9[%c0_12, %c0_13] : memref<216x1xf32, #tpu.memory_space<vmem>>, vector<216x1xf32>
      %23 = vector.broadcast %22 : vector<216x1xf32> to vector<216x196xf32>
      %24 = arith.subf %18, %23 : vector<216x196xf32>
      %c0_14 = arith.constant 0 : index
      %c0_15 = arith.constant 0 : index
      %25 = vector.load %arg10[%c0_14, %c0_15] : memref<216x1xf32, #tpu.memory_space<vmem>>, vector<216x1xf32>
      %cst_16 = arith.constant dense<0.000000e+00> : vector<216xf32>
      %26 = vector.multi_reduction <add>, %24, %cst_16 [1] : vector<216x196xf32> to vector<216xf32>
      %27 = vector.shape_cast %26 : vector<216xf32> to vector<216x1xf32>
      %28 = arith.addf %25, %27 : vector<216x1xf32>
      %c0_17 = arith.constant 0 : index
      %c0_18 = arith.constant 0 : index
      %29 = vector.load %arg10[%c0_17, %c0_18] : memref<216x1xf32, #tpu.memory_space<vmem>>, vector<216x1xf32>
      tpu.vector_store %arg10[%c0_17, %c0_18], %28 {strides = array<i32>} : memref<216x1xf32, #tpu.memory_space<vmem>>, vector<216x1xf32>,
      %c0_19 = arith.constant 0 : index
      %c0_20 = arith.constant 0 : index
      %30 = vector.load %arg11[%c0_19, %c0_20] : memref<216x1xf32, #tpu.memory_space<vmem>>, vector<216x1xf32>
      %31 = arith.mulf %24, %24 : vector<216x196xf32>
      %cst_21 = arith.constant dense<0.000000e+00> : vector<216xf32>
      %32 = vector.multi_reduction <add>, %31, %cst_21 [1] : vector<216x196xf32> to vector<216xf32>
      %33 = vector.shape_cast %32 : vector<216xf32> to vector<216x1xf32>
      %34 = arith.addf %30, %33 : vector<216x1xf32>
      %c0_22 = arith.constant 0 : index
      %c0_23 = arith.constant 0 : index
      %35 = vector.load %arg11[%c0_22, %c0_23] : memref<216x1xf32, #tpu.memory_space<vmem>>, vector<216x1xf32>
      tpu.vector_store %arg11[%c0_22, %c0_23], %34 {strides = array<i32>} : memref<216x1xf32, #tpu.memory_space<vmem>>, vector<216x1xf32>,
      %c1_i32_24 = arith.constant 1 : i32
      %36 = arith.cmpi eq, %arg1, %c1_i32_24 : i32
      %37 = arith.extui %36 : i1 to i32
      %c0_i32_25 = arith.constant 0 : i32
      %38 = arith.cmpi ne, %37, %c0_i32_25 : i32
      scf.if %38 {
        %c0_26 = arith.constant 0 : index
        %c0_27 = arith.constant 0 : index
        %39 = vector.load %arg10[%c0_26, %c0_27] : memref<216x1xf32, #tpu.memory_space<vmem>>, vector<216x1xf32>
        %cst_28 = arith.constant 0.00255102036 : f32
        %40 = vector.broadcast %cst_28 : f32 to vector<216x1xf32>
        %41 = arith.mulf %39, %40 : vector<216x1xf32>
        %c0_29 = arith.constant 0 : index
        %c0_30 = arith.constant 0 : index
        %42 = vector.load %arg11[%c0_29, %c0_30] : memref<216x1xf32, #tpu.memory_space<vmem>>, vector<216x1xf32>
        %cst_31 = arith.constant 0.00255102036 : f32
        %43 = vector.broadcast %cst_31 : f32 to vector<216x1xf32>
        %44 = arith.mulf %42, %43 : vector<216x1xf32>
        %45 = arith.mulf %41, %41 : vector<216x1xf32>
        %46 = arith.subf %44, %45 : vector<216x1xf32>
        %cst_32 = arith.constant 0.000000e+00 : f32
        %47 = vector.broadcast %cst_32 : f32 to vector<216x1xf32>
        %48 = arith.maximumf %46, %47 : vector<216x1xf32>
        %c0_33 = arith.constant 0 : index
        %c0_34 = arith.constant 0 : index
        %49 = vector.load %arg9[%c0_33, %c0_34] : memref<216x1xf32, #tpu.memory_space<vmem>>, vector<216x1xf32>
        %50 = arith.addf %49, %41 : vector<216x1xf32>
        %c0_35 = arith.constant 0 : index
        %c0_36 = arith.constant 0 : index
        %51 = vector.load %arg6[%c0_35, %c0_36] : memref<216x1xf32, #tpu.memory_space<vmem>>, vector<216x1xf32>
        %cst_37 = arith.constant 9.99999974E-6 : f32
        %52 = vector.broadcast %cst_37 : f32 to vector<216x1xf32>
        %53 = arith.addf %48, %52 : vector<216x1xf32>
        %54 = math.rsqrt %53 : vector<216x1xf32>
        %55 = arith.mulf %51, %54 : vector<216x1xf32>
        %c0_38 = arith.constant 0 : index
        %c0_39 = arith.constant 0 : index
        %56 = vector.load %arg7[%c0_38, %c0_39] : memref<216x1xf32, #tpu.memory_space<vmem>>, vector<216x1xf32>
        %57 = arith.mulf %50, %55 : vector<216x1xf32>
        %58 = arith.subf %56, %57 : vector<216x1xf32>
        %c0_40 = arith.constant 0 : index
        %c0_41 = arith.constant 0 : index
        %59 = vector.load %arg12[%c0_40, %c0_41] : memref<216x1xf32, #tpu.memory_space<vmem>>, vector<216x1xf32>
        tpu.vector_store %arg12[%c0_40, %c0_41], %58 {strides = array<i32>} : memref<216x1xf32, #tpu.memory_space<vmem>>, vector<216x1xf32>,
        %c0_42 = arith.constant 0 : index
        %c0_43 = arith.constant 0 : index
        %60 = vector.load %arg5[%c0_42, %c0_43] : memref<216x216xf32, #tpu.memory_space<vmem>>, vector<216x216xf32>
        %61 = vector.broadcast %55 : vector<216x1xf32> to vector<216x216xf32>
        %62 = arith.mulf %60, %61 : vector<216x216xf32>
        %c0_44 = arith.constant 0 : index
        %c0_45 = arith.constant 0 : index
        %63 = vector.load %arg13[%c0_44, %c0_45] : memref<216x216xf32, #tpu.memory_space<vmem>>, vector<216x216xf32>
        tpu.vector_store %arg13[%c0_44, %c0_45], %62 {strides = array<i32>} : memref<216x216xf32, #tpu.memory_space<vmem>>, vector<216x216xf32>,
      } else {
      }
    } else {
    }
    %c1_i32 = arith.constant 1 : i32
    %14 = arith.cmpi eq, %arg0, %c1_i32 : i32
    %15 = arith.extui %14 : i1 to i32
    %c0_i32_6 = arith.constant 0 : i32
    %16 = arith.cmpi ne, %15, %c0_i32_6 : i32
    scf.if %16 {
      %c0_7 = arith.constant 0 : index
      %c0_8 = arith.constant 0 : index
      %17 = vector.load %arg13[%c0_7, %c0_8] : memref<216x216xf32, #tpu.memory_space<vmem>>, vector<216x216xf32>
      %cst_9 = arith.constant dense<0.000000e+00> : vector<216x196xf32>
      %18 = tpu.matmul %17, %10, %cst_9 {dimension_numbers = #tpu.dot_dimension_numbers<[1], [0], [0], [1], [0, 0, 1, 1], [], []>} : vector<216x216xf32>, vector<216x196xf32>, vector<216x196xf32> -> vector<216x196xf32>
      %c0_10 = arith.constant 0 : index
      %c0_11 = arith.constant 0 : index
      %c0_12 = arith.constant 0 : index
      %19 = vector.load %arg4[%c0_10, %c0_11, %c0_12] : memref<1x216x196xf32, #tpu.memory_space<vmem>>, vector<1x216x196xf32>
      %20 = vector.shape_cast %19 : vector<1x216x196xf32> to vector<216x196xf32>
      %21 = arith.addf %20, %18 : vector<216x196xf32>
      %c0_13 = arith.constant 0 : index
      %c0_14 = arith.constant 0 : index
      %22 = vector.load %arg12[%c0_13, %c0_14] : memref<216x1xf32, #tpu.memory_space<vmem>>, vector<216x1xf32>
      %23 = vector.broadcast %22 : vector<216x1xf32> to vector<216x196xf32>
      %24 = arith.addf %21, %23 : vector<216x196xf32>
      %cst_15 = arith.constant 0.000000e+00 : f32
      %25 = vector.broadcast %cst_15 : f32 to vector<216x196xf32>
      %26 = arith.maximumf %24, %25 : vector<216x196xf32>
      %c0_16 = arith.constant 0 : index
      %c0_17 = arith.constant 0 : index
      %c0_18 = arith.constant 0 : index
      %27 = vector.load %arg8[%c0_16, %c0_17, %c0_18] : memref<1x216x196xf32, #tpu.memory_space<vmem>>, vector<1x216x196xf32>
      %28 = vector.shape_cast %27 : vector<1x216x196xf32> to vector<216x196xf32>
      %29 = vector.shape_cast %26 : vector<216x196xf32> to vector<1x216x196xf32>
      tpu.vector_store %arg8[%c0_16, %c0_17, %c0_18], %29 {strides = array<i32>} : memref<1x216x196xf32, #tpu.memory_space<vmem>>, vector<1x216x196xf32>,
    } else {
    }
    return
  }
  func.func @transform_0(%arg0: i32, %arg1: i32) -> (i32, i32, i32) {
    %c0_i32 = arith.constant 0 : i32
    %c0_i32_0 = arith.constant 0 : i32
    %c0_i32_1 = arith.constant 0 : i32
    return %arg1, %c0_i32, %c0_i32_0 : i32, i32, i32
  }
  func.func @transform_1(%arg0: i32, %arg1: i32) -> (i32, i32, i32) {
    %c0_i32 = arith.constant 0 : i32
    %c0_i32_0 = arith.constant 0 : i32
    %c0_i32_1 = arith.constant 0 : i32
    return %arg1, %c0_i32, %c0_i32_0 : i32, i32, i32
  }
  func.func @transform_2(%arg0: i32, %arg1: i32) -> (i32, i32, i32) {
    %0 = arith.muli %arg1, %arg0 : i32
    %c0_i32 = arith.constant 0 : i32
    %c0_i32_0 = arith.constant 0 : i32
    %c0_i32_1 = arith.constant 0 : i32
    return %0, %c0_i32, %c0_i32_0 : i32, i32, i32
  }
  func.func @transform_3(%arg0: i32, %arg1: i32) -> (i32, i32) {
    %c0_i32 = arith.constant 0 : i32
    %c0_i32_0 = arith.constant 0 : i32
    %c0_i32_1 = arith.constant 0 : i32
    return %c0_i32, %c0_i32_0 : i32, i32
  }
  func.func @transform_4(%arg0: i32, %arg1: i32) -> (i32, i32) {
    %c0_i32 = arith.constant 0 : i32
    %c0_i32_0 = arith.constant 0 : i32
    %c0_i32_1 = arith.constant 0 : i32
    return %c0_i32, %c0_i32_0 : i32, i32
  }
  func.func @transform_5(%arg0: i32, %arg1: i32) -> (i32, i32) {
    %c0_i32 = arith.constant 0 : i32
    %c0_i32_0 = arith.constant 0 : i32
    %c0_i32_1 = arith.constant 0 : i32
    return %c0_i32, %c0_i32_0 : i32, i32
  }
  func.func @transform_6(%arg0: i32, %arg1: i32) -> (i32, i32, i32) {
    %0 = arith.muli %arg1, %arg0 : i32
    %c0_i32 = arith.constant 0 : i32
    %c0_i32_0 = arith.constant 0 : i32
    %c0_i32_1 = arith.constant 0 : i32
    return %0, %c0_i32, %c0_i32_0 : i32, i32, i32
  }
}

</mosaic_0001>

<llo_original>
// kernel: tpu_custom_call.1
$region0: #{tpu_custom_call.1}
  #allocation0 [shape = 'u32[]', space=smem, size = 0x4, offset = 0x4, fixed_abs, tag = 'smem constant byte address 0x4 - core index']
  #allocation1 [shape = 'u32[72,128]{1,0:T(1,128)}', space=vmem, size = 0x9000, scoped, tag = 'internal scratch']
  #allocation2 [shape = 'f32[216,1]{1,0:T(8,128)}', space=vmem, size = 0x1b000, scoped, tag = 'scratch operand']
  #allocation3 [shape = 'f32[216,1]{1,0:T(8,128)}', space=vmem, size = 0x1b000, scoped, tag = 'scratch operand']
  #allocation4 [shape = 'f32[216,1]{1,0:T(8,128)}', space=vmem, size = 0x1b000, scoped, tag = 'scratch operand']
  #allocation5 [shape = 'f32[216,1]{1,0:T(8,128)}', space=vmem, size = 0x1b000, scoped, tag = 'scratch operand']
  #allocation6 [shape = 'f32[216,216]{1,0:T(8,128)}', space=vmem, size = 0x36000, scoped, tag = 'scratch operand']
  %s0 = inlined_call_operand.vmem [shape: f32[2,216,1], index: 0, kind: input, shape index: {}]
  %s1 = inlined_call_operand.vmem [shape: f32[2,216,196], index: 1, kind: input, shape index: {}]
  %s2 = inlined_call_operand.vmem [shape: f32[2,216,196], index: 2, kind: input, shape index: {}]
  %s3 = inlined_call_operand.vmem [shape: f32[216,216], index: 3, kind: input, shape index: {}]
  %s4 = inlined_call_operand.vmem [shape: f32[216,1], index: 4, kind: input, shape index: {}]
  %s5 = inlined_call_operand.vmem [shape: f32[216,1], index: 5, kind: input, shape index: {}]
  %s6 = inlined_call_operand.vmem [shape: f32[2,216,196], index: 6, kind: output, shape index: {}]
  %s7 = sld [smem:[#allocation0]]
  $region73: #{tpu_custom_call.1} parent=0
    _
  %s9 = ssub.s32 1, %s7
  %s10 = scalar_select 0, %s9, %s7
  loop: start=0, step=1, limit=6
  $region2: #{tpu_custom_call.1} parent=0 // loop_pre_header
    _
  $region3: #{tpu_custom_call.1} parent=0 // loop_header
    %s12 = sphi 0, %s16
    %p13 = scmp.ge.s32.totalorder %s12, 6
    %s19 = sphi 0, %s31
    %s20 = sphi 0, %s27
    %s21 = sphi 0, %s19
    %s22 = sphi 0, %s20
    %s23 = sphi 0, %s21
    %s24 = sphi 0, %s22
    %s34 = sphi 0, %s36
    %s37 = sphi 0, %s34
    %s38 = sphi 0, %s37
    %s54 = sphi 0, %s38
    %s60 = sphi 0, %s62
    %s63 = sphi 0, %s60
    %s64 = sphi 0, %s63
    %s80 = sphi 0, %s64
    %s88 = sphi 0, %s90
    %s91 = sphi 0, %s88
    %s92 = sphi 0, %s91
    %s108 = sphi 0, %s92
    %s112 = sphi 0, %s112
    %s114 = sphi 0, %s112
    %s115 = sphi 0, %s114
    %s129 = sphi 0, %s115
    %s133 = sphi 0, %s133
    %s135 = sphi 0, %s133
    %s136 = sphi 0, %s135
    %s150 = sphi 0, %s136
    %s154 = sphi 0, %s154
    %s156 = sphi 0, %s154
    %s157 = sphi 0, %s156
    %s171 = sphi 0, %s157
    %s179 = sphi 0, %s181
    %s182 = sphi 0, %s179
    %s183 = sphi 0, %s182
    %s199 = sphi 0, %s183
  $region4: #{tpu_custom_call.1} parent=0 // loop_header_branch
    %15 = sbr.rel (%p13) target = $region8
  $region5: #{tpu_custom_call.1} parent=0 // loop_body
    %s17 = ssub.s32 %s12, 1
    %s18 = ssub.s32 %s12, 2
    %s25 = sadd.s32 1, %s20
    %p26 = scmp.ge.s32.totalorder %s25, 2
    %s27 = scalar_select %p26, 0, %s25
    %s28 = sadd.s32 1, %s19
    %s29 = scalar_select %p26, %s28, %s19
    %p30 = scmp.ge.s32.totalorder %s29, 2
    %s31 = scalar_select %p30, 0, %s29
    %s32 = ssub.s32 %s20, %s27
    %p33 = scmp.eq.s32.totalorder %s32, 0
    %s35 = sadd.s32 %s34, 1
    %s36 = scalar_select %p33, %s34, %s35
    %p39 = pneg %p33
    %p40 = scmp.eq.s32.totalorder %s12, 3
    %p41 = por %p39, %p40
    %p42 = scmp.ne.s32.totalorder %s34, %s37
    %p43 = scmp.eq.s32.totalorder %s12, 0
    %p44 = por %p42, %p43
    %p45 = scmp.ne.s32.totalorder %s34, %s37
    %p46 = scmp.eq.s32.totalorder %s17, 3
    %p47 = por %p45, %p46
    %p48 = scmp.ne.s32.totalorder %s37, %s38
    %p49 = scmp.eq.s32.totalorder %s17, 0
    %p50 = por %p48, %p49
    %p51 = scmp.ne.s32.totalorder %s37, %s38
    %p52 = scmp.eq.s32.totalorder %s18, 3
    %p53 = por %p51, %p52
    %p55 = scmp.ne.s32.totalorder %s38, %s54
    %p56 = scmp.eq.s32.totalorder %s18, 0
    %p57 = por %p55, %p56
    %s58 = ssub.s32 %s20, %s27
    %p59 = scmp.eq.s32.totalorder %s58, 0
    %s61 = sadd.s32 %s60, 1
    %s62 = scalar_select %p59, %s60, %s61
    %p65 = pneg %p59
    %p66 = scmp.eq.s32.totalorder %s12, 3
    %p67 = por %p65, %p66
    %p68 = scmp.ne.s32.totalorder %s60, %s63
    %p69 = scmp.eq.s32.totalorder %s12, 0
    %p70 = por %p68, %p69
    %p71 = scmp.ne.s32.totalorder %s60, %s63
    %p72 = scmp.eq.s32.totalorder %s17, 3
    %p73 = por %p71, %p72
    %p74 = scmp.ne.s32.totalorder %s63, %s64
    %p75 = scmp.eq.s32.totalorder %s17, 0
    %p76 = por %p74, %p75
    %p77 = scmp.ne.s32.totalorder %s63, %s64
    %p78 = scmp.eq.s32.totalorder %s18, 3
    %p79 = por %p77, %p78
    %p81 = scmp.ne.s32.totalorder %s64, %s80
    %p82 = scmp.eq.s32.totalorder %s18, 0
    %p83 = por %p81, %p82
    %s84 = smul.u32 %s20, %s19
    %s85 = smul.u32 %s27, %s31
    %s86 = ssub.s32 %s84, %s85
    %p87 = scmp.eq.s32.totalorder %s86, 0
    %s89 = sadd.s32 %s88, 1
    %s90 = scalar_select %p87, %s88, %s89
    %p93 = pneg %p87
    %p94 = scmp.eq.s32.totalorder %s12, 3
    %p95 = por %p93, %p94
    %p96 = scmp.ne.s32.totalorder %s88, %s91
    %p97 = scmp.eq.s32.totalorder %s12, 0
    %p98 = por %p96, %p97
    %p99 = scmp.ne.s32.totalorder %s88, %s91
    %p100 = scmp.eq.s32.totalorder %s17, 3
    %p101 = por %p99, %p100
    %p102 = scmp.ne.s32.totalorder %s91, %s92
    %p103 = scmp.eq.s32.totalorder %s17, 0
    %p104 = por %p102, %p103
    %p105 = scmp.ne.s32.totalorder %s91, %s92
    %p106 = scmp.eq.s32.totalorder %s18, 3
    %p107 = por %p105, %p106
    %p109 = scmp.ne.s32.totalorder %s92, %s108
    %p110 = scmp.eq.s32.totalorder %s18, 0
    %p111 = por %p109, %p110
    %s113 = sadd.s32 %s112, 1
    %p116 = scmp.eq.s32.totalorder %s12, 3
    %p117 = scmp.ne.s32.totalorder %s112, %s114
    %p118 = scmp.eq.s32.totalorder %s12, 0
    %p119 = por %p117, %p118
    %p120 = scmp.ne.s32.totalorder %s112, %s114
    %p121 = scmp.eq.s32.totalorder %s17, 3
    %p122 = por %p120, %p121
    %p123 = scmp.ne.s32.totalorder %s114, %s115
    %p124 = scmp.eq.s32.totalorder %s17, 0
    %p125 = por %p123, %p124
    %p126 = scmp.ne.s32.totalorder %s114, %s115
    %p127 = scmp.eq.s32.totalorder %s18, 3
    %p128 = por %p126, %p127
    %p130 = scmp.ne.s32.totalorder %s115, %s129
    %p131 = scmp.eq.s32.totalorder %s18, 0
    %p132 = por %p130, %p131
    %s134 = sadd.s32 %s133, 1
    %p137 = scmp.eq.s32.totalorder %s12, 3
    %p138 = scmp.ne.s32.totalorder %s133, %s135
    %p139 = scmp.eq.s32.totalorder %s12, 0
    %p140 = por %p138, %p139
    %p141 = scmp.ne.s32.totalorder %s133, %s135
    %p142 = scmp.eq.s32.totalorder %s17, 3
    %p143 = por %p141, %p142
    %p144 = scmp.ne.s32.totalorder %s135, %s136
    %p145 = scmp.eq.s32.totalorder %s17, 0
    %p146 = por %p144, %p145
    %p147 = scmp.ne.s32.totalorder %s135, %s136
    %p148 = scmp.eq.s32.totalorder %s18, 3
    %p149 = por %p147, %p148
    %p151 = scmp.ne.s32.totalorder %s136, %s150
    %p152 = scmp.eq.s32.totalorder %s18, 0
    %p153 = por %p151, %p152
    %s155 = sadd.s32 %s154, 1
    %p158 = scmp.eq.s32.totalorder %s12, 3
    %p159 = scmp.ne.s32.totalorder %s154, %s156
    %p160 = scmp.eq.s32.totalorder %s12, 0
    %p161 = por %p159, %p160
    %p162 = scmp.ne.s32.totalorder %s154, %s156
    %p163 = scmp.eq.s32.totalorder %s17, 3
    %p164 = por %p162, %p163
    %p165 = scmp.ne.s32.totalorder %s156, %s157
    %p166 = scmp.eq.s32.totalorder %s17, 0
    %p167 = por %p165, %p166
    %p168 = scmp.ne.s32.totalorder %s156, %s157
    %p169 = scmp.eq.s32.totalorder %s18, 3
    %p170 = por %p168, %p169
    %p172 = scmp.ne.s32.totalorder %s157, %s171
    %p173 = scmp.eq.s32.totalorder %s18, 0
    %p174 = por %p172, %p173
    %s175 = smul.u32 %s20, %s19
    %s176 = smul.u32 %s27, %s31
    %s177 = ssub.s32 %s175, %s176
    %p178 = scmp.eq.s32.totalorder %s177, 0
    %s180 = sadd.s32 %s179, 1
    %s181 = scalar_select %p178, %s179, %s180
    %p184 = pneg %p178
    %p185 = scmp.eq.s32.totalorder %s12, 3
    %p186 = por %p184, %p185
    %p187 = scmp.ne.s32.totalorder %s179, %s182
    %p188 = scmp.eq.s32.totalorder %s12, 0
    %p189 = por %p187, %p188
    %p190 = scmp.ne.s32.totalorder %s179, %s182
    %p191 = scmp.eq.s32.totalorder %s17, 3
    %p192 = por %p190, %p191
    %p193 = scmp.ne.s32.totalorder %s182, %s183
    %p194 = scmp.eq.s32.totalorder %s17, 0
    %p195 = por %p193, %p194
    %p196 = scmp.ne.s32.totalorder %s182, %s183
    %p197 = scmp.eq.s32.totalorder %s18, 3
    %p198 = por %p196, %p197
    %p200 = scmp.ne.s32.totalorder %s183, %s199
    %p201 = scmp.eq.s32.totalorder %s18, 0
    %p202 = por %p200, %p201
    %p203 = scmp.le.s32.totalorder 1, %s12
    %p204 = scmp.lt.s32.totalorder %s12, 5
    %p205 = pnand %p203, %p204
    %p206 = pneg %p205
    // Predicated region
    $region9: #{tpu_custom_call.1} parent=5 // pred_check
      _
    $region10: #{tpu_custom_call.1} parent=5 // pred_check_branch
      %208 = sbr.rel (%p205) target = $region12
    $region11: #{tpu_custom_call.1} parent=5 // pred_region
      %s209 = ssub.s32 %s12, 1
      // Predicated region
      $region13: #{tpu_custom_call.1} parent=11 // pred_check
        %p210 = pneg %p125
      $region14: #{tpu_custom_call.1} parent=11 // pred_check_branch
        %212 = sbr.rel (%p210) target = $region16
      $region15: #{tpu_custom_call.1} parent=11 // pred_region
        _
      $region16: #{tpu_custom_call.1} parent=11 // pred_fallthru
        _
      // Predicated region
      $region17: #{tpu_custom_call.1} parent=11 // pred_check
        %p213 = pneg %p146
      $region18: #{tpu_custom_call.1} parent=11 // pred_check_branch
        %215 = sbr.rel (%p213) target = $region20
      $region19: #{tpu_custom_call.1} parent=11 // pred_region
        _
      $region20: #{tpu_custom_call.1} parent=11 // pred_fallthru
        _
      // Predicated region
      $region21: #{tpu_custom_call.1} parent=11 // pred_check
        %p216 = pneg %p167
      $region22: #{tpu_custom_call.1} parent=11 // pred_check_branch
        %218 = sbr.rel (%p216) target = $region24
      $region23: #{tpu_custom_call.1} parent=11 // pred_region
        _
      $region24: #{tpu_custom_call.1} parent=11 // pred_fallthru
        _
    $region12: #{tpu_custom_call.1} parent=5 // pred_fallthru
      _
    %p219 = scmp.lt.s32.totalorder %s12, 4
    // Predicated region
    $region25: #{tpu_custom_call.1} parent=5 // pred_check
      %p220 = pneg %p219
    $region26: #{tpu_custom_call.1} parent=5 // pred_check_branch
      %222 = sbr.rel (%p220) target = $region28
    $region27: #{tpu_custom_call.1} parent=5 // pred_region
      // Predicated region
      $region29: #{tpu_custom_call.1} parent=27 // pred_check
        %p223 = pneg %p44
      $region30: #{tpu_custom_call.1} parent=27 // pred_check_branch
        %225 = sbr.rel (%p223) target = $region32
      $region31: #{tpu_custom_call.1} parent=27 // pred_region
        %p226 = scmp.lt.s32.totalorder %s20, 1
        %s227 = scalar_select %p226, %s20, 1
        %s228 = smul.addr %s227, 27
        %s229 = smul.addr %s228, 8
        %s230 = scalar_lea.vmem %s0, %s229
      $region32: #{tpu_custom_call.1} parent=27 // pred_fallthru
        _
      // Predicated region
      $region33: #{tpu_custom_call.1} parent=27 // pred_check
        %p231 = pneg %p70
      $region34: #{tpu_custom_call.1} parent=27 // pred_check_branch
        %233 = sbr.rel (%p231) target = $region36
      $region35: #{tpu_custom_call.1} parent=27 // pred_region
        %p234 = scmp.lt.s32.totalorder %s20, 1
        %s235 = scalar_select %p234, %s20, 1
        %s236 = smul.addr %s235, 54
        %s237 = smul.addr %s236, 8
        %s238 = scalar_lea.vmem %s1, %s237
      $region36: #{tpu_custom_call.1} parent=27 // pred_fallthru
        _
      // Predicated region
      $region37: #{tpu_custom_call.1} parent=27 // pred_check
        %p239 = pneg %p98
      $region38: #{tpu_custom_call.1} parent=27 // pred_check_branch
        %241 = sbr.rel (%p239) target = $region40
      $region39: #{tpu_custom_call.1} parent=27 // pred_region
        %s242 = smul.u32 %s20, %s19
        %p243 = scmp.lt.s32.totalorder %s242, 1
        %s244 = scalar_select %p243, %s242, 1
        %s245 = smul.addr %s244, 54
        %s246 = smul.addr %s245, 8
        %s247 = scalar_lea.vmem %s2, %s246
        %s248 = smul.u32 %s20, %s19
      $region40: #{tpu_custom_call.1} parent=27 // pred_fallthru
        _
    $region28: #{tpu_custom_call.1} parent=5 // pred_fallthru
      _
    %p249 = scmp.le.s32.totalorder 1, %s12
    %p250 = scmp.lt.s32.totalorder %s12, 5
    %p251 = pnand %p249, %p250
    %p252 = pneg %p251
    // Predicated region
    $region41: #{tpu_custom_call.1} parent=5 // pred_check
      _
    $region42: #{tpu_custom_call.1} parent=5 // pred_check_branch
      %254 = sbr.rel (%p251) target = $region44
    $region43: #{tpu_custom_call.1} parent=5 // pred_region
      %s255 = ssub.s32 %s12, 1
      %p256 = scmp.lt.s32.totalorder %s22, 1
      %s257 = scalar_select %p256, %s22, 1
      %s258 = smul.addr %s257, 27
      %s259 = smul.addr %s258, 8
      %s260 = scalar_lea.vmem %s0, %s259
      %p261 = pneg %p50
      %p262 = pneg %p47
      %p263 = scmp.lt.s32.totalorder %s22, 1
      %s264 = scalar_select %p263, %s22, 1
      %s265 = smul.addr %s264, 54
      %s266 = smul.addr %s265, 8
      %s267 = scalar_lea.vmem %s1, %s266
      %p268 = pneg %p76
      %p269 = pneg %p73
      %s270 = smul.u32 %s22, %s21
      %p271 = scmp.lt.s32.totalorder %s270, 1
      %s272 = scalar_select %p271, %s270, 1
      %s273 = smul.addr %s272, 54
      %s274 = smul.addr %s273, 8
      %s275 = scalar_lea.vmem %s2, %s274
      %p276 = pneg %p104
      %p277 = pneg %p101
      %p278 = pneg %p125
      %p279 = pneg %p122
      %p280 = pneg %p146
      %p281 = pneg %p143
      %p282 = pneg %p167
      %p283 = pneg %p164
      %p284 = pneg %p195
      %p285 = pneg %p192
      %s286 = smul.u32 %s22, %s21
      %p287 = scmp.lt.s32.totalorder %s286, 1
      %s288 = scalar_select %p287, %s286, 1
      %s289 = smul.addr %s288, 54
      %s290 = smul.addr %s289, 8
      %s291 = scalar_lea.vmem %s6, %s290
      %p292 = scmp.lt.s32.totalorder %s22, 1
      %s293 = scalar_select %p292, %s22, 1
      %s294 = smul.addr %s293, 27
      %s295 = smul.addr %s294, 8
      %s296 = scalar_lea.vmem %s0, %s295
      %p297 = scmp.lt.s32.totalorder %s22, 1
      %s298 = scalar_select %p297, %s22, 1
      %s299 = smul.addr %s298, 54
      %s300 = smul.addr %s299, 8
      %s301 = scalar_lea.vmem %s1, %s300
      %s302 = smul.u32 %s22, %s21
      %p303 = scmp.lt.s32.totalorder %s302, 1
      %s304 = scalar_select %p303, %s302, 1
      %s305 = smul.addr %s304, 54
      %s306 = smul.addr %s305, 8
      %s307 = scalar_lea.vmem %s2, %s306
      %s308 = smul.u32 %s22, %s21
      %s309 = smul.u32 %s22, %s21
      %p310 = scmp.lt.s32.totalorder %s309, 1
      %s311 = scalar_select %p310, %s309, 1
      %s312 = smul.addr %s311, 54
      %s313 = smul.addr %s312, 8
      %s314 = scalar_lea.vmem %s6, %s313
      %s315 = smul.u32 %s22, %s21
      %v316 = vld [vmem:[%s296] sm:$0xff]
      %v317 = vld [vmem:[%s296 + $0x8] sm:$0xff]
      %v318 = vld [vmem:[%s296 + $0x10] sm:$0xff]
      %v319 = vld [vmem:[%s296 + $0x18] sm:$0xff]
      %v320 = vld [vmem:[%s296 + $0x20] sm:$0xff]
      %v321 = vld [vmem:[%s296 + $0x28] sm:$0xff]
      %v322 = vld [vmem:[%s296 + $0x30] sm:$0xff]
      %v323 = vld [vmem:[%s296 + $0x38] sm:$0xff]
      %v324 = vld [vmem:[%s296 + $0x40] sm:$0xff]
      %v325 = vld [vmem:[%s296 + $0x48] sm:$0xff]
      %v326 = vld [vmem:[%s296 + $0x50] sm:$0xff]
      %v327 = vld [vmem:[%s296 + $0x58] sm:$0xff]
      %v328 = vld [vmem:[%s296 + $0x60] sm:$0xff]
      %v329 = vld [vmem:[%s296 + $0x68] sm:$0xff]
      %v330 = vld [vmem:[%s296 + $0x70] sm:$0xff]
      %v331 = vld [vmem:[%s296 + $0x78] sm:$0xff]
      %v332 = vld [vmem:[%s296 + $0x80] sm:$0xff]
      %v333 = vld [vmem:[%s296 + $0x88] sm:$0xff]
      %v334 = vld [vmem:[%s296 + $0x90] sm:$0xff]
      %v335 = vld [vmem:[%s296 + $0x98] sm:$0xff]
      %v336 = vld [vmem:[%s296 + $0xa0] sm:$0xff]
      %v337 = vld [vmem:[%s296 + $0xa8] sm:$0xff]
      %v338 = vld [vmem:[%s296 + $0xb0] sm:$0xff]
      %v339 = vld [vmem:[%s296 + $0xb8] sm:$0xff]
      %v340 = vld [vmem:[%s296 + $0xc0] sm:$0xff]
      %v341 = vld [vmem:[%s296 + $0xc8] sm:$0xff]
      %v342 = vld [vmem:[%s296 + $0xd0] sm:$0xff]
      %v343 = vxor.u32 %v316, 2147483648
      %v344 = vxor.u32 %v317, 2147483648
      %v345 = vxor.u32 %v318, 2147483648
      %v346 = vxor.u32 %v319, 2147483648
      %v347 = vxor.u32 %v320, 2147483648
      %v348 = vxor.u32 %v321, 2147483648
      %v349 = vxor.u32 %v322, 2147483648
      %v350 = vxor.u32 %v323, 2147483648
      %v351 = vxor.u32 %v324, 2147483648
      %v352 = vxor.u32 %v325, 2147483648
      %v353 = vxor.u32 %v326, 2147483648
      %v354 = vxor.u32 %v327, 2147483648
      %v355 = vxor.u32 %v328, 2147483648
      %v356 = vxor.u32 %v329, 2147483648
      %v357 = vxor.u32 %v330, 2147483648
      %v358 = vxor.u32 %v331, 2147483648
      %v359 = vxor.u32 %v332, 2147483648
      %v360 = vxor.u32 %v333, 2147483648
      %v361 = vxor.u32 %v334, 2147483648
      %v362 = vxor.u32 %v335, 2147483648
      %v363 = vxor.u32 %v336, 2147483648
      %v364 = vxor.u32 %v337, 2147483648
      %v365 = vxor.u32 %v338, 2147483648
      %v366 = vxor.u32 %v339, 2147483648
      %v367 = vxor.u32 %v340, 2147483648
      %v368 = vxor.u32 %v341, 2147483648
      %v369 = vxor.u32 %v342, 2147483648
      %v370 = vmul.f32 %v343, 1.442695
      %v371 = vpow.pop %v370
      %v372 = vmul.f32 %v344, 1.442695
      %v373 = vpow.pop %v372
      %v374 = vmul.f32 %v345, 1.442695
      %v375 = vpow.pop %v374
      %v376 = vmul.f32 %v346, 1.442695
      %v377 = vpow.pop %v376
      %v378 = vmul.f32 %v347, 1.442695
      %v379 = vpow.pop %v378
      %v380 = vmul.f32 %v348, 1.442695
      %v381 = vpow.pop %v380
      %v382 = vmul.f32 %v349, 1.442695
      %v383 = vpow.pop %v382
      %v384 = vmul.f32 %v350, 1.442695
      %v385 = vpow.pop %v384
      %v386 = vmul.f32 %v351, 1.442695
      %v387 = vpow.pop %v386
      %v388 = vmul.f32 %v352, 1.442695
      %v389 = vpow.pop %v388
      %v390 = vmul.f32 %v353, 1.442695
      %v391 = vpow.pop %v390
      %v392 = vmul.f32 %v354, 1.442695
      %v393 = vpow.pop %v392
      %v394 = vmul.f32 %v355, 1.442695
      %v395 = vpow.pop %v394
      %v396 = vmul.f32 %v356, 1.442695
      %v397 = vpow.pop %v396
      %v398 = vmul.f32 %v357, 1.442695
      %v399 = vpow.pop %v398
      %v400 = vmul.f32 %v358, 1.442695
      %v401 = vpow.pop %v400
      %v402 = vmul.f32 %v359, 1.442695
      %v403 = vpow.pop %v402
      %v404 = vmul.f32 %v360, 1.442695
      %v405 = vpow.pop %v404
      %v406 = vmul.f32 %v361, 1.442695
      %v407 = vpow.pop %v406
      %v408 = vmul.f32 %v362, 1.442695
      %v409 = vpow.pop %v408
      %v410 = vmul.f32 %v363, 1.442695
      %v411 = vpow.pop %v410
      %v412 = vmul.f32 %v364, 1.442695
      %v413 = vpow.pop %v412
      %v414 = vmul.f32 %v365, 1.442695
      %v415 = vpow.pop %v414
      %v416 = vmul.f32 %v366, 1.442695
      %v417 = vpow.pop %v416
      %v418 = vmul.f32 %v367, 1.442695
      %v419 = vpow.pop %v418
      %v420 = vmul.f32 %v368, 1.442695
      %v421 = vpow.pop %v420
      %v422 = vmul.f32 %v369, 1.442695
      %v423 = vpow.pop %v422
      %v424 = vadd.f32 %v371, 1.0
      %v425 = vadd.f32 %v373, 1.0
      %v426 = vadd.f32 %v375, 1.0
      %v427 = vadd.f32 %v377, 1.0
      %v428 = vadd.f32 %v379, 1.0
      %v429 = vadd.f32 %v381, 1.0
      %v430 = vadd.f32 %v383, 1.0
      %v431 = vadd.f32 %v385, 1.0
      %v432 = vadd.f32 %v387, 1.0
      %v433 = vadd.f32 %v389, 1.0
      %v434 = vadd.f32 %v391, 1.0
      %v435 = vadd.f32 %v393, 1.0
      %v436 = vadd.f32 %v395, 1.0
      %v437 = vadd.f32 %v397, 1.0
      %v438 = vadd.f32 %v399, 1.0
      %v439 = vadd.f32 %v401, 1.0
      %v440 = vadd.f32 %v403, 1.0
      %v441 = vadd.f32 %v405, 1.0
      %v442 = vadd.f32 %v407, 1.0
      %v443 = vadd.f32 %v409, 1.0
      %v444 = vadd.f32 %v411, 1.0
      %v445 = vadd.f32 %v413, 1.0
      %v446 = vadd.f32 %v415, 1.0
      %v447 = vadd.f32 %v417, 1.0
      %v448 = vadd.f32 %v419, 1.0
      %v449 = vadd.f32 %v421, 1.0
      %v450 = vadd.f32 %v423, 1.0
      %v451 = vrcp.pop %v424
      %v452 = vmul.f32 %v424, %v451
      %v453 = vsub.f32 1.0, %v452
      %v454 = vmul.f32 %v451, %v453
      %v455 = vadd.f32 %v451, %v454
      %vm456 = vweird.f32 %v424
      %vm457 = vweird.f32 %v451
      %vm458 = vmor %vm456, %vm457
      %v459 = vsel %vm458, %v451, %v455
      %v460 = vand.u32 2147483647, %v424
      %vm461 = vcmp.eq.f32.partialorder %v460, 8.507059e+37
      %v462 = vand.u32 %v424, 2147483648
      %v463 = vor.u32 1.1754944e-38, %v462
      %v464 = vsel %vm461, %v463, %v459
      %v465 = vmul.f32 1.0, %v464
      %v466 = vrcp.pop %v425
      %v467 = vmul.f32 %v425, %v466
      %v468 = vsub.f32 1.0, %v467
      %v469 = vmul.f32 %v466, %v468
      %v470 = vadd.f32 %v466, %v469
      %vm471 = vweird.f32 %v425
      %vm472 = vweird.f32 %v466
      %vm473 = vmor %vm471, %vm472
      %v474 = vsel %vm473, %v466, %v470
      %v475 = vand.u32 2147483647, %v425
      %vm476 = vcmp.eq.f32.partialorder %v475, 8.507059e+37
      %v477 = vand.u32 %v425, 2147483648
      %v478 = vor.u32 1.1754944e-38, %v477
      %v479 = vsel %vm476, %v478, %v474
      %v480 = vmul.f32 1.0, %v479
      %v481 = vrcp.pop %v426
      %v482 = vmul.f32 %v426, %v481
      %v483 = vsub.f32 1.0, %v482
      %v484 = vmul.f32 %v481, %v483
      %v485 = vadd.f32 %v481, %v484
      %vm486 = vweird.f32 %v426
      %vm487 = vweird.f32 %v481
      %vm488 = vmor %vm486, %vm487
      %v489 = vsel %vm488, %v481, %v485
      %v490 = vand.u32 2147483647, %v426
      %vm491 = vcmp.eq.f32.partialorder %v490, 8.507059e+37
      %v492 = vand.u32 %v426, 2147483648
      %v493 = vor.u32 1.1754944e-38, %v492
      %v494 = vsel %vm491, %v493, %v489
      %v495 = vmul.f32 1.0, %v494
      %v496 = vrcp.pop %v427
      %v497 = vmul.f32 %v427, %v496
      %v498 = vsub.f32 1.0, %v497
      %v499 = vmul.f32 %v496, %v498
      %v500 = vadd.f32 %v496, %v499
      %vm501 = vweird.f32 %v427
      %vm502 = vweird.f32 %v496
      %vm503 = vmor %vm501, %vm502
      %v504 = vsel %vm503, %v496, %v500
      %v505 = vand.u32 2147483647, %v427
      %vm506 = vcmp.eq.f32.partialorder %v505, 8.507059e+37
      %v507 = vand.u32 %v427, 2147483648
      %v508 = vor.u32 1.1754944e-38, %v507
      %v509 = vsel %vm506, %v508, %v504
      %v510 = vmul.f32 1.0, %v509
      %v511 = vrcp.pop %v428
      %v512 = vmul.f32 %v428, %v511
      %v513 = vsub.f32 1.0, %v512
      %v514 = vmul.f32 %v511, %v513
      %v515 = vadd.f32 %v511, %v514
      %vm516 = vweird.f32 %v428
      %vm517 = vweird.f32 %v511
      %vm518 = vmor %vm516, %vm517
      %v519 = vsel %vm518, %v511, %v515
      %v520 = vand.u32 2147483647, %v428
      %vm521 = vcmp.eq.f32.partialorder %v520, 8.507059e+37
      %v522 = vand.u32 %v428, 2147483648
      %v523 = vor.u32 1.1754944e-38, %v522
      %v524 = vsel %vm521, %v523, %v519
      %v525 = vmul.f32 1.0, %v524
      %v526 = vrcp.pop %v429
      %v527 = vmul.f32 %v429, %v526
      %v528 = vsub.f32 1.0, %v527
      %v529 = vmul.f32 %v526, %v528
      %v530 = vadd.f32 %v526, %v529
      %vm531 = vweird.f32 %v429
      %vm532 = vweird.f32 %v526
      %vm533 = vmor %vm531, %vm532
      %v534 = vsel %vm533, %v526, %v530
      %v535 = vand.u32 2147483647, %v429
      %vm536 = vcmp.eq.f32.partialorder %v535, 8.507059e+37
      %v537 = vand.u32 %v429, 2147483648
      %v538 = vor.u32 1.1754944e-38, %v537
      %v539 = vsel %vm536, %v538, %v534
      %v540 = vmul.f32 1.0, %v539
      %v541 = vrcp.pop %v430
      %v542 = vmul.f32 %v430, %v541
      %v543 = vsub.f32 1.0, %v542
      %v544 = vmul.f32 %v541, %v543
      %v545 = vadd.f32 %v541, %v544
      %vm546 = vweird.f32 %v430
      %vm547 = vweird.f32 %v541
      %vm548 = vmor %vm546, %vm547
      %v549 = vsel %vm548, %v541, %v545
      %v550 = vand.u32 2147483647, %v430
      %vm551 = vcmp.eq.f32.partialorder %v550, 8.507059e+37
      %v552 = vand.u32 %v430, 2147483648
      %v553 = vor.u32 1.1754944e-38, %v552
      %v554 = vsel %vm551, %v553, %v549
      %v555 = vmul.f32 1.0, %v554
      %v556 = vrcp.pop %v431
      %v557 = vmul.f32 %v431, %v556
      %v558 = vsub.f32 1.0, %v557
      %v559 = vmul.f32 %v556, %v558
      %v560 = vadd.f32 %v556, %v559
      %vm561 = vweird.f32 %v431
      %vm562 = vweird.f32 %v556
      %vm563 = vmor %vm561, %vm562
      %v564 = vsel %vm563, %v556, %v560
      %v565 = vand.u32 2147483647, %v431
      %vm566 = vcmp.eq.f32.partialorder %v565, 8.507059e+37
      %v567 = vand.u32 %v431, 2147483648
      %v568 = vor.u32 1.1754944e-38, %v567
      %v569 = vsel %vm566, %v568, %v564
      %v570 = vmul.f32 1.0, %v569
      %v571 = vrcp.pop %v432
      %v572 = vmul.f32 %v432, %v571
      %v573 = vsub.f32 1.0, %v572
      %v574 = vmul.f32 %v571, %v573
      %v575 = vadd.f32 %v571, %v574
      %vm576 = vweird.f32 %v432
      %vm577 = vweird.f32 %v571
      %vm578 = vmor %vm576, %vm577
      %v579 = vsel %vm578, %v571, %v575
      %v580 = vand.u32 2147483647, %v432
      %vm581 = vcmp.eq.f32.partialorder %v580, 8.507059e+37
      %v582 = vand.u32 %v432, 2147483648
      %v583 = vor.u32 1.1754944e-38, %v582
      %v584 = vsel %vm581, %v583, %v579
      %v585 = vmul.f32 1.0, %v584
      %v586 = vrcp.pop %v433
      %v587 = vmul.f32 %v433, %v586
      %v588 = vsub.f32 1.0, %v587
      %v589 = vmul.f32 %v586, %v588
      %v590 = vadd.f32 %v586, %v589
      %vm591 = vweird.f32 %v433
      %vm592 = vweird.f32 %v586
      %vm593 = vmor %vm591, %vm592
      %v594 = vsel %vm593, %v586, %v590
      %v595 = vand.u32 2147483647, %v433
      %vm596 = vcmp.eq.f32.partialorder %v595, 8.507059e+37
      %v597 = vand.u32 %v433, 2147483648
      %v598 = vor.u32 1.1754944e-38, %v597
      %v599 = vsel %vm596, %v598, %v594
      %v600 = vmul.f32 1.0, %v599
      %v601 = vrcp.pop %v434
      %v602 = vmul.f32 %v434, %v601
      %v603 = vsub.f32 1.0, %v602
      %v604 = vmul.f32 %v601, %v603
      %v605 = vadd.f32 %v601, %v604
      %vm606 = vweird.f32 %v434
      %vm607 = vweird.f32 %v601
      %vm608 = vmor %vm606, %vm607
      %v609 = vsel %vm608, %v601, %v605
      %v610 = vand.u32 2147483647, %v434
      %vm611 = vcmp.eq.f32.partialorder %v610, 8.507059e+37
      %v612 = vand.u32 %v434, 2147483648
      %v613 = vor.u32 1.1754944e-38, %v612
      %v614 = vsel %vm611, %v613, %v609
      %v615 = vmul.f32 1.0, %v614
      %v616 = vrcp.pop %v435
      %v617 = vmul.f32 %v435, %v616
      %v618 = vsub.f32 1.0, %v617
      %v619 = vmul.f32 %v616, %v618
      %v620 = vadd.f32 %v616, %v619
      %vm621 = vweird.f32 %v435
      %vm622 = vweird.f32 %v616
      %vm623 = vmor %vm621, %vm622
      %v624 = vsel %vm623, %v616, %v620
      %v625 = vand.u32 2147483647, %v435
      %vm626 = vcmp.eq.f32.partialorder %v625, 8.507059e+37
      %v627 = vand.u32 %v435, 2147483648
      %v628 = vor.u32 1.1754944e-38, %v627
      %v629 = vsel %vm626, %v628, %v624
      %v630 = vmul.f32 1.0, %v629
      %v631 = vrcp.pop %v436
      %v632 = vmul.f32 %v436, %v631
      %v633 = vsub.f32 1.0, %v632
      %v634 = vmul.f32 %v631, %v633
      %v635 = vadd.f32 %v631, %v634
      %vm636 = vweird.f32 %v436
      %vm637 = vweird.f32 %v631
      %vm638 = vmor %vm636, %vm637
      %v639 = vsel %vm638, %v631, %v635
      %v640 = vand.u32 2147483647, %v436
      %vm641 = vcmp.eq.f32.partialorder %v640, 8.507059e+37
      %v642 = vand.u32 %v436, 2147483648
      %v643 = vor.u32 1.1754944e-38, %v642
      %v644 = vsel %vm641, %v643, %v639
      %v645 = vmul.f32 1.0, %v644
      %v646 = vrcp.pop %v437
      %v647 = vmul.f32 %v437, %v646
      %v648 = vsub.f32 1.0, %v647
      %v649 = vmul.f32 %v646, %v648
      %v650 = vadd.f32 %v646, %v649
      %vm651 = vweird.f32 %v437
      %vm652 = vweird.f32 %v646
      %vm653 = vmor %vm651, %vm652
      %v654 = vsel %vm653, %v646, %v650
      %v655 = vand.u32 2147483647, %v437
      %vm656 = vcmp.eq.f32.partialorder %v655, 8.507059e+37
      %v657 = vand.u32 %v437, 2147483648
      %v658 = vor.u32 1.1754944e-38, %v657
      %v659 = vsel %vm656, %v658, %v654
      %v660 = vmul.f32 1.0, %v659
      %v661 = vrcp.pop %v438
      %v662 = vmul.f32 %v438, %v661
      %v663 = vsub.f32 1.0, %v662
      %v664 = vmul.f32 %v661, %v663
      %v665 = vadd.f32 %v661, %v664
      %vm666 = vweird.f32 %v438
      %vm667 = vweird.f32 %v661
      %vm668 = vmor %vm666, %vm667
      %v669 = vsel %vm668, %v661, %v665
      %v670 = vand.u32 2147483647, %v438
      %vm671 = vcmp.eq.f32.partialorder %v670, 8.507059e+37
      %v672 = vand.u32 %v438, 2147483648
      %v673 = vor.u32 1.1754944e-38, %v672
      %v674 = vsel %vm671, %v673, %v669
      %v675 = vmul.f32 1.0, %v674
      %v676 = vrcp.pop %v439
      %v677 = vmul.f32 %v439, %v676
      %v678 = vsub.f32 1.0, %v677
      %v679 = vmul.f32 %v676, %v678
      %v680 = vadd.f32 %v676, %v679
      %vm681 = vweird.f32 %v439
      %vm682 = vweird.f32 %v676
      %vm683 = vmor %vm681, %vm682
      %v684 = vsel %vm683, %v676, %v680
      %v685 = vand.u32 2147483647, %v439
      %vm686 = vcmp.eq.f32.partialorder %v685, 8.507059e+37
      %v687 = vand.u32 %v439, 2147483648
      %v688 = vor.u32 1.1754944e-38, %v687
      %v689 = vsel %vm686, %v688, %v684
      %v690 = vmul.f32 1.0, %v689
      %v691 = vrcp.pop %v440
      %v692 = vmul.f32 %v440, %v691
      %v693 = vsub.f32 1.0, %v692
      %v694 = vmul.f32 %v691, %v693
      %v695 = vadd.f32 %v691, %v694
      %vm696 = vweird.f32 %v440
      %vm697 = vweird.f32 %v691
      %vm698 = vmor %vm696, %vm697
      %v699 = vsel %vm698, %v691, %v695
      %v700 = vand.u32 2147483647, %v440
      %vm701 = vcmp.eq.f32.partialorder %v700, 8.507059e+37
      %v702 = vand.u32 %v440, 2147483648
      %v703 = vor.u32 1.1754944e-38, %v702
      %v704 = vsel %vm701, %v703, %v699
      %v705 = vmul.f32 1.0, %v704
      %v706 = vrcp.pop %v441
      %v707 = vmul.f32 %v441, %v706
      %v708 = vsub.f32 1.0, %v707
      %v709 = vmul.f32 %v706, %v708
      %v710 = vadd.f32 %v706, %v709
      %vm711 = vweird.f32 %v441
      %vm712 = vweird.f32 %v706
      %vm713 = vmor %vm711, %vm712
      %v714 = vsel %vm713, %v706, %v710
      %v715 = vand.u32 2147483647, %v441
      %vm716 = vcmp.eq.f32.partialorder %v715, 8.507059e+37
      %v717 = vand.u32 %v441, 2147483648
      %v718 = vor.u32 1.1754944e-38, %v717
      %v719 = vsel %vm716, %v718, %v714
      %v720 = vmul.f32 1.0, %v719
      %v721 = vrcp.pop %v442
      %v722 = vmul.f32 %v442, %v721
      %v723 = vsub.f32 1.0, %v722
      %v724 = vmul.f32 %v721, %v723
      %v725 = vadd.f32 %v721, %v724
      %vm726 = vweird.f32 %v442
      %vm727 = vweird.f32 %v721
      %vm728 = vmor %vm726, %vm727
      %v729 = vsel %vm728, %v721, %v725
      %v730 = vand.u32 2147483647, %v442
      %vm731 = vcmp.eq.f32.partialorder %v730, 8.507059e+37
      %v732 = vand.u32 %v442, 2147483648
      %v733 = vor.u32 1.1754944e-38, %v732
      %v734 = vsel %vm731, %v733, %v729
      %v735 = vmul.f32 1.0, %v734
      %v736 = vrcp.pop %v443
      %v737 = vmul.f32 %v443, %v736
      %v738 = vsub.f32 1.0, %v737
      %v739 = vmul.f32 %v736, %v738
      %v740 = vadd.f32 %v736, %v739
      %vm741 = vweird.f32 %v443
      %vm742 = vweird.f32 %v736
      %vm743 = vmor %vm741, %vm742
      %v744 = vsel %vm743, %v736, %v740
      %v745 = vand.u32 2147483647, %v443
      %vm746 = vcmp.eq.f32.partialorder %v745, 8.507059e+37
      %v747 = vand.u32 %v443, 2147483648
      %v748 = vor.u32 1.1754944e-38, %v747
      %v749 = vsel %vm746, %v748, %v744
      %v750 = vmul.f32 1.0, %v749
      %v751 = vrcp.pop %v444
      %v752 = vmul.f32 %v444, %v751
      %v753 = vsub.f32 1.0, %v752
      %v754 = vmul.f32 %v751, %v753
      %v755 = vadd.f32 %v751, %v754
      %vm756 = vweird.f32 %v444
      %vm757 = vweird.f32 %v751
      %vm758 = vmor %vm756, %vm757
      %v759 = vsel %vm758, %v751, %v755
      %v760 = vand.u32 2147483647, %v444
      %vm761 = vcmp.eq.f32.partialorder %v760, 8.507059e+37
      %v762 = vand.u32 %v444, 2147483648
      %v763 = vor.u32 1.1754944e-38, %v762
      %v764 = vsel %vm761, %v763, %v759
      %v765 = vmul.f32 1.0, %v764
      %v766 = vrcp.pop %v445
      %v767 = vmul.f32 %v445, %v766
      %v768 = vsub.f32 1.0, %v767
      %v769 = vmul.f32 %v766, %v768
      %v770 = vadd.f32 %v766, %v769
      %vm771 = vweird.f32 %v445
      %vm772 = vweird.f32 %v766
      %vm773 = vmor %vm771, %vm772
      %v774 = vsel %vm773, %v766, %v770
      %v775 = vand.u32 2147483647, %v445
      %vm776 = vcmp.eq.f32.partialorder %v775, 8.507059e+37
      %v777 = vand.u32 %v445, 2147483648
      %v778 = vor.u32 1.1754944e-38, %v777
      %v779 = vsel %vm776, %v778, %v774
      %v780 = vmul.f32 1.0, %v779
      %v781 = vrcp.pop %v446
      %v782 = vmul.f32 %v446, %v781
      %v783 = vsub.f32 1.0, %v782
      %v784 = vmul.f32 %v781, %v783
      %v785 = vadd.f32 %v781, %v784
      %vm786 = vweird.f32 %v446
      %vm787 = vweird.f32 %v781
      %vm788 = vmor %vm786, %vm787
      %v789 = vsel %vm788, %v781, %v785
      %v790 = vand.u32 2147483647, %v446
      %vm791 = vcmp.eq.f32.partialorder %v790, 8.507059e+37
      %v792 = vand.u32 %v446, 2147483648
      %v793 = vor.u32 1.1754944e-38, %v792
      %v794 = vsel %vm791, %v793, %v789
      %v795 = vmul.f32 1.0, %v794
      %v796 = vrcp.pop %v447
      %v797 = vmul.f32 %v447, %v796
      %v798 = vsub.f32 1.0, %v797
      %v799 = vmul.f32 %v796, %v798
      %v800 = vadd.f32 %v796, %v799
      %vm801 = vweird.f32 %v447
      %vm802 = vweird.f32 %v796
      %vm803 = vmor %vm801, %vm802
      %v804 = vsel %vm803, %v796, %v800
      %v805 = vand.u32 2147483647, %v447
      %vm806 = vcmp.eq.f32.partialorder %v805, 8.507059e+37
      %v807 = vand.u32 %v447, 2147483648
      %v808 = vor.u32 1.1754944e-38, %v807
      %v809 = vsel %vm806, %v808, %v804
      %v810 = vmul.f32 1.0, %v809
      %v811 = vrcp.pop %v448
      %v812 = vmul.f32 %v448, %v811
      %v813 = vsub.f32 1.0, %v812
      %v814 = vmul.f32 %v811, %v813
      %v815 = vadd.f32 %v811, %v814
      %vm816 = vweird.f32 %v448
      %vm817 = vweird.f32 %v811
      %vm818 = vmor %vm816, %vm817
      %v819 = vsel %vm818, %v811, %v815
      %v820 = vand.u32 2147483647, %v448
      %vm821 = vcmp.eq.f32.partialorder %v820, 8.507059e+37
      %v822 = vand.u32 %v448, 2147483648
      %v823 = vor.u32 1.1754944e-38, %v822
      %v824 = vsel %vm821, %v823, %v819
      %v825 = vmul.f32 1.0, %v824
      %v826 = vrcp.pop %v449
      %v827 = vmul.f32 %v449, %v826
      %v828 = vsub.f32 1.0, %v827
      %v829 = vmul.f32 %v826, %v828
      %v830 = vadd.f32 %v826, %v829
      %vm831 = vweird.f32 %v449
      %vm832 = vweird.f32 %v826
      %vm833 = vmor %vm831, %vm832
      %v834 = vsel %vm833, %v826, %v830
      %v835 = vand.u32 2147483647, %v449
      %vm836 = vcmp.eq.f32.partialorder %v835, 8.507059e+37
      %v837 = vand.u32 %v449, 2147483648
      %v838 = vor.u32 1.1754944e-38, %v837
      %v839 = vsel %vm836, %v838, %v834
      %v840 = vmul.f32 1.0, %v839
      %v841 = vrcp.pop %v450
      %v842 = vmul.f32 %v450, %v841
      %v843 = vsub.f32 1.0, %v842
      %v844 = vmul.f32 %v841, %v843
      %v845 = vadd.f32 %v841, %v844
      %vm846 = vweird.f32 %v450
      %vm847 = vweird.f32 %v841
      %vm848 = vmor %vm846, %vm847
      %v849 = vsel %vm848, %v841, %v845
      %v850 = vand.u32 2147483647, %v450
      %vm851 = vcmp.eq.f32.partialorder %v850, 8.507059e+37
      %v852 = vand.u32 %v450, 2147483648
      %v853 = vor.u32 1.1754944e-38, %v852
      %v854 = vsel %vm851, %v853, %v849
      %v855 = vmul.f32 1.0, %v854
      %v856 = vld [vmem:[%s301] sm:$0xff]
      %v857 = vld [vmem:[%s301 + $0x8] sm:$0xff]
      %v858 = vld [vmem:[%s301 + $0x10] sm:$0xff]
      %v859 = vld [vmem:[%s301 + $0x18] sm:$0xff]
      %v860 = vld [vmem:[%s301 + $0x20] sm:$0xff]
      %v861 = vld [vmem:[%s301 + $0x28] sm:$0xff]
      %v862 = vld [vmem:[%s301 + $0x30] sm:$0xff]
      %v863 = vld [vmem:[%s301 + $0x38] sm:$0xff]
      %v864 = vld [vmem:[%s301 + $0x40] sm:$0xff]
      %v865 = vld [vmem:[%s301 + $0x48] sm:$0xff]
      %v866 = vld [vmem:[%s301 + $0x50] sm:$0xff]
      %v867 = vld [vmem:[%s301 + $0x58] sm:$0xff]
      %v868 = vld [vmem:[%s301 + $0x60] sm:$0xff]
      %v869 = vld [vmem:[%s301 + $0x68] sm:$0xff]
      %v870 = vld [vmem:[%s301 + $0x70] sm:$0xff]
      %v871 = vld [vmem:[%s301 + $0x78] sm:$0xff]
      %v872 = vld [vmem:[%s301 + $0x80] sm:$0xff]
      %v873 = vld [vmem:[%s301 + $0x88] sm:$0xff]
      %v874 = vld [vmem:[%s301 + $0x90] sm:$0xff]
      %v875 = vld [vmem:[%s301 + $0x98] sm:$0xff]
      %v876 = vld [vmem:[%s301 + $0xa0] sm:$0xff]
      %v877 = vld [vmem:[%s301 + $0xa8] sm:$0xff]
      %v878 = vld [vmem:[%s301 + $0xb0] sm:$0xff]
      %v879 = vld [vmem:[%s301 + $0xb8] sm:$0xff]
      %v880 = vld [vmem:[%s301 + $0xc0] sm:$0xff]
      %v881 = vld [vmem:[%s301 + $0xc8] sm:$0xff]
      %v882 = vld [vmem:[%s301 + $0xd0] sm:$0xff]
      %v883 = vld [vmem:[%s301 + $0xd8] sm:$0xff]
      %v884 = vld [vmem:[%s301 + $0xe0] sm:$0xff]
      %v885 = vld [vmem:[%s301 + $0xe8] sm:$0xff]
      %v886 = vld [vmem:[%s301 + $0xf0] sm:$0xff]
      %v887 = vld [vmem:[%s301 + $0xf8] sm:$0xff]
      %v888 = vld [vmem:[%s301 + $0x100] sm:$0xff]
      %v889 = vld [vmem:[%s301 + $0x108] sm:$0xff]
      %v890 = vld [vmem:[%s301 + $0x110] sm:$0xff]
      %v891 = vld [vmem:[%s301 + $0x118] sm:$0xff]
      %v892 = vld [vmem:[%s301 + $0x120] sm:$0xff]
      %v893 = vld [vmem:[%s301 + $0x128] sm:$0xff]
      %v894 = vld [vmem:[%s301 + $0x130] sm:$0xff]
      %v895 = vld [vmem:[%s301 + $0x138] sm:$0xff]
      %v896 = vld [vmem:[%s301 + $0x140] sm:$0xff]
      %v897 = vld [vmem:[%s301 + $0x148] sm:$0xff]
      %v898 = vld [vmem:[%s301 + $0x150] sm:$0xff]
      %v899 = vld [vmem:[%s301 + $0x158] sm:$0xff]
      %v900 = vld [vmem:[%s301 + $0x160] sm:$0xff]
      %v901 = vld [vmem:[%s301 + $0x168] sm:$0xff]
      %v902 = vld [vmem:[%s301 + $0x170] sm:$0xff]
      %v903 = vld [vmem:[%s301 + $0x178] sm:$0xff]
      %v904 = vld [vmem:[%s301 + $0x180] sm:$0xff]
      %v905 = vld [vmem:[%s301 + $0x188] sm:$0xff]
      %v906 = vld [vmem:[%s301 + $0x190] sm:$0xff]
      %v907 = vld [vmem:[%s301 + $0x198] sm:$0xff]
      %v908 = vld [vmem:[%s301 + $0x1a0] sm:$0xff]
      %v909 = vld [vmem:[%s301 + $0x1a8] sm:$0xff]
      %911 = vset.pattern.permute.xlu0 0
      %912 = vperm.xlu0 %911, %v465
      %v913 = vpop.permute.xlu0 %912
      %916 = vset.pattern.permute.xlu0 0
      %917 = vperm.xlu0 %916, %v480
      %v918 = vpop.permute.xlu0 %917
      %921 = vset.pattern.permute.xlu0 0
      %922 = vperm.xlu0 %921, %v495
      %v923 = vpop.permute.xlu0 %922
      %926 = vset.pattern.permute.xlu0 0
      %927 = vperm.xlu0 %926, %v510
      %v928 = vpop.permute.xlu0 %927
      %931 = vset.pattern.permute.xlu0 0
      %932 = vperm.xlu0 %931, %v525
      %v933 = vpop.permute.xlu0 %932
      %936 = vset.pattern.permute.xlu0 0
      %937 = vperm.xlu0 %936, %v540
      %v938 = vpop.permute.xlu0 %937
      %941 = vset.pattern.permute.xlu0 0
      %942 = vperm.xlu0 %941, %v555
      %v943 = vpop.permute.xlu0 %942
      %946 = vset.pattern.permute.xlu0 0
      %947 = vperm.xlu0 %946, %v570
      %v948 = vpop.permute.xlu0 %947
      %951 = vset.pattern.permute.xlu0 0
      %952 = vperm.xlu0 %951, %v585
      %v953 = vpop.permute.xlu0 %952
      %956 = vset.pattern.permute.xlu0 0
      %957 = vperm.xlu0 %956, %v600
      %v958 = vpop.permute.xlu0 %957
      %961 = vset.pattern.permute.xlu0 0
      %962 = vperm.xlu0 %961, %v615
      %v963 = vpop.permute.xlu0 %962
      %966 = vset.pattern.permute.xlu0 0
      %967 = vperm.xlu0 %966, %v630
      %v968 = vpop.permute.xlu0 %967
      %971 = vset.pattern.permute.xlu0 0
      %972 = vperm.xlu0 %971, %v645
      %v973 = vpop.permute.xlu0 %972
      %976 = vset.pattern.permute.xlu0 0
      %977 = vperm.xlu0 %976, %v660
      %v978 = vpop.permute.xlu0 %977
      %981 = vset.pattern.permute.xlu0 0
      %982 = vperm.xlu0 %981, %v675
      %v983 = vpop.permute.xlu0 %982
      %986 = vset.pattern.permute.xlu0 0
      %987 = vperm.xlu0 %986, %v690
      %v988 = vpop.permute.xlu0 %987
      %991 = vset.pattern.permute.xlu0 0
      %992 = vperm.xlu0 %991, %v705
      %v993 = vpop.permute.xlu0 %992
      %996 = vset.pattern.permute.xlu0 0
      %997 = vperm.xlu0 %996, %v720
      %v998 = vpop.permute.xlu0 %997
      %1001 = vset.pattern.permute.xlu0 0
      %1002 = vperm.xlu0 %1001, %v735
      %v1003 = vpop.permute.xlu0 %1002
      %1006 = vset.pattern.permute.xlu0 0
      %1007 = vperm.xlu0 %1006, %v750
      %v1008 = vpop.permute.xlu0 %1007
      %1011 = vset.pattern.permute.xlu0 0
      %1012 = vperm.xlu0 %1011, %v765
      %v1013 = vpop.permute.xlu0 %1012
      %1016 = vset.pattern.permute.xlu0 0
      %1017 = vperm.xlu0 %1016, %v780
      %v1018 = vpop.permute.xlu0 %1017
      %1021 = vset.pattern.permute.xlu0 0
      %1022 = vperm.xlu0 %1021, %v795
      %v1023 = vpop.permute.xlu0 %1022
      %1026 = vset.pattern.permute.xlu0 0
      %1027 = vperm.xlu0 %1026, %v810
      %v1028 = vpop.permute.xlu0 %1027
      %1031 = vset.pattern.permute.xlu0 0
      %1032 = vperm.xlu0 %1031, %v825
      %v1033 = vpop.permute.xlu0 %1032
      %1036 = vset.pattern.permute.xlu0 0
      %1037 = vperm.xlu0 %1036, %v840
      %v1038 = vpop.permute.xlu0 %1037
      %1041 = vset.pattern.permute.xlu0 0
      %1042 = vperm.xlu0 %1041, %v855
      %v1043 = vpop.permute.xlu0 %1042
      %v1045 = vmul.f32 %v913, %v856
      %v1046 = vmul.f32 %v913, %v857
      %v1047 = vmul.f32 %v918, %v858
      %v1048 = vmul.f32 %v918, %v859
      %v1049 = vmul.f32 %v923, %v860
      %v1050 = vmul.f32 %v923, %v861
      %v1051 = vmul.f32 %v928, %v862
      %v1052 = vmul.f32 %v928, %v863
      %v1053 = vmul.f32 %v933, %v864
      %v1054 = vmul.f32 %v933, %v865
      %v1055 = vmul.f32 %v938, %v866
      %v1056 = vmul.f32 %v938, %v867
      %v1057 = vmul.f32 %v943, %v868
      %v1058 = vmul.f32 %v943, %v869
      %v1059 = vmul.f32 %v948, %v870
      %v1060 = vmul.f32 %v948, %v871
      %v1061 = vmul.f32 %v953, %v872
      %v1062 = vmul.f32 %v953, %v873
      %v1063 = vmul.f32 %v958, %v874
      %v1064 = vmul.f32 %v958, %v875
      %v1065 = vmul.f32 %v963, %v876
      %v1066 = vmul.f32 %v963, %v877
      %v1067 = vmul.f32 %v968, %v878
      %v1068 = vmul.f32 %v968, %v879
      %v1069 = vmul.f32 %v973, %v880
      %v1070 = vmul.f32 %v973, %v881
      %v1071 = vmul.f32 %v978, %v882
      %v1072 = vmul.f32 %v978, %v883
      %v1073 = vmul.f32 %v983, %v884
      %v1074 = vmul.f32 %v983, %v885
      %v1075 = vmul.f32 %v988, %v886
      %v1076 = vmul.f32 %v988, %v887
      %v1077 = vmul.f32 %v993, %v888
      %v1078 = vmul.f32 %v993, %v889
      %v1079 = vmul.f32 %v998, %v890
      %v1080 = vmul.f32 %v998, %v891
      %v1081 = vmul.f32 %v1003, %v892
      %v1082 = vmul.f32 %v1003, %v893
      %v1083 = vmul.f32 %v1008, %v894
      %v1084 = vmul.f32 %v1008, %v895
      %v1085 = vmul.f32 %v1013, %v896
      %v1086 = vmul.f32 %v1013, %v897
      %v1087 = vmul.f32 %v1018, %v898
      %v1088 = vmul.f32 %v1018, %v899
      %v1089 = vmul.f32 %v1023, %v900
      %v1090 = vmul.f32 %v1023, %v901
      %v1091 = vmul.f32 %v1028, %v902
      %v1092 = vmul.f32 %v1028, %v903
      %v1093 = vmul.f32 %v1033, %v904
      %v1094 = vmul.f32 %v1033, %v905
      %v1095 = vmul.f32 %v1038, %v906
      %v1096 = vmul.f32 %v1038, %v907
      %v1097 = vmul.f32 %v1043, %v908
      %v1098 = vmul.f32 %v1043, %v909
      %p1099 = scmp.eq.s32.totalorder %s21, 0
      // Predicated region
      $region45: #{tpu_custom_call.1} parent=43 // pred_check
        %p1100 = pneg %p1099
      $region46: #{tpu_custom_call.1} parent=43 // pred_check_branch
        %1102 = sbr.rel (%p1100) target = $region48
      $region47: #{tpu_custom_call.1} parent=43 // pred_region
        %v1103 = vld [vmem:[%s3] sm:$0xff]
        %v1104 = vld [vmem:[%s3 + $0x8] sm:$0xff]
        %v1105 = vld [vmem:[%s3 + $0x10] sm:$0xff]
        %v1106 = vld [vmem:[%s3 + $0x18] sm:$0xff]
        %v1107 = vld [vmem:[%s3 + $0x20] sm:$0xff]
        %v1108 = vld [vmem:[%s3 + $0x28] sm:$0xff]
        %v1109 = vld [vmem:[%s3 + $0x30] sm:$0xff]
        %v1110 = vld [vmem:[%s3 + $0x38] sm:$0xff]
        %v1111 = vld [vmem:[%s3 + $0x40] sm:$0xff]
        %v1112 = vld [vmem:[%s3 + $0x48] sm:$0xff]
        %v1113 = vld [vmem:[%s3 + $0x50] sm:$0xff]
        %v1114 = vld [vmem:[%s3 + $0x58] sm:$0xff]
        %v1115 = vld [vmem:[%s3 + $0x60] sm:$0xff]
        %v1116 = vld [vmem:[%s3 + $0x68] sm:$0xff]
        %v1117 = vld [vmem:[%s3 + $0x70] sm:$0xff]
        %v1118 = vld [vmem:[%s3 + $0x78] sm:$0xff]
        %v1119 = vld [vmem:[%s3 + $0x80] sm:$0xff]
        %v1120 = vld [vmem:[%s3 + $0x88] sm:$0xff]
        %v1121 = vld [vmem:[%s3 + $0x90] sm:$0xff]
        %v1122 = vld [vmem:[%s3 + $0x98] sm:$0xff]
        %v1123 = vld [vmem:[%s3 + $0xa0] sm:$0xff]
        %v1124 = vld [vmem:[%s3 + $0xa8] sm:$0xff]
        %v1125 = vld [vmem:[%s3 + $0xb0] sm:$0xff]
        %v1126 = vld [vmem:[%s3 + $0xb8] sm:$0xff]
        %v1127 = vld [vmem:[%s3 + $0xc0] sm:$0xff]
        %v1128 = vld [vmem:[%s3 + $0xc8] sm:$0xff]
        %v1129 = vld [vmem:[%s3 + $0xd0] sm:$0xff]
        %v1130 = vld [vmem:[%s3 + $0xd8] sm:$0xff]
        %v1131 = vld [vmem:[%s3 + $0xe0] sm:$0xff]
        %v1132 = vld [vmem:[%s3 + $0xe8] sm:$0xff]
        %v1133 = vld [vmem:[%s3 + $0xf0] sm:$0xff]
        %v1134 = vld [vmem:[%s3 + $0xf8] sm:$0xff]
        %v1135 = vld [vmem:[%s3 + $0x100] sm:$0xff]
        %v1136 = vld [vmem:[%s3 + $0x108] sm:$0xff]
        %v1137 = vld [vmem:[%s3 + $0x110] sm:$0xff]
        %v1138 = vld [vmem:[%s3 + $0x118] sm:$0xff]
        %v1139 = vld [vmem:[%s3 + $0x120] sm:$0xff]
        %v1140 = vld [vmem:[%s3 + $0x128] sm:$0xff]
        %v1141 = vld [vmem:[%s3 + $0x130] sm:$0xff]
        %v1142 = vld [vmem:[%s3 + $0x138] sm:$0xff]
        %v1143 = vld [vmem:[%s3 + $0x140] sm:$0xff]
        %v1144 = vld [vmem:[%s3 + $0x148] sm:$0xff]
        %v1145 = vld [vmem:[%s3 + $0x150] sm:$0xff]
        %v1146 = vld [vmem:[%s3 + $0x158] sm:$0xff]
        %v1147 = vld [vmem:[%s3 + $0x160] sm:$0xff]
        %v1148 = vld [vmem:[%s3 + $0x168] sm:$0xff]
        %v1149 = vld [vmem:[%s3 + $0x170] sm:$0xff]
        %v1150 = vld [vmem:[%s3 + $0x178] sm:$0xff]
        %v1151 = vld [vmem:[%s3 + $0x180] sm:$0xff]
        %v1152 = vld [vmem:[%s3 + $0x188] sm:$0xff]
        %v1153 = vld [vmem:[%s3 + $0x190] sm:$0xff]
        %v1154 = vld [vmem:[%s3 + $0x198] sm:$0xff]
        %v1155 = vld [vmem:[%s3 + $0x1a0] sm:$0xff]
        %v1156 = vld [vmem:[%s3 + $0x1a8] sm:$0xff]
        %vm1157 = vcmask 719872
        %v1159 = vsel %vm1157, %v1104, 0
        %v1162 = vsel %vm1157, %v1106, 0
        %v1165 = vsel %vm1157, %v1108, 0
        %v1168 = vsel %vm1157, %v1110, 0
        %v1171 = vsel %vm1157, %v1112, 0
        %v1174 = vsel %vm1157, %v1114, 0
        %v1177 = vsel %vm1157, %v1116, 0
        %v1180 = vsel %vm1157, %v1118, 0
        %v1183 = vsel %vm1157, %v1120, 0
        %v1186 = vsel %vm1157, %v1122, 0
        %v1189 = vsel %vm1157, %v1124, 0
        %v1192 = vsel %vm1157, %v1126, 0
        %v1195 = vsel %vm1157, %v1128, 0
        %v1198 = vsel %vm1157, %v1130, 0
        %v1201 = vsel %vm1157, %v1132, 0
        %v1204 = vsel %vm1157, %v1134, 0
        %v1207 = vsel %vm1157, %v1136, 0
        %v1210 = vsel %vm1157, %v1138, 0
        %v1213 = vsel %vm1157, %v1140, 0
        %v1216 = vsel %vm1157, %v1142, 0
        %v1219 = vsel %vm1157, %v1144, 0
        %v1222 = vsel %vm1157, %v1146, 0
        %v1225 = vsel %vm1157, %v1148, 0
        %v1228 = vsel %vm1157, %v1150, 0
        %v1231 = vsel %vm1157, %v1152, 0
        %v1234 = vsel %vm1157, %v1154, 0
        %v1237 = vsel %vm1157, %v1156, 0
        %1239 = vmatpush.msra.mxu0 %v1075
        %1240 = vmatpush.msra.mxu0 %v1073
        %1241 = vmatpush.msra.mxu0 %v1071
        %1242 = vmatpush.msra.mxu0 %v1069
        %1243 = vmatpush.msra.mxu0 %v1067
        %1244 = vmatpush.msra.mxu0 %v1065
        %1245 = vmatpush.msra.mxu0 %v1063
        %1246 = vmatpush.msra.mxu0 %v1061
        %1247 = vmatpush.msra.mxu0 %v1059
        %1248 = vmatpush.msra.mxu0 %v1057
        %1249 = vmatpush.msra.mxu0 %v1055
        %1250 = vmatpush.msra.mxu0 %v1053
        %1251 = vmatpush.msra.mxu0 %v1051
        %1252 = vmatpush.msra.mxu0 %v1049
        %1253 = vmatpush.msra.mxu0 %v1047
        %1254 = vmatpush.msra.mxu0 %v1045
        %1255 = vmatmul.f32.gmra.mxu0 %v1103
        %v1256 = vpop.f32.mrf.mxu0
        %v1257 = vadd.f32 0.0, %v1256
        %1258 = vmatmul.f32.gmra.mxu0 %v1105
        %v1259 = vpop.f32.mrf.mxu0
        %v1260 = vadd.f32 0.0, %v1259
        %1261 = vmatmul.f32.gmra.mxu0 %v1107
        %v1262 = vpop.f32.mrf.mxu0
        %v1263 = vadd.f32 0.0, %v1262
        %1264 = vmatmul.f32.gmra.mxu0 %v1109
        %v1265 = vpop.f32.mrf.mxu0
        %v1266 = vadd.f32 0.0, %v1265
        %1267 = vmatmul.f32.gmra.mxu0 %v1111
        %v1268 = vpop.f32.mrf.mxu0
        %v1269 = vadd.f32 0.0, %v1268
        %1270 = vmatmul.f32.gmra.mxu0 %v1113
        %v1271 = vpop.f32.mrf.mxu0
        %v1272 = vadd.f32 0.0, %v1271
        %1273 = vmatmul.f32.gmra.mxu0 %v1115
        %v1274 = vpop.f32.mrf.mxu0
        %v1275 = vadd.f32 0.0, %v1274
        %1276 = vmatmul.f32.gmra.mxu0 %v1117
        %v1277 = vpop.f32.mrf.mxu0
        %v1278 = vadd.f32 0.0, %v1277
        %1279 = vmatmul.f32.gmra.mxu0 %v1119
        %v1280 = vpop.f32.mrf.mxu0
        %v1281 = vadd.f32 0.0, %v1280
        %1282 = vmatmul.f32.gmra.mxu0 %v1121
        %v1283 = vpop.f32.mrf.mxu0
        %v1284 = vadd.f32 0.0, %v1283
        %1285 = vmatmul.f32.gmra.mxu0 %v1123
        %v1286 = vpop.f32.mrf.mxu0
        %v1287 = vadd.f32 0.0, %v1286
        %1288 = vmatmul.f32.gmra.mxu0 %v1125
        %v1289 = vpop.f32.mrf.mxu0
        %v1290 = vadd.f32 0.0, %v1289
        %1291 = vmatmul.f32.gmra.mxu0 %v1127
        %v1292 = vpop.f32.mrf.mxu0
        %v1293 = vadd.f32 0.0, %v1292
        %1294 = vmatmul.f32.gmra.mxu0 %v1129
        %v1295 = vpop.f32.mrf.mxu0
        %v1296 = vadd.f32 0.0, %v1295
        %1297 = vmatmul.f32.gmra.mxu0 %v1131
        %v1298 = vpop.f32.mrf.mxu0
        %v1299 = vadd.f32 0.0, %v1298
        %1300 = vmatmul.f32.gmra.mxu0 %v1133
        %v1301 = vpop.f32.mrf.mxu0
        %v1302 = vadd.f32 0.0, %v1301
        %1303 = vmatmul.f32.gmra.mxu0 %v1135
        %v1304 = vpop.f32.mrf.mxu0
        %v1305 = vadd.f32 0.0, %v1304
        %1306 = vmatmul.f32.gmra.mxu0 %v1137
        %v1307 = vpop.f32.mrf.mxu0
        %v1308 = vadd.f32 0.0, %v1307
        %1309 = vmatmul.f32.gmra.mxu0 %v1139
        %v1310 = vpop.f32.mrf.mxu0
        %v1311 = vadd.f32 0.0, %v1310
        %1312 = vmatmul.f32.gmra.mxu0 %v1141
        %v1313 = vpop.f32.mrf.mxu0
        %v1314 = vadd.f32 0.0, %v1313
        %1315 = vmatmul.f32.gmra.mxu0 %v1143
        %v1316 = vpop.f32.mrf.mxu0
        %v1317 = vadd.f32 0.0, %v1316
        %1318 = vmatmul.f32.gmra.mxu0 %v1145
        %v1319 = vpop.f32.mrf.mxu0
        %v1320 = vadd.f32 0.0, %v1319
        %1321 = vmatmul.f32.gmra.mxu0 %v1147
        %v1322 = vpop.f32.mrf.mxu0
        %v1323 = vadd.f32 0.0, %v1322
        %1324 = vmatmul.f32.gmra.mxu0 %v1149
        %v1325 = vpop.f32.mrf.mxu0
        %v1326 = vadd.f32 0.0, %v1325
        %1327 = vmatmul.f32.gmra.mxu0 %v1151
        %v1328 = vpop.f32.mrf.mxu0
        %v1329 = vadd.f32 0.0, %v1328
        %1330 = vmatmul.f32.gmra.mxu0 %v1153
        %v1331 = vpop.f32.mrf.mxu0
        %v1332 = vadd.f32 0.0, %v1331
        %1333 = vmatmul.f32.gmra.mxu0 %v1155
        %v1334 = vpop.f32.mrf.mxu0
        %v1335 = vadd.f32 0.0, %v1334
        %1336 = vdwg.mxu0
        %1337 = vmatpush.msra.mxu0 0.0
        %1338 = vmatpush.msra.mxu0 0.0
        %1339 = vmatpush.msra.mxu0 0.0
        %1340 = vmatpush.msra.mxu0 0.0
        %1341 = vmatpush.msra.mxu0 0.0
        %1342 = vmatpush.msra.mxu0 %v1097
        %1343 = vmatpush.msra.mxu0 %v1095
        %1344 = vmatpush.msra.mxu0 %v1093
        %1345 = vmatpush.msra.mxu0 %v1091
        %1346 = vmatpush.msra.mxu0 %v1089
        %1347 = vmatpush.msra.mxu0 %v1087
        %1348 = vmatpush.msra.mxu0 %v1085
        %1349 = vmatpush.msra.mxu0 %v1083
        %1350 = vmatpush.msra.mxu0 %v1081
        %1351 = vmatpush.msra.mxu0 %v1079
        %1352 = vmatpush.msra.mxu0 %v1077
        %1353 = vmatmul.f32.gmra.mxu0 %v1159
        %v1354 = vpop.f32.mrf.mxu0
        %v1355 = vadd.f32 %v1257, %v1354
        %1356 = vmatmul.f32.gmra.mxu0 %v1162
        %v1357 = vpop.f32.mrf.mxu0
        %v1358 = vadd.f32 %v1260, %v1357
        %1359 = vmatmul.f32.gmra.mxu0 %v1165
        %v1360 = vpop.f32.mrf.mxu0
        %v1361 = vadd.f32 %v1263, %v1360
        %1362 = vmatmul.f32.gmra.mxu0 %v1168
        %v1363 = vpop.f32.mrf.mxu0
        %v1364 = vadd.f32 %v1266, %v1363
        %1365 = vmatmul.f32.gmra.mxu0 %v1171
        %v1366 = vpop.f32.mrf.mxu0
        %v1367 = vadd.f32 %v1269, %v1366
        %1368 = vmatmul.f32.gmra.mxu0 %v1174
        %v1369 = vpop.f32.mrf.mxu0
        %v1370 = vadd.f32 %v1272, %v1369
        %1371 = vmatmul.f32.gmra.mxu0 %v1177
        %v1372 = vpop.f32.mrf.mxu0
        %v1373 = vadd.f32 %v1275, %v1372
        %1374 = vmatmul.f32.gmra.mxu0 %v1180
        %v1375 = vpop.f32.mrf.mxu0
        %v1376 = vadd.f32 %v1278, %v1375
        %1377 = vmatmul.f32.gmra.mxu0 %v1183
        %v1378 = vpop.f32.mrf.mxu0
        %v1379 = vadd.f32 %v1281, %v1378
        %1380 = vmatmul.f32.gmra.mxu0 %v1186
        %v1381 = vpop.f32.mrf.mxu0
        %v1382 = vadd.f32 %v1284, %v1381
        %1383 = vmatmul.f32.gmra.mxu0 %v1189
        %v1384 = vpop.f32.mrf.mxu0
        %v1385 = vadd.f32 %v1287, %v1384
        %1386 = vmatmul.f32.gmra.mxu0 %v1192
        %v1387 = vpop.f32.mrf.mxu0
        %v1388 = vadd.f32 %v1290, %v1387
        %1389 = vmatmul.f32.gmra.mxu0 %v1195
        %v1390 = vpop.f32.mrf.mxu0
        %v1391 = vadd.f32 %v1293, %v1390
        %1392 = vmatmul.f32.gmra.mxu0 %v1198
        %v1393 = vpop.f32.mrf.mxu0
        %v1394 = vadd.f32 %v1296, %v1393
        %1395 = vmatmul.f32.gmra.mxu0 %v1201
        %v1396 = vpop.f32.mrf.mxu0
        %v1397 = vadd.f32 %v1299, %v1396
        %1398 = vmatmul.f32.gmra.mxu0 %v1204
        %v1399 = vpop.f32.mrf.mxu0
        %v1400 = vadd.f32 %v1302, %v1399
        %1401 = vmatmul.f32.gmra.mxu0 %v1207
        %v1402 = vpop.f32.mrf.mxu0
        %v1403 = vadd.f32 %v1305, %v1402
        %1404 = vmatmul.f32.gmra.mxu0 %v1210
        %v1405 = vpop.f32.mrf.mxu0
        %v1406 = vadd.f32 %v1308, %v1405
        %1407 = vmatmul.f32.gmra.mxu0 %v1213
        %v1408 = vpop.f32.mrf.mxu0
        %v1409 = vadd.f32 %v1311, %v1408
        %1410 = vmatmul.f32.gmra.mxu0 %v1216
        %v1411 = vpop.f32.mrf.mxu0
        %v1412 = vadd.f32 %v1314, %v1411
        %1413 = vmatmul.f32.gmra.mxu0 %v1219
        %v1414 = vpop.f32.mrf.mxu0
        %v1415 = vadd.f32 %v1317, %v1414
        %1416 = vmatmul.f32.gmra.mxu0 %v1222
        %v1417 = vpop.f32.mrf.mxu0
        %v1418 = vadd.f32 %v1320, %v1417
        %1419 = vmatmul.f32.gmra.mxu0 %v1225
        %v1420 = vpop.f32.mrf.mxu0
        %v1421 = vadd.f32 %v1323, %v1420
        %1422 = vmatmul.f32.gmra.mxu0 %v1228
        %v1423 = vpop.f32.mrf.mxu0
        %v1424 = vadd.f32 %v1326, %v1423
        %1425 = vmatmul.f32.gmra.mxu0 %v1231
        %v1426 = vpop.f32.mrf.mxu0
        %v1427 = vadd.f32 %v1329, %v1426
        %1428 = vmatmul.f32.gmra.mxu0 %v1234
        %v1429 = vpop.f32.mrf.mxu0
        %v1430 = vadd.f32 %v1332, %v1429
        %1431 = vmatmul.f32.gmra.mxu0 %v1237
        %v1432 = vpop.f32.mrf.mxu0
        %v1433 = vadd.f32 %v1335, %v1432
        %1434 = vdwg.mxu0
        %1435 = vmatpush.msra.mxu0 %v1076
        %1436 = vmatpush.msra.mxu0 %v1074
        %1437 = vmatpush.msra.mxu0 %v1072
        %1438 = vmatpush.msra.mxu0 %v1070
        %1439 = vmatpush.msra.mxu0 %v1068
        %1440 = vmatpush.msra.mxu0 %v1066
        %1441 = vmatpush.msra.mxu0 %v1064
        %1442 = vmatpush.msra.mxu0 %v1062
        %1443 = vmatpush.msra.mxu0 %v1060
        %1444 = vmatpush.msra.mxu0 %v1058
        %1445 = vmatpush.msra.mxu0 %v1056
        %1446 = vmatpush.msra.mxu0 %v1054
        %1447 = vmatpush.msra.mxu0 %v1052
        %1448 = vmatpush.msra.mxu0 %v1050
        %1449 = vmatpush.msra.mxu0 %v1048
        %1450 = vmatpush.msra.mxu0 %v1046
        %1451 = vmatmul.f32.gmra.mxu0 %v1103
        %v1452 = vpop.f32.mrf.mxu0
        %v1453 = vadd.f32 0.0, %v1452
        %1454 = vmatmul.f32.gmra.mxu0 %v1105
        %v1455 = vpop.f32.mrf.mxu0
        %v1456 = vadd.f32 0.0, %v1455
        %1457 = vmatmul.f32.gmra.mxu0 %v1107
        %v1458 = vpop.f32.mrf.mxu0
        %v1459 = vadd.f32 0.0, %v1458
        %1460 = vmatmul.f32.gmra.mxu0 %v1109
        %v1461 = vpop.f32.mrf.mxu0
        %v1462 = vadd.f32 0.0, %v1461
        %1463 = vmatmul.f32.gmra.mxu0 %v1111
        %v1464 = vpop.f32.mrf.mxu0
        %v1465 = vadd.f32 0.0, %v1464
        %1466 = vmatmul.f32.gmra.mxu0 %v1113
        %v1467 = vpop.f32.mrf.mxu0
        %v1468 = vadd.f32 0.0, %v1467
        %1469 = vmatmul.f32.gmra.mxu0 %v1115
        %v1470 = vpop.f32.mrf.mxu0
        %v1471 = vadd.f32 0.0, %v1470
        %1472 = vmatmul.f32.gmra.mxu0 %v1117
        %v1473 = vpop.f32.mrf.mxu0
        %v1474 = vadd.f32 0.0, %v1473
        %1475 = vmatmul.f32.gmra.mxu0 %v1119
        %v1476 = vpop.f32.mrf.mxu0
        %v1477 = vadd.f32 0.0, %v1476
        %1478 = vmatmul.f32.gmra.mxu0 %v1121
        %v1479 = vpop.f32.mrf.mxu0
        %v1480 = vadd.f32 0.0, %v1479
        %1481 = vmatmul.f32.gmra.mxu0 %v1123
        %v1482 = vpop.f32.mrf.mxu0
        %v1483 = vadd.f32 0.0, %v1482
        %1484 = vmatmul.f32.gmra.mxu0 %v1125
        %v1485 = vpop.f32.mrf.mxu0
        %v1486 = vadd.f32 0.0, %v1485
        %1487 = vmatmul.f32.gmra.mxu0 %v1127
        %v1488 = vpop.f32.mrf.mxu0
        %v1489 = vadd.f32 0.0, %v1488
        %1490 = vmatmul.f32.gmra.mxu0 %v1129
        %v1491 = vpop.f32.mrf.mxu0
        %v1492 = vadd.f32 0.0, %v1491
        %1493 = vmatmul.f32.gmra.mxu0 %v1131
        %v1494 = vpop.f32.mrf.mxu0
        %v1495 = vadd.f32 0.0, %v1494
        %1496 = vmatmul.f32.gmra.mxu0 %v1133
        %v1497 = vpop.f32.mrf.mxu0
        %v1498 = vadd.f32 0.0, %v1497
        %1499 = vmatmul.f32.gmra.mxu0 %v1135
        %v1500 = vpop.f32.mrf.mxu0
        %v1501 = vadd.f32 0.0, %v1500
        %1502 = vmatmul.f32.gmra.mxu0 %v1137
        %v1503 = vpop.f32.mrf.mxu0
        %v1504 = vadd.f32 0.0, %v1503
        %1505 = vmatmul.f32.gmra.mxu0 %v1139
        %v1506 = vpop.f32.mrf.mxu0
        %v1507 = vadd.f32 0.0, %v1506
        %1508 = vmatmul.f32.gmra.mxu0 %v1141
        %v1509 = vpop.f32.mrf.mxu0
        %v1510 = vadd.f32 0.0, %v1509
        %1511 = vmatmul.f32.gmra.mxu0 %v1143
        %v1512 = vpop.f32.mrf.mxu0
        %v1513 = vadd.f32 0.0, %v1512
        %1514 = vmatmul.f32.gmra.mxu0 %v1145
        %v1515 = vpop.f32.mrf.mxu0
        %v1516 = vadd.f32 0.0, %v1515
        %1517 = vmatmul.f32.gmra.mxu0 %v1147
        %v1518 = vpop.f32.mrf.mxu0
        %v1519 = vadd.f32 0.0, %v1518
        %1520 = vmatmul.f32.gmra.mxu0 %v1149
        %v1521 = vpop.f32.mrf.mxu0
        %v1522 = vadd.f32 0.0, %v1521
        %1523 = vmatmul.f32.gmra.mxu0 %v1151
        %v1524 = vpop.f32.mrf.mxu0
        %v1525 = vadd.f32 0.0, %v1524
        %1526 = vmatmul.f32.gmra.mxu0 %v1153
        %v1527 = vpop.f32.mrf.mxu0
        %v1528 = vadd.f32 0.0, %v1527
        %1529 = vmatmul.f32.gmra.mxu0 %v1155
        %v1530 = vpop.f32.mrf.mxu0
        %v1531 = vadd.f32 0.0, %v1530
        %1532 = vdwg.mxu0
        %1533 = vmatpush.msra.mxu0 0.0
        %1534 = vmatpush.msra.mxu0 0.0
        %1535 = vmatpush.msra.mxu0 0.0
        %1536 = vmatpush.msra.mxu0 0.0
        %1537 = vmatpush.msra.mxu0 0.0
        %1538 = vmatpush.msra.mxu0 %v1098
        %1539 = vmatpush.msra.mxu0 %v1096
        %1540 = vmatpush.msra.mxu0 %v1094
        %1541 = vmatpush.msra.mxu0 %v1092
        %1542 = vmatpush.msra.mxu0 %v1090
        %1543 = vmatpush.msra.mxu0 %v1088
        %1544 = vmatpush.msra.mxu0 %v1086
        %1545 = vmatpush.msra.mxu0 %v1084
        %1546 = vmatpush.msra.mxu0 %v1082
        %1547 = vmatpush.msra.mxu0 %v1080
        %1548 = vmatpush.msra.mxu0 %v1078
        %1549 = vmatmul.f32.gmra.mxu0 %v1159
        %v1550 = vpop.f32.mrf.mxu0
        %v1551 = vadd.f32 %v1453, %v1550
        %1552 = vmatmul.f32.gmra.mxu0 %v1162
        %v1553 = vpop.f32.mrf.mxu0
        %v1554 = vadd.f32 %v1456, %v1553
        %1555 = vmatmul.f32.gmra.mxu0 %v1165
        %v1556 = vpop.f32.mrf.mxu0
        %v1557 = vadd.f32 %v1459, %v1556
        %1558 = vmatmul.f32.gmra.mxu0 %v1168
        %v1559 = vpop.f32.mrf.mxu0
        %v1560 = vadd.f32 %v1462, %v1559
        %1561 = vmatmul.f32.gmra.mxu0 %v1171
        %v1562 = vpop.f32.mrf.mxu0
        %v1563 = vadd.f32 %v1465, %v1562
        %1564 = vmatmul.f32.gmra.mxu0 %v1174
        %v1565 = vpop.f32.mrf.mxu0
        %v1566 = vadd.f32 %v1468, %v1565
        %1567 = vmatmul.f32.gmra.mxu0 %v1177
        %v1568 = vpop.f32.mrf.mxu0
        %v1569 = vadd.f32 %v1471, %v1568
        %1570 = vmatmul.f32.gmra.mxu0 %v1180
        %v1571 = vpop.f32.mrf.mxu0
        %v1572 = vadd.f32 %v1474, %v1571
        %1573 = vmatmul.f32.gmra.mxu0 %v1183
        %v1574 = vpop.f32.mrf.mxu0
        %v1575 = vadd.f32 %v1477, %v1574
        %1576 = vmatmul.f32.gmra.mxu0 %v1186
        %v1577 = vpop.f32.mrf.mxu0
        %v1578 = vadd.f32 %v1480, %v1577
        %1579 = vmatmul.f32.gmra.mxu0 %v1189
        %v1580 = vpop.f32.mrf.mxu0
        %v1581 = vadd.f32 %v1483, %v1580
        %1582 = vmatmul.f32.gmra.mxu0 %v1192
        %v1583 = vpop.f32.mrf.mxu0
        %v1584 = vadd.f32 %v1486, %v1583
        %1585 = vmatmul.f32.gmra.mxu0 %v1195
        %v1586 = vpop.f32.mrf.mxu0
        %v1587 = vadd.f32 %v1489, %v1586
        %1588 = vmatmul.f32.gmra.mxu0 %v1198
        %v1589 = vpop.f32.mrf.mxu0
        %v1590 = vadd.f32 %v1492, %v1589
        %1591 = vmatmul.f32.gmra.mxu0 %v1201
        %v1592 = vpop.f32.mrf.mxu0
        %v1593 = vadd.f32 %v1495, %v1592
        %1594 = vmatmul.f32.gmra.mxu0 %v1204
        %v1595 = vpop.f32.mrf.mxu0
        %v1596 = vadd.f32 %v1498, %v1595
        %1597 = vmatmul.f32.gmra.mxu0 %v1207
        %v1598 = vpop.f32.mrf.mxu0
        %v1599 = vadd.f32 %v1501, %v1598
        %1600 = vmatmul.f32.gmra.mxu0 %v1210
        %v1601 = vpop.f32.mrf.mxu0
        %v1602 = vadd.f32 %v1504, %v1601
        %1603 = vmatmul.f32.gmra.mxu0 %v1213
        %v1604 = vpop.f32.mrf.mxu0
        %v1605 = vadd.f32 %v1507, %v1604
        %1606 = vmatmul.f32.gmra.mxu0 %v1216
        %v1607 = vpop.f32.mrf.mxu0
        %v1608 = vadd.f32 %v1510, %v1607
        %1609 = vmatmul.f32.gmra.mxu0 %v1219
        %v1610 = vpop.f32.mrf.mxu0
        %v1611 = vadd.f32 %v1513, %v1610
        %1612 = vmatmul.f32.gmra.mxu0 %v1222
        %v1613 = vpop.f32.mrf.mxu0
        %v1614 = vadd.f32 %v1516, %v1613
        %1615 = vmatmul.f32.gmra.mxu0 %v1225
        %v1616 = vpop.f32.mrf.mxu0
        %v1617 = vadd.f32 %v1519, %v1616
        %1618 = vmatmul.f32.gmra.mxu0 %v1228
        %v1619 = vpop.f32.mrf.mxu0
        %v1620 = vadd.f32 %v1522, %v1619
        %1621 = vmatmul.f32.gmra.mxu0 %v1231
        %v1622 = vpop.f32.mrf.mxu0
        %v1623 = vadd.f32 %v1525, %v1622
        %1624 = vmatmul.f32.gmra.mxu0 %v1234
        %v1625 = vpop.f32.mrf.mxu0
        %v1626 = vadd.f32 %v1528, %v1625
        %1627 = vmatmul.f32.gmra.mxu0 %v1237
        %v1628 = vpop.f32.mrf.mxu0
        %v1629 = vadd.f32 %v1531, %v1628
        %1630 = vdwg.mxu0
        %p1631 = scmp.eq.s32.totalorder %s22, 0
        // Predicated region
        $region49: #{tpu_custom_call.1} parent=47 // pred_check
          %p1632 = pneg %p1631
        $region50: #{tpu_custom_call.1} parent=47 // pred_check_branch
          %1634 = sbr.rel (%p1632) target = $region52
        $region51: #{tpu_custom_call.1} parent=47 // pred_region
          %vm1635 = vcmask 556032
          %v1636 = vsel %vm1635, %v1551, 0.0
          %v1637 = vadd.f32 %v1355, %v1636
          %1638 = vadd.xlane.f32.xlu0 %v1637
          %v1639 = vpop.xlane.xlu0 %1638
          %v1640 = vsel %vm1635, %v1554, 0.0
          %v1641 = vadd.f32 %v1358, %v1640
          %1642 = vadd.xlane.f32.xlu0 %v1641
          %v1643 = vpop.xlane.xlu0 %1642
          %v1644 = vsel %vm1635, %v1557, 0.0
          %v1645 = vadd.f32 %v1361, %v1644
          %1646 = vadd.xlane.f32.xlu0 %v1645
          %v1647 = vpop.xlane.xlu0 %1646
          %v1648 = vsel %vm1635, %v1560, 0.0
          %v1649 = vadd.f32 %v1364, %v1648
          %1650 = vadd.xlane.f32.xlu0 %v1649
          %v1651 = vpop.xlane.xlu0 %1650
          %v1652 = vsel %vm1635, %v1563, 0.0
          %v1653 = vadd.f32 %v1367, %v1652
          %1654 = vadd.xlane.f32.xlu0 %v1653
          %v1655 = vpop.xlane.xlu0 %1654
          %v1656 = vsel %vm1635, %v1566, 0.0
          %v1657 = vadd.f32 %v1370, %v1656
          %1658 = vadd.xlane.f32.xlu0 %v1657
          %v1659 = vpop.xlane.xlu0 %1658
          %v1660 = vsel %vm1635, %v1569, 0.0
          %v1661 = vadd.f32 %v1373, %v1660
          %1662 = vadd.xlane.f32.xlu0 %v1661
          %v1663 = vpop.xlane.xlu0 %1662
          %v1664 = vsel %vm1635, %v1572, 0.0
          %v1665 = vadd.f32 %v1376, %v1664
          %1666 = vadd.xlane.f32.xlu0 %v1665
          %v1667 = vpop.xlane.xlu0 %1666
          %v1668 = vsel %vm1635, %v1575, 0.0
          %v1669 = vadd.f32 %v1379, %v1668
          %1670 = vadd.xlane.f32.xlu0 %v1669
          %v1671 = vpop.xlane.xlu0 %1670
          %v1672 = vsel %vm1635, %v1578, 0.0
          %v1673 = vadd.f32 %v1382, %v1672
          %1674 = vadd.xlane.f32.xlu0 %v1673
          %v1675 = vpop.xlane.xlu0 %1674
          %v1676 = vsel %vm1635, %v1581, 0.0
          %v1677 = vadd.f32 %v1385, %v1676
          %1678 = vadd.xlane.f32.xlu0 %v1677
          %v1679 = vpop.xlane.xlu0 %1678
          %v1680 = vsel %vm1635, %v1584, 0.0
          %v1681 = vadd.f32 %v1388, %v1680
          %1682 = vadd.xlane.f32.xlu0 %v1681
          %v1683 = vpop.xlane.xlu0 %1682
          %v1684 = vsel %vm1635, %v1587, 0.0
          %v1685 = vadd.f32 %v1391, %v1684
          %1686 = vadd.xlane.f32.xlu0 %v1685
          %v1687 = vpop.xlane.xlu0 %1686
          %v1688 = vsel %vm1635, %v1590, 0.0
          %v1689 = vadd.f32 %v1394, %v1688
          %1690 = vadd.xlane.f32.xlu0 %v1689
          %v1691 = vpop.xlane.xlu0 %1690
          %v1692 = vsel %vm1635, %v1593, 0.0
          %v1693 = vadd.f32 %v1397, %v1692
          %1694 = vadd.xlane.f32.xlu0 %v1693
          %v1695 = vpop.xlane.xlu0 %1694
          %v1696 = vsel %vm1635, %v1596, 0.0
          %v1697 = vadd.f32 %v1400, %v1696
          %1698 = vadd.xlane.f32.xlu0 %v1697
          %v1699 = vpop.xlane.xlu0 %1698
          %v1700 = vsel %vm1635, %v1599, 0.0
          %v1701 = vadd.f32 %v1403, %v1700
          %1702 = vadd.xlane.f32.xlu0 %v1701
          %v1703 = vpop.xlane.xlu0 %1702
          %v1704 = vsel %vm1635, %v1602, 0.0
          %v1705 = vadd.f32 %v1406, %v1704
          %1706 = vadd.xlane.f32.xlu0 %v1705
          %v1707 = vpop.xlane.xlu0 %1706
          %v1708 = vsel %vm1635, %v1605, 0.0
          %v1709 = vadd.f32 %v1409, %v1708
          %1710 = vadd.xlane.f32.xlu0 %v1709
          %v1711 = vpop.xlane.xlu0 %1710
          %v1712 = vsel %vm1635, %v1608, 0.0
          %v1713 = vadd.f32 %v1412, %v1712
          %1714 = vadd.xlane.f32.xlu0 %v1713
          %v1715 = vpop.xlane.xlu0 %1714
          %v1716 = vsel %vm1635, %v1611, 0.0
          %v1717 = vadd.f32 %v1415, %v1716
          %1718 = vadd.xlane.f32.xlu0 %v1717
          %v1719 = vpop.xlane.xlu0 %1718
          %v1720 = vsel %vm1635, %v1614, 0.0
          %v1721 = vadd.f32 %v1418, %v1720
          %1722 = vadd.xlane.f32.xlu0 %v1721
          %v1723 = vpop.xlane.xlu0 %1722
          %v1724 = vsel %vm1635, %v1617, 0.0
          %v1725 = vadd.f32 %v1421, %v1724
          %1726 = vadd.xlane.f32.xlu0 %v1725
          %v1727 = vpop.xlane.xlu0 %1726
          %v1728 = vsel %vm1635, %v1620, 0.0
          %v1729 = vadd.f32 %v1424, %v1728
          %1730 = vadd.xlane.f32.xlu0 %v1729
          %v1731 = vpop.xlane.xlu0 %1730
          %v1732 = vsel %vm1635, %v1623, 0.0
          %v1733 = vadd.f32 %v1427, %v1732
          %1734 = vadd.xlane.f32.xlu0 %v1733
          %v1735 = vpop.xlane.xlu0 %1734
          %v1736 = vsel %vm1635, %v1626, 0.0
          %v1737 = vadd.f32 %v1430, %v1736
          %1738 = vadd.xlane.f32.xlu0 %v1737
          %v1739 = vpop.xlane.xlu0 %1738
          %v1740 = vsel %vm1635, %v1629, 0.0
          %v1741 = vadd.f32 %v1433, %v1740
          %1742 = vadd.xlane.f32.xlu0 %v1741
          %v1743 = vpop.xlane.xlu0 %1742
          %v1744 = vrcp.pop 196.0
          %v1745 = vmul.f32 196.0, %v1744
          %v1746 = vsub.f32 1.0, %v1745
          %v1747 = vmul.f32 %v1744, %v1746
          %v1748 = vadd.f32 %v1744, %v1747
          %vm1749 = vweird.f32 %v1744
          %v1750 = vsel %vm1749, %v1744, %v1748
          %v1751 = vmul.f32 %v1639, %v1750
          %v1752 = vmul.f32 %v1643, %v1750
          %v1753 = vmul.f32 %v1647, %v1750
          %v1754 = vmul.f32 %v1651, %v1750
          %v1755 = vmul.f32 %v1655, %v1750
          %v1756 = vmul.f32 %v1659, %v1750
          %v1757 = vmul.f32 %v1663, %v1750
          %v1758 = vmul.f32 %v1667, %v1750
          %v1759 = vmul.f32 %v1671, %v1750
          %v1760 = vmul.f32 %v1675, %v1750
          %v1761 = vmul.f32 %v1679, %v1750
          %v1762 = vmul.f32 %v1683, %v1750
          %v1763 = vmul.f32 %v1687, %v1750
          %v1764 = vmul.f32 %v1691, %v1750
          %v1765 = vmul.f32 %v1695, %v1750
          %v1766 = vmul.f32 %v1699, %v1750
          %v1767 = vmul.f32 %v1703, %v1750
          %v1768 = vmul.f32 %v1707, %v1750
          %v1769 = vmul.f32 %v1711, %v1750
          %v1770 = vmul.f32 %v1715, %v1750
          %v1771 = vmul.f32 %v1719, %v1750
          %v1772 = vmul.f32 %v1723, %v1750
          %v1773 = vmul.f32 %v1727, %v1750
          %v1774 = vmul.f32 %v1731, %v1750
          %v1775 = vmul.f32 %v1735, %v1750
          %v1776 = vmul.f32 %v1739, %v1750
          %v1777 = vmul.f32 %v1743, %v1750
          %vm1778 = vcmask 7168
          %1779 = vst.msk [vmem:[#allocation2] sm:$0xff] %vm1778, %v1751
          %1780 = vst.msk [vmem:[#allocation2 + $0x8] sm:$0xff] %vm1778, %v1752
          %1781 = vst.msk [vmem:[#allocation2 + $0x10] sm:$0xff] %vm1778, %v1753
          %1782 = vst.msk [vmem:[#allocation2 + $0x18] sm:$0xff] %vm1778, %v1754
          %1783 = vst.msk [vmem:[#allocation2 + $0x20] sm:$0xff] %vm1778, %v1755
          %1784 = vst.msk [vmem:[#allocation2 + $0x28] sm:$0xff] %vm1778, %v1756
          %1785 = vst.msk [vmem:[#allocation2 + $0x30] sm:$0xff] %vm1778, %v1757
          %1786 = vst.msk [vmem:[#allocation2 + $0x38] sm:$0xff] %vm1778, %v1758
          %1787 = vst.msk [vmem:[#allocation2 + $0x40] sm:$0xff] %vm1778, %v1759
          %1788 = vst.msk [vmem:[#allocation2 + $0x48] sm:$0xff] %vm1778, %v1760
          %1789 = vst.msk [vmem:[#allocation2 + $0x50] sm:$0xff] %vm1778, %v1761
          %1790 = vst.msk [vmem:[#allocation2 + $0x58] sm:$0xff] %vm1778, %v1762
          %1791 = vst.msk [vmem:[#allocation2 + $0x60] sm:$0xff] %vm1778, %v1763
          %1792 = vst.msk [vmem:[#allocation2 + $0x68] sm:$0xff] %vm1778, %v1764
          %1793 = vst.msk [vmem:[#allocation2 + $0x70] sm:$0xff] %vm1778, %v1765
          %1794 = vst.msk [vmem:[#allocation2 + $0x78] sm:$0xff] %vm1778, %v1766
          %1795 = vst.msk [vmem:[#allocation2 + $0x80] sm:$0xff] %vm1778, %v1767
          %1796 = vst.msk [vmem:[#allocation2 + $0x88] sm:$0xff] %vm1778, %v1768
          %1797 = vst.msk [vmem:[#allocation2 + $0x90] sm:$0xff] %vm1778, %v1769
          %1798 = vst.msk [vmem:[#allocation2 + $0x98] sm:$0xff] %vm1778, %v1770
          %1799 = vst.msk [vmem:[#allocation2 + $0xa0] sm:$0xff] %vm1778, %v1771
          %1800 = vst.msk [vmem:[#allocation2 + $0xa8] sm:$0xff] %vm1778, %v1772
          %1801 = vst.msk [vmem:[#allocation2 + $0xb0] sm:$0xff] %vm1778, %v1773
          %1802 = vst.msk [vmem:[#allocation2 + $0xb8] sm:$0xff] %vm1778, %v1774
          %1803 = vst.msk [vmem:[#allocation2 + $0xc0] sm:$0xff] %vm1778, %v1775
          %1804 = vst.msk [vmem:[#allocation2 + $0xc8] sm:$0xff] %vm1778, %v1776
          %1805 = vst.msk [vmem:[#allocation2 + $0xd0] sm:$0xff] %vm1778, %v1777
          %1806 = vst.msk [vmem:[#allocation3] sm:$0xff] %vm1778, 0.0
          %1807 = vst.msk [vmem:[#allocation3 + $0x8] sm:$0xff] %vm1778, 0.0
          %1808 = vst.msk [vmem:[#allocation3 + $0x10] sm:$0xff] %vm1778, 0.0
          %1809 = vst.msk [vmem:[#allocation3 + $0x18] sm:$0xff] %vm1778, 0.0
          %1810 = vst.msk [vmem:[#allocation3 + $0x20] sm:$0xff] %vm1778, 0.0
          %1811 = vst.msk [vmem:[#allocation3 + $0x28] sm:$0xff] %vm1778, 0.0
          %1812 = vst.msk [vmem:[#allocation3 + $0x30] sm:$0xff] %vm1778, 0.0
          %1813 = vst.msk [vmem:[#allocation3 + $0x38] sm:$0xff] %vm1778, 0.0
          %1814 = vst.msk [vmem:[#allocation3 + $0x40] sm:$0xff] %vm1778, 0.0
          %1815 = vst.msk [vmem:[#allocation3 + $0x48] sm:$0xff] %vm1778, 0.0
          %1816 = vst.msk [vmem:[#allocation3 + $0x50] sm:$0xff] %vm1778, 0.0
          %1817 = vst.msk [vmem:[#allocation3 + $0x58] sm:$0xff] %vm1778, 0.0
          %1818 = vst.msk [vmem:[#allocation3 + $0x60] sm:$0xff] %vm1778, 0.0
          %1819 = vst.msk [vmem:[#allocation3 + $0x68] sm:$0xff] %vm1778, 0.0
          %1820 = vst.msk [vmem:[#allocation3 + $0x70] sm:$0xff] %vm1778, 0.0
          %1821 = vst.msk [vmem:[#allocation3 + $0x78] sm:$0xff] %vm1778, 0.0
          %1822 = vst.msk [vmem:[#allocation3 + $0x80] sm:$0xff] %vm1778, 0.0
          %1823 = vst.msk [vmem:[#allocation3 + $0x88] sm:$0xff] %vm1778, 0.0
          %1824 = vst.msk [vmem:[#allocation3 + $0x90] sm:$0xff] %vm1778, 0.0
          %1825 = vst.msk [vmem:[#allocation3 + $0x98] sm:$0xff] %vm1778, 0.0
          %1826 = vst.msk [vmem:[#allocation3 + $0xa0] sm:$0xff] %vm1778, 0.0
          %1827 = vst.msk [vmem:[#allocation3 + $0xa8] sm:$0xff] %vm1778, 0.0
          %1828 = vst.msk [vmem:[#allocation3 + $0xb0] sm:$0xff] %vm1778, 0.0
          %1829 = vst.msk [vmem:[#allocation3 + $0xb8] sm:$0xff] %vm1778, 0.0
          %1830 = vst.msk [vmem:[#allocation3 + $0xc0] sm:$0xff] %vm1778, 0.0
          %1831 = vst.msk [vmem:[#allocation3 + $0xc8] sm:$0xff] %vm1778, 0.0
          %1832 = vst.msk [vmem:[#allocation3 + $0xd0] sm:$0xff] %vm1778, 0.0
          %1833 = vst.msk [vmem:[#allocation4] sm:$0xff] %vm1778, 0.0
          %1834 = vst.msk [vmem:[#allocation4 + $0x8] sm:$0xff] %vm1778, 0.0
          %1835 = vst.msk [vmem:[#allocation4 + $0x10] sm:$0xff] %vm1778, 0.0
          %1836 = vst.msk [vmem:[#allocation4 + $0x18] sm:$0xff] %vm1778, 0.0
          %1837 = vst.msk [vmem:[#allocation4 + $0x20] sm:$0xff] %vm1778, 0.0
          %1838 = vst.msk [vmem:[#allocation4 + $0x28] sm:$0xff] %vm1778, 0.0
          %1839 = vst.msk [vmem:[#allocation4 + $0x30] sm:$0xff] %vm1778, 0.0
          %1840 = vst.msk [vmem:[#allocation4 + $0x38] sm:$0xff] %vm1778, 0.0
          %1841 = vst.msk [vmem:[#allocation4 + $0x40] sm:$0xff] %vm1778, 0.0
          %1842 = vst.msk [vmem:[#allocation4 + $0x48] sm:$0xff] %vm1778, 0.0
          %1843 = vst.msk [vmem:[#allocation4 + $0x50] sm:$0xff] %vm1778, 0.0
          %1844 = vst.msk [vmem:[#allocation4 + $0x58] sm:$0xff] %vm1778, 0.0
          %1845 = vst.msk [vmem:[#allocation4 + $0x60] sm:$0xff] %vm1778, 0.0
          %1846 = vst.msk [vmem:[#allocation4 + $0x68] sm:$0xff] %vm1778, 0.0
          %1847 = vst.msk [vmem:[#allocation4 + $0x70] sm:$0xff] %vm1778, 0.0
          %1848 = vst.msk [vmem:[#allocation4 + $0x78] sm:$0xff] %vm1778, 0.0
          %1849 = vst.msk [vmem:[#allocation4 + $0x80] sm:$0xff] %vm1778, 0.0
          %1850 = vst.msk [vmem:[#allocation4 + $0x88] sm:$0xff] %vm1778, 0.0
          %1851 = vst.msk [vmem:[#allocation4 + $0x90] sm:$0xff] %vm1778, 0.0
          %1852 = vst.msk [vmem:[#allocation4 + $0x98] sm:$0xff] %vm1778, 0.0
          %1853 = vst.msk [vmem:[#allocation4 + $0xa0] sm:$0xff] %vm1778, 0.0
          %1854 = vst.msk [vmem:[#allocation4 + $0xa8] sm:$0xff] %vm1778, 0.0
          %1855 = vst.msk [vmem:[#allocation4 + $0xb0] sm:$0xff] %vm1778, 0.0
          %1856 = vst.msk [vmem:[#allocation4 + $0xb8] sm:$0xff] %vm1778, 0.0
          %1857 = vst.msk [vmem:[#allocation4 + $0xc0] sm:$0xff] %vm1778, 0.0
          %1858 = vst.msk [vmem:[#allocation4 + $0xc8] sm:$0xff] %vm1778, 0.0
          %1859 = vst.msk [vmem:[#allocation4 + $0xd0] sm:$0xff] %vm1778, 0.0
          %1860 = vst [vmem:[%s314] sm:$0xff] 0.0
          %1861 = vst.msk [vmem:[%s314 + $0x8] sm:$0xff] %vm1635, 0.0
          %1862 = vst [vmem:[%s314 + $0x10] sm:$0xff] 0.0
          %1863 = vst.msk [vmem:[%s314 + $0x18] sm:$0xff] %vm1635, 0.0
          %1864 = vst [vmem:[%s314 + $0x20] sm:$0xff] 0.0
          %1865 = vst.msk [vmem:[%s314 + $0x28] sm:$0xff] %vm1635, 0.0
          %1866 = vst [vmem:[%s314 + $0x30] sm:$0xff] 0.0
          %1867 = vst.msk [vmem:[%s314 + $0x38] sm:$0xff] %vm1635, 0.0
          %1868 = vst [vmem:[%s314 + $0x40] sm:$0xff] 0.0
          %1869 = vst.msk [vmem:[%s314 + $0x48] sm:$0xff] %vm1635, 0.0
          %1870 = vst [vmem:[%s314 + $0x50] sm:$0xff] 0.0
          %1871 = vst.msk [vmem:[%s314 + $0x58] sm:$0xff] %vm1635, 0.0
          %1872 = vst [vmem:[%s314 + $0x60] sm:$0xff] 0.0
          %1873 = vst.msk [vmem:[%s314 + $0x68] sm:$0xff] %vm1635, 0.0
          %1874 = vst [vmem:[%s314 + $0x70] sm:$0xff] 0.0
          %1875 = vst.msk [vmem:[%s314 + $0x78] sm:$0xff] %vm1635, 0.0
          %1876 = vst [vmem:[%s314 + $0x80] sm:$0xff] 0.0
          %1877 = vst.msk [vmem:[%s314 + $0x88] sm:$0xff] %vm1635, 0.0
          %1878 = vst [vmem:[%s314 + $0x90] sm:$0xff] 0.0
          %1879 = vst.msk [vmem:[%s314 + $0x98] sm:$0xff] %vm1635, 0.0
          %1880 = vst [vmem:[%s314 + $0xa0] sm:$0xff] 0.0
          %1881 = vst.msk [vmem:[%s314 + $0xa8] sm:$0xff] %vm1635, 0.0
          %1882 = vst [vmem:[%s314 + $0xb0] sm:$0xff] 0.0
          %1883 = vst.msk [vmem:[%s314 + $0xb8] sm:$0xff] %vm1635, 0.0
          %1884 = vst [vmem:[%s314 + $0xc0] sm:$0xff] 0.0
          %1885 = vst.msk [vmem:[%s314 + $0xc8] sm:$0xff] %vm1635, 0.0
          %1886 = vst [vmem:[%s314 + $0xd0] sm:$0xff] 0.0
          %1887 = vst.msk [vmem:[%s314 + $0xd8] sm:$0xff] %vm1635, 0.0
          %1888 = vst [vmem:[%s314 + $0xe0] sm:$0xff] 0.0
          %1889 = vst.msk [vmem:[%s314 + $0xe8] sm:$0xff] %vm1635, 0.0
          %1890 = vst [vmem:[%s314 + $0xf0] sm:$0xff] 0.0
          %1891 = vst.msk [vmem:[%s314 + $0xf8] sm:$0xff] %vm1635, 0.0
          %1892 = vst [vmem:[%s314 + $0x100] sm:$0xff] 0.0
          %1893 = vst.msk [vmem:[%s314 + $0x108] sm:$0xff] %vm1635, 0.0
          %1894 = vst [vmem:[%s314 + $0x110] sm:$0xff] 0.0
          %1895 = vst.msk [vmem:[%s314 + $0x118] sm:$0xff] %vm1635, 0.0
          %1896 = vst [vmem:[%s314 + $0x120] sm:$0xff] 0.0
          %1897 = vst.msk [vmem:[%s314 + $0x128] sm:$0xff] %vm1635, 0.0
          %1898 = vst [vmem:[%s314 + $0x130] sm:$0xff] 0.0
          %1899 = vst.msk [vmem:[%s314 + $0x138] sm:$0xff] %vm1635, 0.0
          %1900 = vst [vmem:[%s314 + $0x140] sm:$0xff] 0.0
          %1901 = vst.msk [vmem:[%s314 + $0x148] sm:$0xff] %vm1635, 0.0
          %1902 = vst [vmem:[%s314 + $0x150] sm:$0xff] 0.0
          %1903 = vst.msk [vmem:[%s314 + $0x158] sm:$0xff] %vm1635, 0.0
          %1904 = vst [vmem:[%s314 + $0x160] sm:$0xff] 0.0
          %1905 = vst.msk [vmem:[%s314 + $0x168] sm:$0xff] %vm1635, 0.0
          %1906 = vst [vmem:[%s314 + $0x170] sm:$0xff] 0.0
          %1907 = vst.msk [vmem:[%s314 + $0x178] sm:$0xff] %vm1635, 0.0
          %1908 = vst [vmem:[%s314 + $0x180] sm:$0xff] 0.0
          %1909 = vst.msk [vmem:[%s314 + $0x188] sm:$0xff] %vm1635, 0.0
          %1910 = vst [vmem:[%s314 + $0x190] sm:$0xff] 0.0
          %1911 = vst.msk [vmem:[%s314 + $0x198] sm:$0xff] %vm1635, 0.0
          %1912 = vst [vmem:[%s314 + $0x1a0] sm:$0xff] 0.0
          %1913 = vst.msk [vmem:[%s314 + $0x1a8] sm:$0xff] %vm1635, 0.0
        $region52: #{tpu_custom_call.1} parent=47 // pred_fallthru
          _
        %v1914 = vld [vmem:[#allocation2] sm:$0xff]
        %v1915 = vld [vmem:[#allocation2 + $0x8] sm:$0xff]
        %v1916 = vld [vmem:[#allocation2 + $0x10] sm:$0xff]
        %v1917 = vld [vmem:[#allocation2 + $0x18] sm:$0xff]
        %v1918 = vld [vmem:[#allocation2 + $0x20] sm:$0xff]
        %v1919 = vld [vmem:[#allocation2 + $0x28] sm:$0xff]
        %v1920 = vld [vmem:[#allocation2 + $0x30] sm:$0xff]
        %v1921 = vld [vmem:[#allocation2 + $0x38] sm:$0xff]
        %v1922 = vld [vmem:[#allocation2 + $0x40] sm:$0xff]
        %v1923 = vld [vmem:[#allocation2 + $0x48] sm:$0xff]
        %v1924 = vld [vmem:[#allocation2 + $0x50] sm:$0xff]
        %v1925 = vld [vmem:[#allocation2 + $0x58] sm:$0xff]
        %v1926 = vld [vmem:[#allocation2 + $0x60] sm:$0xff]
        %v1927 = vld [vmem:[#allocation2 + $0x68] sm:$0xff]
        %v1928 = vld [vmem:[#allocation2 + $0x70] sm:$0xff]
        %v1929 = vld [vmem:[#allocation2 + $0x78] sm:$0xff]
        %v1930 = vld [vmem:[#allocation2 + $0x80] sm:$0xff]
        %v1931 = vld [vmem:[#allocation2 + $0x88] sm:$0xff]
        %v1932 = vld [vmem:[#allocation2 + $0x90] sm:$0xff]
        %v1933 = vld [vmem:[#allocation2 + $0x98] sm:$0xff]
        %v1934 = vld [vmem:[#allocation2 + $0xa0] sm:$0xff]
        %v1935 = vld [vmem:[#allocation2 + $0xa8] sm:$0xff]
        %v1936 = vld [vmem:[#allocation2 + $0xb0] sm:$0xff]
        %v1937 = vld [vmem:[#allocation2 + $0xb8] sm:$0xff]
        %v1938 = vld [vmem:[#allocation2 + $0xc0] sm:$0xff]
        %v1939 = vld [vmem:[#allocation2 + $0xc8] sm:$0xff]
        %v1940 = vld [vmem:[#allocation2 + $0xd0] sm:$0xff]
        %1942 = vset.pattern.permute.xlu0 0
        %1943 = vperm.xlu0 %1942, %v1914
        %v1944 = vpop.permute.xlu0 %1943
        %1947 = vset.pattern.permute.xlu0 0
        %1948 = vperm.xlu0 %1947, %v1915
        %v1949 = vpop.permute.xlu0 %1948
        %1952 = vset.pattern.permute.xlu0 0
        %1953 = vperm.xlu0 %1952, %v1916
        %v1954 = vpop.permute.xlu0 %1953
        %1957 = vset.pattern.permute.xlu0 0
        %1958 = vperm.xlu0 %1957, %v1917
        %v1959 = vpop.permute.xlu0 %1958
        %1962 = vset.pattern.permute.xlu0 0
        %1963 = vperm.xlu0 %1962, %v1918
        %v1964 = vpop.permute.xlu0 %1963
        %1967 = vset.pattern.permute.xlu0 0
        %1968 = vperm.xlu0 %1967, %v1919
        %v1969 = vpop.permute.xlu0 %1968
        %1972 = vset.pattern.permute.xlu0 0
        %1973 = vperm.xlu0 %1972, %v1920
        %v1974 = vpop.permute.xlu0 %1973
        %1977 = vset.pattern.permute.xlu0 0
        %1978 = vperm.xlu0 %1977, %v1921
        %v1979 = vpop.permute.xlu0 %1978
        %1982 = vset.pattern.permute.xlu0 0
        %1983 = vperm.xlu0 %1982, %v1922
        %v1984 = vpop.permute.xlu0 %1983
        %1987 = vset.pattern.permute.xlu0 0
        %1988 = vperm.xlu0 %1987, %v1923
        %v1989 = vpop.permute.xlu0 %1988
        %1992 = vset.pattern.permute.xlu0 0
        %1993 = vperm.xlu0 %1992, %v1924
        %v1994 = vpop.permute.xlu0 %1993
        %1997 = vset.pattern.permute.xlu0 0
        %1998 = vperm.xlu0 %1997, %v1925
        %v1999 = vpop.permute.xlu0 %1998
        %2002 = vset.pattern.permute.xlu0 0
        %2003 = vperm.xlu0 %2002, %v1926
        %v2004 = vpop.permute.xlu0 %2003
        %2007 = vset.pattern.permute.xlu0 0
        %2008 = vperm.xlu0 %2007, %v1927
        %v2009 = vpop.permute.xlu0 %2008
        %2012 = vset.pattern.permute.xlu0 0
        %2013 = vperm.xlu0 %2012, %v1928
        %v2014 = vpop.permute.xlu0 %2013
        %2017 = vset.pattern.permute.xlu0 0
        %2018 = vperm.xlu0 %2017, %v1929
        %v2019 = vpop.permute.xlu0 %2018
        %2022 = vset.pattern.permute.xlu0 0
        %2023 = vperm.xlu0 %2022, %v1930
        %v2024 = vpop.permute.xlu0 %2023
        %2027 = vset.pattern.permute.xlu0 0
        %2028 = vperm.xlu0 %2027, %v1931
        %v2029 = vpop.permute.xlu0 %2028
        %2032 = vset.pattern.permute.xlu0 0
        %2033 = vperm.xlu0 %2032, %v1932
        %v2034 = vpop.permute.xlu0 %2033
        %2037 = vset.pattern.permute.xlu0 0
        %2038 = vperm.xlu0 %2037, %v1933
        %v2039 = vpop.permute.xlu0 %2038
        %2042 = vset.pattern.permute.xlu0 0
        %2043 = vperm.xlu0 %2042, %v1934
        %v2044 = vpop.permute.xlu0 %2043
        %2047 = vset.pattern.permute.xlu0 0
        %2048 = vperm.xlu0 %2047, %v1935
        %v2049 = vpop.permute.xlu0 %2048
        %2052 = vset.pattern.permute.xlu0 0
        %2053 = vperm.xlu0 %2052, %v1936
        %v2054 = vpop.permute.xlu0 %2053
        %2057 = vset.pattern.permute.xlu0 0
        %2058 = vperm.xlu0 %2057, %v1937
        %v2059 = vpop.permute.xlu0 %2058
        %2062 = vset.pattern.permute.xlu0 0
        %2063 = vperm.xlu0 %2062, %v1938
        %v2064 = vpop.permute.xlu0 %2063
        %2067 = vset.pattern.permute.xlu0 0
        %2068 = vperm.xlu0 %2067, %v1939
        %v2069 = vpop.permute.xlu0 %2068
        %2072 = vset.pattern.permute.xlu0 0
        %2073 = vperm.xlu0 %2072, %v1940
        %v2074 = vpop.permute.xlu0 %2073
        %v2076 = vsub.f32 %v1355, %v1944
        %v2077 = vsub.f32 %v1551, %v1944
        %v2078 = vsub.f32 %v1358, %v1949
        %v2079 = vsub.f32 %v1554, %v1949
        %v2080 = vsub.f32 %v1361, %v1954
        %v2081 = vsub.f32 %v1557, %v1954
        %v2082 = vsub.f32 %v1364, %v1959
        %v2083 = vsub.f32 %v1560, %v1959
        %v2084 = vsub.f32 %v1367, %v1964
        %v2085 = vsub.f32 %v1563, %v1964
        %v2086 = vsub.f32 %v1370, %v1969
        %v2087 = vsub.f32 %v1566, %v1969
        %v2088 = vsub.f32 %v1373, %v1974
        %v2089 = vsub.f32 %v1569, %v1974
        %v2090 = vsub.f32 %v1376, %v1979
        %v2091 = vsub.f32 %v1572, %v1979
        %v2092 = vsub.f32 %v1379, %v1984
        %v2093 = vsub.f32 %v1575, %v1984
        %v2094 = vsub.f32 %v1382, %v1989
        %v2095 = vsub.f32 %v1578, %v1989
        %v2096 = vsub.f32 %v1385, %v1994
        %v2097 = vsub.f32 %v1581, %v1994
        %v2098 = vsub.f32 %v1388, %v1999
        %v2099 = vsub.f32 %v1584, %v1999
        %v2100 = vsub.f32 %v1391, %v2004
        %v2101 = vsub.f32 %v1587, %v2004
        %v2102 = vsub.f32 %v1394, %v2009
        %v2103 = vsub.f32 %v1590, %v2009
        %v2104 = vsub.f32 %v1397, %v2014
        %v2105 = vsub.f32 %v1593, %v2014
        %v2106 = vsub.f32 %v1400, %v2019
        %v2107 = vsub.f32 %v1596, %v2019
        %v2108 = vsub.f32 %v1403, %v2024
        %v2109 = vsub.f32 %v1599, %v2024
        %v2110 = vsub.f32 %v1406, %v2029
        %v2111 = vsub.f32 %v1602, %v2029
        %v2112 = vsub.f32 %v1409, %v2034
        %v2113 = vsub.f32 %v1605, %v2034
        %v2114 = vsub.f32 %v1412, %v2039
        %v2115 = vsub.f32 %v1608, %v2039
        %v2116 = vsub.f32 %v1415, %v2044
        %v2117 = vsub.f32 %v1611, %v2044
        %v2118 = vsub.f32 %v1418, %v2049
        %v2119 = vsub.f32 %v1614, %v2049
        %v2120 = vsub.f32 %v1421, %v2054
        %v2121 = vsub.f32 %v1617, %v2054
        %v2122 = vsub.f32 %v1424, %v2059
        %v2123 = vsub.f32 %v1620, %v2059
        %v2124 = vsub.f32 %v1427, %v2064
        %v2125 = vsub.f32 %v1623, %v2064
        %v2126 = vsub.f32 %v1430, %v2069
        %v2127 = vsub.f32 %v1626, %v2069
        %v2128 = vsub.f32 %v1433, %v2074
        %v2129 = vsub.f32 %v1629, %v2074
        %v2130 = vld [vmem:[#allocation3] sm:$0xff]
        %v2131 = vld [vmem:[#allocation3 + $0x8] sm:$0xff]
        %v2132 = vld [vmem:[#allocation3 + $0x10] sm:$0xff]
        %v2133 = vld [vmem:[#allocation3 + $0x18] sm:$0xff]
        %v2134 = vld [vmem:[#allocation3 + $0x20] sm:$0xff]
        %v2135 = vld [vmem:[#allocation3 + $0x28] sm:$0xff]
        %v2136 = vld [vmem:[#allocation3 + $0x30] sm:$0xff]
        %v2137 = vld [vmem:[#allocation3 + $0x38] sm:$0xff]
        %v2138 = vld [vmem:[#allocation3 + $0x40] sm:$0xff]
        %v2139 = vld [vmem:[#allocation3 + $0x48] sm:$0xff]
        %v2140 = vld [vmem:[#allocation3 + $0x50] sm:$0xff]
        %v2141 = vld [vmem:[#allocation3 + $0x58] sm:$0xff]
        %v2142 = vld [vmem:[#allocation3 + $0x60] sm:$0xff]
        %v2143 = vld [vmem:[#allocation3 + $0x68] sm:$0xff]
        %v2144 = vld [vmem:[#allocation3 + $0x70] sm:$0xff]
        %v2145 = vld [vmem:[#allocation3 + $0x78] sm:$0xff]
        %v2146 = vld [vmem:[#allocation3 + $0x80] sm:$0xff]
        %v2147 = vld [vmem:[#allocation3 + $0x88] sm:$0xff]
        %v2148 = vld [vmem:[#allocation3 + $0x90] sm:$0xff]
        %v2149 = vld [vmem:[#allocation3 + $0x98] sm:$0xff]
        %v2150 = vld [vmem:[#allocation3 + $0xa0] sm:$0xff]
        %v2151 = vld [vmem:[#allocation3 + $0xa8] sm:$0xff]
        %v2152 = vld [vmem:[#allocation3 + $0xb0] sm:$0xff]
        %v2153 = vld [vmem:[#allocation3 + $0xb8] sm:$0xff]
        %v2154 = vld [vmem:[#allocation3 + $0xc0] sm:$0xff]
        %v2155 = vld [vmem:[#allocation3 + $0xc8] sm:$0xff]
        %v2156 = vld [vmem:[#allocation3 + $0xd0] sm:$0xff]
        %vm2157 = vcmask 556032
        %v2158 = vsel %vm2157, %v2077, 0.0
        %v2159 = vadd.f32 %v2076, %v2158
        %2160 = vadd.xlane.f32.xlu0 %v2159
        %v2161 = vpop.xlane.xlu0 %2160
        %v2162 = vsel %vm2157, %v2079, 0.0
        %v2163 = vadd.f32 %v2078, %v2162
        %2164 = vadd.xlane.f32.xlu0 %v2163
        %v2165 = vpop.xlane.xlu0 %2164
        %v2166 = vsel %vm2157, %v2081, 0.0
        %v2167 = vadd.f32 %v2080, %v2166
        %2168 = vadd.xlane.f32.xlu0 %v2167
        %v2169 = vpop.xlane.xlu0 %2168
        %v2170 = vsel %vm2157, %v2083, 0.0
        %v2171 = vadd.f32 %v2082, %v2170
        %2172 = vadd.xlane.f32.xlu0 %v2171
        %v2173 = vpop.xlane.xlu0 %2172
        %v2174 = vsel %vm2157, %v2085, 0.0
        %v2175 = vadd.f32 %v2084, %v2174
        %2176 = vadd.xlane.f32.xlu0 %v2175
        %v2177 = vpop.xlane.xlu0 %2176
        %v2178 = vsel %vm2157, %v2087, 0.0
        %v2179 = vadd.f32 %v2086, %v2178
        %2180 = vadd.xlane.f32.xlu0 %v2179
        %v2181 = vpop.xlane.xlu0 %2180
        %v2182 = vsel %vm2157, %v2089, 0.0
        %v2183 = vadd.f32 %v2088, %v2182
        %2184 = vadd.xlane.f32.xlu0 %v2183
        %v2185 = vpop.xlane.xlu0 %2184
        %v2186 = vsel %vm2157, %v2091, 0.0
        %v2187 = vadd.f32 %v2090, %v2186
        %2188 = vadd.xlane.f32.xlu0 %v2187
        %v2189 = vpop.xlane.xlu0 %2188
        %v2190 = vsel %vm2157, %v2093, 0.0
        %v2191 = vadd.f32 %v2092, %v2190
        %2192 = vadd.xlane.f32.xlu0 %v2191
        %v2193 = vpop.xlane.xlu0 %2192
        %v2194 = vsel %vm2157, %v2095, 0.0
        %v2195 = vadd.f32 %v2094, %v2194
        %2196 = vadd.xlane.f32.xlu0 %v2195
        %v2197 = vpop.xlane.xlu0 %2196
        %v2198 = vsel %vm2157, %v2097, 0.0
        %v2199 = vadd.f32 %v2096, %v2198
        %2200 = vadd.xlane.f32.xlu0 %v2199
        %v2201 = vpop.xlane.xlu0 %2200
        %v2202 = vsel %vm2157, %v2099, 0.0
        %v2203 = vadd.f32 %v2098, %v2202
        %2204 = vadd.xlane.f32.xlu0 %v2203
        %v2205 = vpop.xlane.xlu0 %2204
        %v2206 = vsel %vm2157, %v2101, 0.0
        %v2207 = vadd.f32 %v2100, %v2206
        %2208 = vadd.xlane.f32.xlu0 %v2207
        %v2209 = vpop.xlane.xlu0 %2208
        %v2210 = vsel %vm2157, %v2103, 0.0
        %v2211 = vadd.f32 %v2102, %v2210
        %2212 = vadd.xlane.f32.xlu0 %v2211
        %v2213 = vpop.xlane.xlu0 %2212
        %v2214 = vsel %vm2157, %v2105, 0.0
        %v2215 = vadd.f32 %v2104, %v2214
        %2216 = vadd.xlane.f32.xlu0 %v2215
        %v2217 = vpop.xlane.xlu0 %2216
        %v2218 = vsel %vm2157, %v2107, 0.0
        %v2219 = vadd.f32 %v2106, %v2218
        %2220 = vadd.xlane.f32.xlu0 %v2219
        %v2221 = vpop.xlane.xlu0 %2220
        %v2222 = vsel %vm2157, %v2109, 0.0
        %v2223 = vadd.f32 %v2108, %v2222
        %2224 = vadd.xlane.f32.xlu0 %v2223
        %v2225 = vpop.xlane.xlu0 %2224
        %v2226 = vsel %vm2157, %v2111, 0.0
        %v2227 = vadd.f32 %v2110, %v2226
        %2228 = vadd.xlane.f32.xlu0 %v2227
        %v2229 = vpop.xlane.xlu0 %2228
        %v2230 = vsel %vm2157, %v2113, 0.0
        %v2231 = vadd.f32 %v2112, %v2230
        %2232 = vadd.xlane.f32.xlu0 %v2231
        %v2233 = vpop.xlane.xlu0 %2232
        %v2234 = vsel %vm2157, %v2115, 0.0
        %v2235 = vadd.f32 %v2114, %v2234
        %2236 = vadd.xlane.f32.xlu0 %v2235
        %v2237 = vpop.xlane.xlu0 %2236
        %v2238 = vsel %vm2157, %v2117, 0.0
        %v2239 = vadd.f32 %v2116, %v2238
        %2240 = vadd.xlane.f32.xlu0 %v2239
        %v2241 = vpop.xlane.xlu0 %2240
        %v2242 = vsel %vm2157, %v2119, 0.0
        %v2243 = vadd.f32 %v2118, %v2242
        %2244 = vadd.xlane.f32.xlu0 %v2243
        %v2245 = vpop.xlane.xlu0 %2244
        %v2246 = vsel %vm2157, %v2121, 0.0
        %v2247 = vadd.f32 %v2120, %v2246
        %2248 = vadd.xlane.f32.xlu0 %v2247
        %v2249 = vpop.xlane.xlu0 %2248
        %v2250 = vsel %vm2157, %v2123, 0.0
        %v2251 = vadd.f32 %v2122, %v2250
        %2252 = vadd.xlane.f32.xlu0 %v2251
        %v2253 = vpop.xlane.xlu0 %2252
        %v2254 = vsel %vm2157, %v2125, 0.0
        %v2255 = vadd.f32 %v2124, %v2254
        %2256 = vadd.xlane.f32.xlu0 %v2255
        %v2257 = vpop.xlane.xlu0 %2256
        %v2258 = vsel %vm2157, %v2127, 0.0
        %v2259 = vadd.f32 %v2126, %v2258
        %2260 = vadd.xlane.f32.xlu0 %v2259
        %v2261 = vpop.xlane.xlu0 %2260
        %v2262 = vsel %vm2157, %v2129, 0.0
        %v2263 = vadd.f32 %v2128, %v2262
        %2264 = vadd.xlane.f32.xlu0 %v2263
        %v2265 = vpop.xlane.xlu0 %2264
        %v2266 = vadd.f32 %v2130, %v2161
        %v2267 = vadd.f32 %v2131, %v2165
        %v2268 = vadd.f32 %v2132, %v2169
        %v2269 = vadd.f32 %v2133, %v2173
        %v2270 = vadd.f32 %v2134, %v2177
        %v2271 = vadd.f32 %v2135, %v2181
        %v2272 = vadd.f32 %v2136, %v2185
        %v2273 = vadd.f32 %v2137, %v2189
        %v2274 = vadd.f32 %v2138, %v2193
        %v2275 = vadd.f32 %v2139, %v2197
        %v2276 = vadd.f32 %v2140, %v2201
        %v2277 = vadd.f32 %v2141, %v2205
        %v2278 = vadd.f32 %v2142, %v2209
        %v2279 = vadd.f32 %v2143, %v2213
        %v2280 = vadd.f32 %v2144, %v2217
        %v2281 = vadd.f32 %v2145, %v2221
        %v2282 = vadd.f32 %v2146, %v2225
        %v2283 = vadd.f32 %v2147, %v2229
        %v2284 = vadd.f32 %v2148, %v2233
        %v2285 = vadd.f32 %v2149, %v2237
        %v2286 = vadd.f32 %v2150, %v2241
        %v2287 = vadd.f32 %v2151, %v2245
        %v2288 = vadd.f32 %v2152, %v2249
        %v2289 = vadd.f32 %v2153, %v2253
        %v2290 = vadd.f32 %v2154, %v2257
        %v2291 = vadd.f32 %v2155, %v2261
        %v2292 = vadd.f32 %v2156, %v2265
        %vm2293 = vcmask 7168
        %2294 = vst.msk [vmem:[#allocation3] sm:$0xff] %vm2293, %v2266
        %2295 = vst.msk [vmem:[#allocation3 + $0x8] sm:$0xff] %vm2293, %v2267
        %2296 = vst.msk [vmem:[#allocation3 + $0x10] sm:$0xff] %vm2293, %v2268
        %2297 = vst.msk [vmem:[#allocation3 + $0x18] sm:$0xff] %vm2293, %v2269
        %2298 = vst.msk [vmem:[#allocation3 + $0x20] sm:$0xff] %vm2293, %v2270
        %2299 = vst.msk [vmem:[#allocation3 + $0x28] sm:$0xff] %vm2293, %v2271
        %2300 = vst.msk [vmem:[#allocation3 + $0x30] sm:$0xff] %vm2293, %v2272
        %2301 = vst.msk [vmem:[#allocation3 + $0x38] sm:$0xff] %vm2293, %v2273
        %2302 = vst.msk [vmem:[#allocation3 + $0x40] sm:$0xff] %vm2293, %v2274
        %2303 = vst.msk [vmem:[#allocation3 + $0x48] sm:$0xff] %vm2293, %v2275
        %2304 = vst.msk [vmem:[#allocation3 + $0x50] sm:$0xff] %vm2293, %v2276
        %2305 = vst.msk [vmem:[#allocation3 + $0x58] sm:$0xff] %vm2293, %v2277
        %2306 = vst.msk [vmem:[#allocation3 + $0x60] sm:$0xff] %vm2293, %v2278
        %2307 = vst.msk [vmem:[#allocation3 + $0x68] sm:$0xff] %vm2293, %v2279
        %2308 = vst.msk [vmem:[#allocation3 + $0x70] sm:$0xff] %vm2293, %v2280
        %2309 = vst.msk [vmem:[#allocation3 + $0x78] sm:$0xff] %vm2293, %v2281
        %2310 = vst.msk [vmem:[#allocation3 + $0x80] sm:$0xff] %vm2293, %v2282
        %2311 = vst.msk [vmem:[#allocation3 + $0x88] sm:$0xff] %vm2293, %v2283
        %2312 = vst.msk [vmem:[#allocation3 + $0x90] sm:$0xff] %vm2293, %v2284
        %2313 = vst.msk [vmem:[#allocation3 + $0x98] sm:$0xff] %vm2293, %v2285
        %2314 = vst.msk [vmem:[#allocation3 + $0xa0] sm:$0xff] %vm2293, %v2286
        %2315 = vst.msk [vmem:[#allocation3 + $0xa8] sm:$0xff] %vm2293, %v2287
        %2316 = vst.msk [vmem:[#allocation3 + $0xb0] sm:$0xff] %vm2293, %v2288
        %2317 = vst.msk [vmem:[#allocation3 + $0xb8] sm:$0xff] %vm2293, %v2289
        %2318 = vst.msk [vmem:[#allocation3 + $0xc0] sm:$0xff] %vm2293, %v2290
        %2319 = vst.msk [vmem:[#allocation3 + $0xc8] sm:$0xff] %vm2293, %v2291
        %2320 = vst.msk [vmem:[#allocation3 + $0xd0] sm:$0xff] %vm2293, %v2292
        %v2321 = vld [vmem:[#allocation4] sm:$0xff]
        %v2322 = vld [vmem:[#allocation4 + $0x8] sm:$0xff]
        %v2323 = vld [vmem:[#allocation4 + $0x10] sm:$0xff]
        %v2324 = vld [vmem:[#allocation4 + $0x18] sm:$0xff]
        %v2325 = vld [vmem:[#allocation4 + $0x20] sm:$0xff]
        %v2326 = vld [vmem:[#allocation4 + $0x28] sm:$0xff]
        %v2327 = vld [vmem:[#allocation4 + $0x30] sm:$0xff]
        %v2328 = vld [vmem:[#allocation4 + $0x38] sm:$0xff]
        %v2329 = vld [vmem:[#allocation4 + $0x40] sm:$0xff]
        %v2330 = vld [vmem:[#allocation4 + $0x48] sm:$0xff]
        %v2331 = vld [vmem:[#allocation4 + $0x50] sm:$0xff]
        %v2332 = vld [vmem:[#allocation4 + $0x58] sm:$0xff]
        %v2333 = vld [vmem:[#allocation4 + $0x60] sm:$0xff]
        %v2334 = vld [vmem:[#allocation4 + $0x68] sm:$0xff]
        %v2335 = vld [vmem:[#allocation4 + $0x70] sm:$0xff]
        %v2336 = vld [vmem:[#allocation4 + $0x78] sm:$0xff]
        %v2337 = vld [vmem:[#allocation4 + $0x80] sm:$0xff]
        %v2338 = vld [vmem:[#allocation4 + $0x88] sm:$0xff]
        %v2339 = vld [vmem:[#allocation4 + $0x90] sm:$0xff]
        %v2340 = vld [vmem:[#allocation4 + $0x98] sm:$0xff]
        %v2341 = vld [vmem:[#allocation4 + $0xa0] sm:$0xff]
        %v2342 = vld [vmem:[#allocation4 + $0xa8] sm:$0xff]
        %v2343 = vld [vmem:[#allocation4 + $0xb0] sm:$0xff]
        %v2344 = vld [vmem:[#allocation4 + $0xb8] sm:$0xff]
        %v2345 = vld [vmem:[#allocation4 + $0xc0] sm:$0xff]
        %v2346 = vld [vmem:[#allocation4 + $0xc8] sm:$0xff]
        %v2347 = vld [vmem:[#allocation4 + $0xd0] sm:$0xff]
        %v2348 = vmul.f32 %v2076, %v2076
        %v2349 = vmul.f32 %v2077, %v2077
        %v2350 = vmul.f32 %v2078, %v2078
        %v2351 = vmul.f32 %v2079, %v2079
        %v2352 = vmul.f32 %v2080, %v2080
        %v2353 = vmul.f32 %v2081, %v2081
        %v2354 = vmul.f32 %v2082, %v2082
        %v2355 = vmul.f32 %v2083, %v2083
        %v2356 = vmul.f32 %v2084, %v2084
        %v2357 = vmul.f32 %v2085, %v2085
        %v2358 = vmul.f32 %v2086, %v2086
        %v2359 = vmul.f32 %v2087, %v2087
        %v2360 = vmul.f32 %v2088, %v2088
        %v2361 = vmul.f32 %v2089, %v2089
        %v2362 = vmul.f32 %v2090, %v2090
        %v2363 = vmul.f32 %v2091, %v2091
        %v2364 = vmul.f32 %v2092, %v2092
        %v2365 = vmul.f32 %v2093, %v2093
        %v2366 = vmul.f32 %v2094, %v2094
        %v2367 = vmul.f32 %v2095, %v2095
        %v2368 = vmul.f32 %v2096, %v2096
        %v2369 = vmul.f32 %v2097, %v2097
        %v2370 = vmul.f32 %v2098, %v2098
        %v2371 = vmul.f32 %v2099, %v2099
        %v2372 = vmul.f32 %v2100, %v2100
        %v2373 = vmul.f32 %v2101, %v2101
        %v2374 = vmul.f32 %v2102, %v2102
        %v2375 = vmul.f32 %v2103, %v2103
        %v2376 = vmul.f32 %v2104, %v2104
        %v2377 = vmul.f32 %v2105, %v2105
        %v2378 = vmul.f32 %v2106, %v2106
        %v2379 = vmul.f32 %v2107, %v2107
        %v2380 = vmul.f32 %v2108, %v2108
        %v2381 = vmul.f32 %v2109, %v2109
        %v2382 = vmul.f32 %v2110, %v2110
        %v2383 = vmul.f32 %v2111, %v2111
        %v2384 = vmul.f32 %v2112, %v2112
        %v2385 = vmul.f32 %v2113, %v2113
        %v2386 = vmul.f32 %v2114, %v2114
        %v2387 = vmul.f32 %v2115, %v2115
        %v2388 = vmul.f32 %v2116, %v2116
        %v2389 = vmul.f32 %v2117, %v2117
        %v2390 = vmul.f32 %v2118, %v2118
        %v2391 = vmul.f32 %v2119, %v2119
        %v2392 = vmul.f32 %v2120, %v2120
        %v2393 = vmul.f32 %v2121, %v2121
        %v2394 = vmul.f32 %v2122, %v2122
        %v2395 = vmul.f32 %v2123, %v2123
        %v2396 = vmul.f32 %v2124, %v2124
        %v2397 = vmul.f32 %v2125, %v2125
        %v2398 = vmul.f32 %v2126, %v2126
        %v2399 = vmul.f32 %v2127, %v2127
        %v2400 = vmul.f32 %v2128, %v2128
        %v2401 = vmul.f32 %v2129, %v2129
        %v2402 = vsel %vm2157, %v2349, 0.0
        %v2403 = vadd.f32 %v2348, %v2402
        %2404 = vadd.xlane.f32.xlu0 %v2403
        %v2405 = vpop.xlane.xlu0 %2404
        %v2406 = vsel %vm2157, %v2351, 0.0
        %v2407 = vadd.f32 %v2350, %v2406
        %2408 = vadd.xlane.f32.xlu0 %v2407
        %v2409 = vpop.xlane.xlu0 %2408
        %v2410 = vsel %vm2157, %v2353, 0.0
        %v2411 = vadd.f32 %v2352, %v2410
        %2412 = vadd.xlane.f32.xlu0 %v2411
        %v2413 = vpop.xlane.xlu0 %2412
        %v2414 = vsel %vm2157, %v2355, 0.0
        %v2415 = vadd.f32 %v2354, %v2414
        %2416 = vadd.xlane.f32.xlu0 %v2415
        %v2417 = vpop.xlane.xlu0 %2416
        %v2418 = vsel %vm2157, %v2357, 0.0
        %v2419 = vadd.f32 %v2356, %v2418
        %2420 = vadd.xlane.f32.xlu0 %v2419
        %v2421 = vpop.xlane.xlu0 %2420
        %v2422 = vsel %vm2157, %v2359, 0.0
        %v2423 = vadd.f32 %v2358, %v2422
        %2424 = vadd.xlane.f32.xlu0 %v2423
        %v2425 = vpop.xlane.xlu0 %2424
        %v2426 = vsel %vm2157, %v2361, 0.0
        %v2427 = vadd.f32 %v2360, %v2426
        %2428 = vadd.xlane.f32.xlu0 %v2427
        %v2429 = vpop.xlane.xlu0 %2428
        %v2430 = vsel %vm2157, %v2363, 0.0
        %v2431 = vadd.f32 %v2362, %v2430
        %2432 = vadd.xlane.f32.xlu0 %v2431
        %v2433 = vpop.xlane.xlu0 %2432
        %v2434 = vsel %vm2157, %v2365, 0.0
        %v2435 = vadd.f32 %v2364, %v2434
        %2436 = vadd.xlane.f32.xlu0 %v2435
        %v2437 = vpop.xlane.xlu0 %2436
        %v2438 = vsel %vm2157, %v2367, 0.0
        %v2439 = vadd.f32 %v2366, %v2438
        %2440 = vadd.xlane.f32.xlu0 %v2439
        %v2441 = vpop.xlane.xlu0 %2440
        %v2442 = vsel %vm2157, %v2369, 0.0
        %v2443 = vadd.f32 %v2368, %v2442
        %2444 = vadd.xlane.f32.xlu0 %v2443
        %v2445 = vpop.xlane.xlu0 %2444
        %v2446 = vsel %vm2157, %v2371, 0.0
        %v2447 = vadd.f32 %v2370, %v2446
        %2448 = vadd.xlane.f32.xlu0 %v2447
        %v2449 = vpop.xlane.xlu0 %2448
        %v2450 = vsel %vm2157, %v2373, 0.0
        %v2451 = vadd.f32 %v2372, %v2450
        %2452 = vadd.xlane.f32.xlu0 %v2451
        %v2453 = vpop.xlane.xlu0 %2452
        %v2454 = vsel %vm2157, %v2375, 0.0
        %v2455 = vadd.f32 %v2374, %v2454
        %2456 = vadd.xlane.f32.xlu0 %v2455
        %v2457 = vpop.xlane.xlu0 %2456
        %v2458 = vsel %vm2157, %v2377, 0.0
        %v2459 = vadd.f32 %v2376, %v2458
        %2460 = vadd.xlane.f32.xlu0 %v2459
        %v2461 = vpop.xlane.xlu0 %2460
        %v2462 = vsel %vm2157, %v2379, 0.0
        %v2463 = vadd.f32 %v2378, %v2462
        %2464 = vadd.xlane.f32.xlu0 %v2463
        %v2465 = vpop.xlane.xlu0 %2464
        %v2466 = vsel %vm2157, %v2381, 0.0
        %v2467 = vadd.f32 %v2380, %v2466
        %2468 = vadd.xlane.f32.xlu0 %v2467
        %v2469 = vpop.xlane.xlu0 %2468
        %v2470 = vsel %vm2157, %v2383, 0.0
        %v2471 = vadd.f32 %v2382, %v2470
        %2472 = vadd.xlane.f32.xlu0 %v2471
        %v2473 = vpop.xlane.xlu0 %2472
        %v2474 = vsel %vm2157, %v2385, 0.0
        %v2475 = vadd.f32 %v2384, %v2474
        %2476 = vadd.xlane.f32.xlu0 %v2475
        %v2477 = vpop.xlane.xlu0 %2476
        %v2478 = vsel %vm2157, %v2387, 0.0
        %v2479 = vadd.f32 %v2386, %v2478
        %2480 = vadd.xlane.f32.xlu0 %v2479
        %v2481 = vpop.xlane.xlu0 %2480
        %v2482 = vsel %vm2157, %v2389, 0.0
        %v2483 = vadd.f32 %v2388, %v2482
        %2484 = vadd.xlane.f32.xlu0 %v2483
        %v2485 = vpop.xlane.xlu0 %2484
        %v2486 = vsel %vm2157, %v2391, 0.0
        %v2487 = vadd.f32 %v2390, %v2486
        %2488 = vadd.xlane.f32.xlu0 %v2487
        %v2489 = vpop.xlane.xlu0 %2488
        %v2490 = vsel %vm2157, %v2393, 0.0
        %v2491 = vadd.f32 %v2392, %v2490
        %2492 = vadd.xlane.f32.xlu0 %v2491
        %v2493 = vpop.xlane.xlu0 %2492
        %v2494 = vsel %vm2157, %v2395, 0.0
        %v2495 = vadd.f32 %v2394, %v2494
        %2496 = vadd.xlane.f32.xlu0 %v2495
        %v2497 = vpop.xlane.xlu0 %2496
        %v2498 = vsel %vm2157, %v2397, 0.0
        %v2499 = vadd.f32 %v2396, %v2498
        %2500 = vadd.xlane.f32.xlu0 %v2499
        %v2501 = vpop.xlane.xlu0 %2500
        %v2502 = vsel %vm2157, %v2399, 0.0
        %v2503 = vadd.f32 %v2398, %v2502
        %2504 = vadd.xlane.f32.xlu0 %v2503
        %v2505 = vpop.xlane.xlu0 %2504
        %v2506 = vsel %vm2157, %v2401, 0.0
        %v2507 = vadd.f32 %v2400, %v2506
        %2508 = vadd.xlane.f32.xlu0 %v2507
        %v2509 = vpop.xlane.xlu0 %2508
        %v2510 = vadd.f32 %v2321, %v2405
        %v2511 = vadd.f32 %v2322, %v2409
        %v2512 = vadd.f32 %v2323, %v2413
        %v2513 = vadd.f32 %v2324, %v2417
        %v2514 = vadd.f32 %v2325, %v2421
        %v2515 = vadd.f32 %v2326, %v2425
        %v2516 = vadd.f32 %v2327, %v2429
        %v2517 = vadd.f32 %v2328, %v2433
        %v2518 = vadd.f32 %v2329, %v2437
        %v2519 = vadd.f32 %v2330, %v2441
        %v2520 = vadd.f32 %v2331, %v2445
        %v2521 = vadd.f32 %v2332, %v2449
        %v2522 = vadd.f32 %v2333, %v2453
        %v2523 = vadd.f32 %v2334, %v2457
        %v2524 = vadd.f32 %v2335, %v2461
        %v2525 = vadd.f32 %v2336, %v2465
        %v2526 = vadd.f32 %v2337, %v2469
        %v2527 = vadd.f32 %v2338, %v2473
        %v2528 = vadd.f32 %v2339, %v2477
        %v2529 = vadd.f32 %v2340, %v2481
        %v2530 = vadd.f32 %v2341, %v2485
        %v2531 = vadd.f32 %v2342, %v2489
        %v2532 = vadd.f32 %v2343, %v2493
        %v2533 = vadd.f32 %v2344, %v2497
        %v2534 = vadd.f32 %v2345, %v2501
        %v2535 = vadd.f32 %v2346, %v2505
        %v2536 = vadd.f32 %v2347, %v2509
        %2537 = vst.msk [vmem:[#allocation4] sm:$0xff] %vm2293, %v2510
        %2538 = vst.msk [vmem:[#allocation4 + $0x8] sm:$0xff] %vm2293, %v2511
        %2539 = vst.msk [vmem:[#allocation4 + $0x10] sm:$0xff] %vm2293, %v2512
        %2540 = vst.msk [vmem:[#allocation4 + $0x18] sm:$0xff] %vm2293, %v2513
        %2541 = vst.msk [vmem:[#allocation4 + $0x20] sm:$0xff] %vm2293, %v2514
        %2542 = vst.msk [vmem:[#allocation4 + $0x28] sm:$0xff] %vm2293, %v2515
        %2543 = vst.msk [vmem:[#allocation4 + $0x30] sm:$0xff] %vm2293, %v2516
        %2544 = vst.msk [vmem:[#allocation4 + $0x38] sm:$0xff] %vm2293, %v2517
        %2545 = vst.msk [vmem:[#allocation4 + $0x40] sm:$0xff] %vm2293, %v2518
        %2546 = vst.msk [vmem:[#allocation4 + $0x48] sm:$0xff] %vm2293, %v2519
        %2547 = vst.msk [vmem:[#allocation4 + $0x50] sm:$0xff] %vm2293, %v2520
        %2548 = vst.msk [vmem:[#allocation4 + $0x58] sm:$0xff] %vm2293, %v2521
        %2549 = vst.msk [vmem:[#allocation4 + $0x60] sm:$0xff] %vm2293, %v2522
        %2550 = vst.msk [vmem:[#allocation4 + $0x68] sm:$0xff] %vm2293, %v2523
        %2551 = vst.msk [vmem:[#allocation4 + $0x70] sm:$0xff] %vm2293, %v2524
        %2552 = vst.msk [vmem:[#allocation4 + $0x78] sm:$0xff] %vm2293, %v2525
        %2553 = vst.msk [vmem:[#allocation4 + $0x80] sm:$0xff] %vm2293, %v2526
        %2554 = vst.msk [vmem:[#allocation4 + $0x88] sm:$0xff] %vm2293, %v2527
        %2555 = vst.msk [vmem:[#allocation4 + $0x90] sm:$0xff] %vm2293, %v2528
        %2556 = vst.msk [vmem:[#allocation4 + $0x98] sm:$0xff] %vm2293, %v2529
        %2557 = vst.msk [vmem:[#allocation4 + $0xa0] sm:$0xff] %vm2293, %v2530
        %2558 = vst.msk [vmem:[#allocation4 + $0xa8] sm:$0xff] %vm2293, %v2531
        %2559 = vst.msk [vmem:[#allocation4 + $0xb0] sm:$0xff] %vm2293, %v2532
        %2560 = vst.msk [vmem:[#allocation4 + $0xb8] sm:$0xff] %vm2293, %v2533
        %2561 = vst.msk [vmem:[#allocation4 + $0xc0] sm:$0xff] %vm2293, %v2534
        %2562 = vst.msk [vmem:[#allocation4 + $0xc8] sm:$0xff] %vm2293, %v2535
        %2563 = vst.msk [vmem:[#allocation4 + $0xd0] sm:$0xff] %vm2293, %v2536
        %p2564 = scmp.eq.s32.totalorder %s22, 1
        // Predicated region
        $region53: #{tpu_custom_call.1} parent=47 // pred_check
          %p2565 = pneg %p2564
        $region54: #{tpu_custom_call.1} parent=47 // pred_check_branch
          %2567 = sbr.rel (%p2565) target = $region56
        $region55: #{tpu_custom_call.1} parent=47 // pred_region
          %v2568 = vld [vmem:[#allocation3] sm:$0xff]
          %v2569 = vld [vmem:[#allocation3 + $0x8] sm:$0xff]
          %v2570 = vld [vmem:[#allocation3 + $0x10] sm:$0xff]
          %v2571 = vld [vmem:[#allocation3 + $0x18] sm:$0xff]
          %v2572 = vld [vmem:[#allocation3 + $0x20] sm:$0xff]
          %v2573 = vld [vmem:[#allocation3 + $0x28] sm:$0xff]
          %v2574 = vld [vmem:[#allocation3 + $0x30] sm:$0xff]
          %v2575 = vld [vmem:[#allocation3 + $0x38] sm:$0xff]
          %v2576 = vld [vmem:[#allocation3 + $0x40] sm:$0xff]
          %v2577 = vld [vmem:[#allocation3 + $0x48] sm:$0xff]
          %v2578 = vld [vmem:[#allocation3 + $0x50] sm:$0xff]
          %v2579 = vld [vmem:[#allocation3 + $0x58] sm:$0xff]
          %v2580 = vld [vmem:[#allocation3 + $0x60] sm:$0xff]
          %v2581 = vld [vmem:[#allocation3 + $0x68] sm:$0xff]
          %v2582 = vld [vmem:[#allocation3 + $0x70] sm:$0xff]
          %v2583 = vld [vmem:[#allocation3 + $0x78] sm:$0xff]
          %v2584 = vld [vmem:[#allocation3 + $0x80] sm:$0xff]
          %v2585 = vld [vmem:[#allocation3 + $0x88] sm:$0xff]
          %v2586 = vld [vmem:[#allocation3 + $0x90] sm:$0xff]
          %v2587 = vld [vmem:[#allocation3 + $0x98] sm:$0xff]
          %v2588 = vld [vmem:[#allocation3 + $0xa0] sm:$0xff]
          %v2589 = vld [vmem:[#allocation3 + $0xa8] sm:$0xff]
          %v2590 = vld [vmem:[#allocation3 + $0xb0] sm:$0xff]
          %v2591 = vld [vmem:[#allocation3 + $0xb8] sm:$0xff]
          %v2592 = vld [vmem:[#allocation3 + $0xc0] sm:$0xff]
          %v2593 = vld [vmem:[#allocation3 + $0xc8] sm:$0xff]
          %v2594 = vld [vmem:[#allocation3 + $0xd0] sm:$0xff]
          %v2595 = vmul.f32 %v2568, 0.0025510204
          %v2596 = vmul.f32 %v2569, 0.0025510204
          %v2597 = vmul.f32 %v2570, 0.0025510204
          %v2598 = vmul.f32 %v2571, 0.0025510204
          %v2599 = vmul.f32 %v2572, 0.0025510204
          %v2600 = vmul.f32 %v2573, 0.0025510204
          %v2601 = vmul.f32 %v2574, 0.0025510204
          %v2602 = vmul.f32 %v2575, 0.0025510204
          %v2603 = vmul.f32 %v2576, 0.0025510204
          %v2604 = vmul.f32 %v2577, 0.0025510204
          %v2605 = vmul.f32 %v2578, 0.0025510204
          %v2606 = vmul.f32 %v2579, 0.0025510204
          %v2607 = vmul.f32 %v2580, 0.0025510204
          %v2608 = vmul.f32 %v2581, 0.0025510204
          %v2609 = vmul.f32 %v2582, 0.0025510204
          %v2610 = vmul.f32 %v2583, 0.0025510204
          %v2611 = vmul.f32 %v2584, 0.0025510204
          %v2612 = vmul.f32 %v2585, 0.0025510204
          %v2613 = vmul.f32 %v2586, 0.0025510204
          %v2614 = vmul.f32 %v2587, 0.0025510204
          %v2615 = vmul.f32 %v2588, 0.0025510204
          %v2616 = vmul.f32 %v2589, 0.0025510204
          %v2617 = vmul.f32 %v2590, 0.0025510204
          %v2618 = vmul.f32 %v2591, 0.0025510204
          %v2619 = vmul.f32 %v2592, 0.0025510204
          %v2620 = vmul.f32 %v2593, 0.0025510204
          %v2621 = vmul.f32 %v2594, 0.0025510204
          %v2622 = vld [vmem:[#allocation4] sm:$0xff]
          %v2623 = vld [vmem:[#allocation4 + $0x8] sm:$0xff]
          %v2624 = vld [vmem:[#allocation4 + $0x10] sm:$0xff]
          %v2625 = vld [vmem:[#allocation4 + $0x18] sm:$0xff]
          %v2626 = vld [vmem:[#allocation4 + $0x20] sm:$0xff]
          %v2627 = vld [vmem:[#allocation4 + $0x28] sm:$0xff]
          %v2628 = vld [vmem:[#allocation4 + $0x30] sm:$0xff]
          %v2629 = vld [vmem:[#allocation4 + $0x38] sm:$0xff]
          %v2630 = vld [vmem:[#allocation4 + $0x40] sm:$0xff]
          %v2631 = vld [vmem:[#allocation4 + $0x48] sm:$0xff]
          %v2632 = vld [vmem:[#allocation4 + $0x50] sm:$0xff]
          %v2633 = vld [vmem:[#allocation4 + $0x58] sm:$0xff]
          %v2634 = vld [vmem:[#allocation4 + $0x60] sm:$0xff]
          %v2635 = vld [vmem:[#allocation4 + $0x68] sm:$0xff]
          %v2636 = vld [vmem:[#allocation4 + $0x70] sm:$0xff]
          %v2637 = vld [vmem:[#allocation4 + $0x78] sm:$0xff]
          %v2638 = vld [vmem:[#allocation4 + $0x80] sm:$0xff]
          %v2639 = vld [vmem:[#allocation4 + $0x88] sm:$0xff]
          %v2640 = vld [vmem:[#allocation4 + $0x90] sm:$0xff]
          %v2641 = vld [vmem:[#allocation4 + $0x98] sm:$0xff]
          %v2642 = vld [vmem:[#allocation4 + $0xa0] sm:$0xff]
          %v2643 = vld [vmem:[#allocation4 + $0xa8] sm:$0xff]
          %v2644 = vld [vmem:[#allocation4 + $0xb0] sm:$0xff]
          %v2645 = vld [vmem:[#allocation4 + $0xb8] sm:$0xff]
          %v2646 = vld [vmem:[#allocation4 + $0xc0] sm:$0xff]
          %v2647 = vld [vmem:[#allocation4 + $0xc8] sm:$0xff]
          %v2648 = vld [vmem:[#allocation4 + $0xd0] sm:$0xff]
          %v2649 = vmul.f32 %v2622, 0.0025510204
          %v2650 = vmul.f32 %v2623, 0.0025510204
          %v2651 = vmul.f32 %v2624, 0.0025510204
          %v2652 = vmul.f32 %v2625, 0.0025510204
          %v2653 = vmul.f32 %v2626, 0.0025510204
          %v2654 = vmul.f32 %v2627, 0.0025510204
          %v2655 = vmul.f32 %v2628, 0.0025510204
          %v2656 = vmul.f32 %v2629, 0.0025510204
          %v2657 = vmul.f32 %v2630, 0.0025510204
          %v2658 = vmul.f32 %v2631, 0.0025510204
          %v2659 = vmul.f32 %v2632, 0.0025510204
          %v2660 = vmul.f32 %v2633, 0.0025510204
          %v2661 = vmul.f32 %v2634, 0.0025510204
          %v2662 = vmul.f32 %v2635, 0.0025510204
          %v2663 = vmul.f32 %v2636, 0.0025510204
          %v2664 = vmul.f32 %v2637, 0.0025510204
          %v2665 = vmul.f32 %v2638, 0.0025510204
          %v2666 = vmul.f32 %v2639, 0.0025510204
          %v2667 = vmul.f32 %v2640, 0.0025510204
          %v2668 = vmul.f32 %v2641, 0.0025510204
          %v2669 = vmul.f32 %v2642, 0.0025510204
          %v2670 = vmul.f32 %v2643, 0.0025510204
          %v2671 = vmul.f32 %v2644, 0.0025510204
          %v2672 = vmul.f32 %v2645, 0.0025510204
          %v2673 = vmul.f32 %v2646, 0.0025510204
          %v2674 = vmul.f32 %v2647, 0.0025510204
          %v2675 = vmul.f32 %v2648, 0.0025510204
          %v2676 = vmul.f32 %v2595, %v2595
          %v2677 = vmul.f32 %v2596, %v2596
          %v2678 = vmul.f32 %v2597, %v2597
          %v2679 = vmul.f32 %v2598, %v2598
          %v2680 = vmul.f32 %v2599, %v2599
          %v2681 = vmul.f32 %v2600, %v2600
          %v2682 = vmul.f32 %v2601, %v2601
          %v2683 = vmul.f32 %v2602, %v2602
          %v2684 = vmul.f32 %v2603, %v2603
          %v2685 = vmul.f32 %v2604, %v2604
          %v2686 = vmul.f32 %v2605, %v2605
          %v2687 = vmul.f32 %v2606, %v2606
          %v2688 = vmul.f32 %v2607, %v2607
          %v2689 = vmul.f32 %v2608, %v2608
          %v2690 = vmul.f32 %v2609, %v2609
          %v2691 = vmul.f32 %v2610, %v2610
          %v2692 = vmul.f32 %v2611, %v2611
          %v2693 = vmul.f32 %v2612, %v2612
          %v2694 = vmul.f32 %v2613, %v2613
          %v2695 = vmul.f32 %v2614, %v2614
          %v2696 = vmul.f32 %v2615, %v2615
          %v2697 = vmul.f32 %v2616, %v2616
          %v2698 = vmul.f32 %v2617, %v2617
          %v2699 = vmul.f32 %v2618, %v2618
          %v2700 = vmul.f32 %v2619, %v2619
          %v2701 = vmul.f32 %v2620, %v2620
          %v2702 = vmul.f32 %v2621, %v2621
          %v2703 = vsub.f32 %v2649, %v2676
          %v2704 = vsub.f32 %v2650, %v2677
          %v2705 = vsub.f32 %v2651, %v2678
          %v2706 = vsub.f32 %v2652, %v2679
          %v2707 = vsub.f32 %v2653, %v2680
          %v2708 = vsub.f32 %v2654, %v2681
          %v2709 = vsub.f32 %v2655, %v2682
          %v2710 = vsub.f32 %v2656, %v2683
          %v2711 = vsub.f32 %v2657, %v2684
          %v2712 = vsub.f32 %v2658, %v2685
          %v2713 = vsub.f32 %v2659, %v2686
          %v2714 = vsub.f32 %v2660, %v2687
          %v2715 = vsub.f32 %v2661, %v2688
          %v2716 = vsub.f32 %v2662, %v2689
          %v2717 = vsub.f32 %v2663, %v2690
          %v2718 = vsub.f32 %v2664, %v2691
          %v2719 = vsub.f32 %v2665, %v2692
          %v2720 = vsub.f32 %v2666, %v2693
          %v2721 = vsub.f32 %v2667, %v2694
          %v2722 = vsub.f32 %v2668, %v2695
          %v2723 = vsub.f32 %v2669, %v2696
          %v2724 = vsub.f32 %v2670, %v2697
          %v2725 = vsub.f32 %v2671, %v2698
          %v2726 = vsub.f32 %v2672, %v2699
          %v2727 = vsub.f32 %v2673, %v2700
          %v2728 = vsub.f32 %v2674, %v2701
          %v2729 = vsub.f32 %v2675, %v2702
          %v2730 = vmax.f32 %v2703, 0.0
          %v2731 = vmax.f32 %v2704, 0.0
          %v2732 = vmax.f32 %v2705, 0.0
          %v2733 = vmax.f32 %v2706, 0.0
          %v2734 = vmax.f32 %v2707, 0.0
          %v2735 = vmax.f32 %v2708, 0.0
          %v2736 = vmax.f32 %v2709, 0.0
          %v2737 = vmax.f32 %v2710, 0.0
          %v2738 = vmax.f32 %v2711, 0.0
          %v2739 = vmax.f32 %v2712, 0.0
          %v2740 = vmax.f32 %v2713, 0.0
          %v2741 = vmax.f32 %v2714, 0.0
          %v2742 = vmax.f32 %v2715, 0.0
          %v2743 = vmax.f32 %v2716, 0.0
          %v2744 = vmax.f32 %v2717, 0.0
          %v2745 = vmax.f32 %v2718, 0.0
          %v2746 = vmax.f32 %v2719, 0.0
          %v2747 = vmax.f32 %v2720, 0.0
          %v2748 = vmax.f32 %v2721, 0.0
          %v2749 = vmax.f32 %v2722, 0.0
          %v2750 = vmax.f32 %v2723, 0.0
          %v2751 = vmax.f32 %v2724, 0.0
          %v2752 = vmax.f32 %v2725, 0.0
          %v2753 = vmax.f32 %v2726, 0.0
          %v2754 = vmax.f32 %v2727, 0.0
          %v2755 = vmax.f32 %v2728, 0.0
          %v2756 = vmax.f32 %v2729, 0.0
          %v2757 = vld [vmem:[#allocation2] sm:$0xff]
          %v2758 = vld [vmem:[#allocation2 + $0x8] sm:$0xff]
          %v2759 = vld [vmem:[#allocation2 + $0x10] sm:$0xff]
          %v2760 = vld [vmem:[#allocation2 + $0x18] sm:$0xff]
          %v2761 = vld [vmem:[#allocation2 + $0x20] sm:$0xff]
          %v2762 = vld [vmem:[#allocation2 + $0x28] sm:$0xff]
          %v2763 = vld [vmem:[#allocation2 + $0x30] sm:$0xff]
          %v2764 = vld [vmem:[#allocation2 + $0x38] sm:$0xff]
          %v2765 = vld [vmem:[#allocation2 + $0x40] sm:$0xff]
          %v2766 = vld [vmem:[#allocation2 + $0x48] sm:$0xff]
          %v2767 = vld [vmem:[#allocation2 + $0x50] sm:$0xff]
          %v2768 = vld [vmem:[#allocation2 + $0x58] sm:$0xff]
          %v2769 = vld [vmem:[#allocation2 + $0x60] sm:$0xff]
          %v2770 = vld [vmem:[#allocation2 + $0x68] sm:$0xff]
          %v2771 = vld [vmem:[#allocation2 + $0x70] sm:$0xff]
          %v2772 = vld [vmem:[#allocation2 + $0x78] sm:$0xff]
          %v2773 = vld [vmem:[#allocation2 + $0x80] sm:$0xff]
          %v2774 = vld [vmem:[#allocation2 + $0x88] sm:$0xff]
          %v2775 = vld [vmem:[#allocation2 + $0x90] sm:$0xff]
          %v2776 = vld [vmem:[#allocation2 + $0x98] sm:$0xff]
          %v2777 = vld [vmem:[#allocation2 + $0xa0] sm:$0xff]
          %v2778 = vld [vmem:[#allocation2 + $0xa8] sm:$0xff]
          %v2779 = vld [vmem:[#allocation2 + $0xb0] sm:$0xff]
          %v2780 = vld [vmem:[#allocation2 + $0xb8] sm:$0xff]
          %v2781 = vld [vmem:[#allocation2 + $0xc0] sm:$0xff]
          %v2782 = vld [vmem:[#allocation2 + $0xc8] sm:$0xff]
          %v2783 = vld [vmem:[#allocation2 + $0xd0] sm:$0xff]
          %v2784 = vadd.f32 %v2757, %v2595
          %v2785 = vadd.f32 %v2758, %v2596
          %v2786 = vadd.f32 %v2759, %v2597
          %v2787 = vadd.f32 %v2760, %v2598
          %v2788 = vadd.f32 %v2761, %v2599
          %v2789 = vadd.f32 %v2762, %v2600
          %v2790 = vadd.f32 %v2763, %v2601
          %v2791 = vadd.f32 %v2764, %v2602
          %v2792 = vadd.f32 %v2765, %v2603
          %v2793 = vadd.f32 %v2766, %v2604
          %v2794 = vadd.f32 %v2767, %v2605
          %v2795 = vadd.f32 %v2768, %v2606
          %v2796 = vadd.f32 %v2769, %v2607
          %v2797 = vadd.f32 %v2770, %v2608
          %v2798 = vadd.f32 %v2771, %v2609
          %v2799 = vadd.f32 %v2772, %v2610
          %v2800 = vadd.f32 %v2773, %v2611
          %v2801 = vadd.f32 %v2774, %v2612
          %v2802 = vadd.f32 %v2775, %v2613
          %v2803 = vadd.f32 %v2776, %v2614
          %v2804 = vadd.f32 %v2777, %v2615
          %v2805 = vadd.f32 %v2778, %v2616
          %v2806 = vadd.f32 %v2779, %v2617
          %v2807 = vadd.f32 %v2780, %v2618
          %v2808 = vadd.f32 %v2781, %v2619
          %v2809 = vadd.f32 %v2782, %v2620
          %v2810 = vadd.f32 %v2783, %v2621
          %v2811 = vld [vmem:[%s4] sm:$0xff]
          %v2812 = vld [vmem:[%s4 + $0x8] sm:$0xff]
          %v2813 = vld [vmem:[%s4 + $0x10] sm:$0xff]
          %v2814 = vld [vmem:[%s4 + $0x18] sm:$0xff]
          %v2815 = vld [vmem:[%s4 + $0x20] sm:$0xff]
          %v2816 = vld [vmem:[%s4 + $0x28] sm:$0xff]
          %v2817 = vld [vmem:[%s4 + $0x30] sm:$0xff]
          %v2818 = vld [vmem:[%s4 + $0x38] sm:$0xff]
          %v2819 = vld [vmem:[%s4 + $0x40] sm:$0xff]
          %v2820 = vld [vmem:[%s4 + $0x48] sm:$0xff]
          %v2821 = vld [vmem:[%s4 + $0x50] sm:$0xff]
          %v2822 = vld [vmem:[%s4 + $0x58] sm:$0xff]
          %v2823 = vld [vmem:[%s4 + $0x60] sm:$0xff]
          %v2824 = vld [vmem:[%s4 + $0x68] sm:$0xff]
          %v2825 = vld [vmem:[%s4 + $0x70] sm:$0xff]
          %v2826 = vld [vmem:[%s4 + $0x78] sm:$0xff]
          %v2827 = vld [vmem:[%s4 + $0x80] sm:$0xff]
          %v2828 = vld [vmem:[%s4 + $0x88] sm:$0xff]
          %v2829 = vld [vmem:[%s4 + $0x90] sm:$0xff]
          %v2830 = vld [vmem:[%s4 + $0x98] sm:$0xff]
          %v2831 = vld [vmem:[%s4 + $0xa0] sm:$0xff]
          %v2832 = vld [vmem:[%s4 + $0xa8] sm:$0xff]
          %v2833 = vld [vmem:[%s4 + $0xb0] sm:$0xff]
          %v2834 = vld [vmem:[%s4 + $0xb8] sm:$0xff]
          %v2835 = vld [vmem:[%s4 + $0xc0] sm:$0xff]
          %v2836 = vld [vmem:[%s4 + $0xc8] sm:$0xff]
          %v2837 = vld [vmem:[%s4 + $0xd0] sm:$0xff]
          %v2838 = vadd.f32 %v2730, 1e-05
          %v2839 = vadd.f32 %v2731, 1e-05
          %v2840 = vadd.f32 %v2732, 1e-05
          %v2841 = vadd.f32 %v2733, 1e-05
          %v2842 = vadd.f32 %v2734, 1e-05
          %v2843 = vadd.f32 %v2735, 1e-05
          %v2844 = vadd.f32 %v2736, 1e-05
          %v2845 = vadd.f32 %v2737, 1e-05
          %v2846 = vadd.f32 %v2738, 1e-05
          %v2847 = vadd.f32 %v2739, 1e-05
          %v2848 = vadd.f32 %v2740, 1e-05
          %v2849 = vadd.f32 %v2741, 1e-05
          %v2850 = vadd.f32 %v2742, 1e-05
          %v2851 = vadd.f32 %v2743, 1e-05
          %v2852 = vadd.f32 %v2744, 1e-05
          %v2853 = vadd.f32 %v2745, 1e-05
          %v2854 = vadd.f32 %v2746, 1e-05
          %v2855 = vadd.f32 %v2747, 1e-05
          %v2856 = vadd.f32 %v2748, 1e-05
          %v2857 = vadd.f32 %v2749, 1e-05
          %v2858 = vadd.f32 %v2750, 1e-05
          %v2859 = vadd.f32 %v2751, 1e-05
          %v2860 = vadd.f32 %v2752, 1e-05
          %v2861 = vadd.f32 %v2753, 1e-05
          %v2862 = vadd.f32 %v2754, 1e-05
          %v2863 = vadd.f32 %v2755, 1e-05
          %v2864 = vadd.f32 %v2756, 1e-05
          %v2865 = vrsqrt.pop %v2838
          %v2866 = vmul.f32 %v2865, %v2838
          %v2867 = vmul.f32 %v2866, %v2865
          %v2868 = vmul.f32 0.5, %v2867
          %v2869 = vsub.f32 1.5, %v2868
          %v2870 = vmul.f32 %v2865, %v2869
          %vm2871 = vweird.f32 %v2838
          %vm2872 = vweird.f32 %v2865
          %vm2873 = vmor %vm2871, %vm2872
          %v2874 = vsel %vm2873, %v2865, %v2870
          %v2875 = vrsqrt.pop %v2839
          %v2876 = vmul.f32 %v2875, %v2839
          %v2877 = vmul.f32 %v2876, %v2875
          %v2878 = vmul.f32 0.5, %v2877
          %v2879 = vsub.f32 1.5, %v2878
          %v2880 = vmul.f32 %v2875, %v2879
          %vm2881 = vweird.f32 %v2839
          %vm2882 = vweird.f32 %v2875
          %vm2883 = vmor %vm2881, %vm2882
          %v2884 = vsel %vm2883, %v2875, %v2880
          %v2885 = vrsqrt.pop %v2840
          %v2886 = vmul.f32 %v2885, %v2840
          %v2887 = vmul.f32 %v2886, %v2885
          %v2888 = vmul.f32 0.5, %v2887
          %v2889 = vsub.f32 1.5, %v2888
          %v2890 = vmul.f32 %v2885, %v2889
          %vm2891 = vweird.f32 %v2840
          %vm2892 = vweird.f32 %v2885
          %vm2893 = vmor %vm2891, %vm2892
          %v2894 = vsel %vm2893, %v2885, %v2890
          %v2895 = vrsqrt.pop %v2841
          %v2896 = vmul.f32 %v2895, %v2841
          %v2897 = vmul.f32 %v2896, %v2895
          %v2898 = vmul.f32 0.5, %v2897
          %v2899 = vsub.f32 1.5, %v2898
          %v2900 = vmul.f32 %v2895, %v2899
          %vm2901 = vweird.f32 %v2841
          %vm2902 = vweird.f32 %v2895
          %vm2903 = vmor %vm2901, %vm2902
          %v2904 = vsel %vm2903, %v2895, %v2900
          %v2905 = vrsqrt.pop %v2842
          %v2906 = vmul.f32 %v2905, %v2842
          %v2907 = vmul.f32 %v2906, %v2905
          %v2908 = vmul.f32 0.5, %v2907
          %v2909 = vsub.f32 1.5, %v2908
          %v2910 = vmul.f32 %v2905, %v2909
          %vm2911 = vweird.f32 %v2842
          %vm2912 = vweird.f32 %v2905
          %vm2913 = vmor %vm2911, %vm2912
          %v2914 = vsel %vm2913, %v2905, %v2910
          %v2915 = vrsqrt.pop %v2843
          %v2916 = vmul.f32 %v2915, %v2843
          %v2917 = vmul.f32 %v2916, %v2915
          %v2918 = vmul.f32 0.5, %v2917
          %v2919 = vsub.f32 1.5, %v2918
          %v2920 = vmul.f32 %v2915, %v2919
          %vm2921 = vweird.f32 %v2843
          %vm2922 = vweird.f32 %v2915
          %vm2923 = vmor %vm2921, %vm2922
          %v2924 = vsel %vm2923, %v2915, %v2920
          %v2925 = vrsqrt.pop %v2844
          %v2926 = vmul.f32 %v2925, %v2844
          %v2927 = vmul.f32 %v2926, %v2925
          %v2928 = vmul.f32 0.5, %v2927
          %v2929 = vsub.f32 1.5, %v2928
          %v2930 = vmul.f32 %v2925, %v2929
          %vm2931 = vweird.f32 %v2844
          %vm2932 = vweird.f32 %v2925
          %vm2933 = vmor %vm2931, %vm2932
          %v2934 = vsel %vm2933, %v2925, %v2930
          %v2935 = vrsqrt.pop %v2845
          %v2936 = vmul.f32 %v2935, %v2845
          %v2937 = vmul.f32 %v2936, %v2935
          %v2938 = vmul.f32 0.5, %v2937
          %v2939 = vsub.f32 1.5, %v2938
          %v2940 = vmul.f32 %v2935, %v2939
          %vm2941 = vweird.f32 %v2845
          %vm2942 = vweird.f32 %v2935
          %vm2943 = vmor %vm2941, %vm2942
          %v2944 = vsel %vm2943, %v2935, %v2940
          %v2945 = vrsqrt.pop %v2846
          %v2946 = vmul.f32 %v2945, %v2846
          %v2947 = vmul.f32 %v2946, %v2945
          %v2948 = vmul.f32 0.5, %v2947
          %v2949 = vsub.f32 1.5, %v2948
          %v2950 = vmul.f32 %v2945, %v2949
          %vm2951 = vweird.f32 %v2846
          %vm2952 = vweird.f32 %v2945
          %vm2953 = vmor %vm2951, %vm2952
          %v2954 = vsel %vm2953, %v2945, %v2950
          %v2955 = vrsqrt.pop %v2847
          %v2956 = vmul.f32 %v2955, %v2847
          %v2957 = vmul.f32 %v2956, %v2955
          %v2958 = vmul.f32 0.5, %v2957
          %v2959 = vsub.f32 1.5, %v2958
          %v2960 = vmul.f32 %v2955, %v2959
          %vm2961 = vweird.f32 %v2847
          %vm2962 = vweird.f32 %v2955
          %vm2963 = vmor %vm2961, %vm2962
          %v2964 = vsel %vm2963, %v2955, %v2960
          %v2965 = vrsqrt.pop %v2848
          %v2966 = vmul.f32 %v2965, %v2848
          %v2967 = vmul.f32 %v2966, %v2965
          %v2968 = vmul.f32 0.5, %v2967
          %v2969 = vsub.f32 1.5, %v2968
          %v2970 = vmul.f32 %v2965, %v2969
          %vm2971 = vweird.f32 %v2848
          %vm2972 = vweird.f32 %v2965
          %vm2973 = vmor %vm2971, %vm2972
          %v2974 = vsel %vm2973, %v2965, %v2970
          %v2975 = vrsqrt.pop %v2849
          %v2976 = vmul.f32 %v2975, %v2849
          %v2977 = vmul.f32 %v2976, %v2975
          %v2978 = vmul.f32 0.5, %v2977
          %v2979 = vsub.f32 1.5, %v2978
          %v2980 = vmul.f32 %v2975, %v2979
          %vm2981 = vweird.f32 %v2849
          %vm2982 = vweird.f32 %v2975
          %vm2983 = vmor %vm2981, %vm2982
          %v2984 = vsel %vm2983, %v2975, %v2980
          %v2985 = vrsqrt.pop %v2850
          %v2986 = vmul.f32 %v2985, %v2850
          %v2987 = vmul.f32 %v2986, %v2985
          %v2988 = vmul.f32 0.5, %v2987
          %v2989 = vsub.f32 1.5, %v2988
          %v2990 = vmul.f32 %v2985, %v2989
          %vm2991 = vweird.f32 %v2850
          %vm2992 = vweird.f32 %v2985
          %vm2993 = vmor %vm2991, %vm2992
          %v2994 = vsel %vm2993, %v2985, %v2990
          %v2995 = vrsqrt.pop %v2851
          %v2996 = vmul.f32 %v2995, %v2851
          %v2997 = vmul.f32 %v2996, %v2995
          %v2998 = vmul.f32 0.5, %v2997
          %v2999 = vsub.f32 1.5, %v2998
          %v3000 = vmul.f32 %v2995, %v2999
          %vm3001 = vweird.f32 %v2851
          %vm3002 = vweird.f32 %v2995
          %vm3003 = vmor %vm3001, %vm3002
          %v3004 = vsel %vm3003, %v2995, %v3000
          %v3005 = vrsqrt.pop %v2852
          %v3006 = vmul.f32 %v3005, %v2852
          %v3007 = vmul.f32 %v3006, %v3005
          %v3008 = vmul.f32 0.5, %v3007
          %v3009 = vsub.f32 1.5, %v3008
          %v3010 = vmul.f32 %v3005, %v3009
          %vm3011 = vweird.f32 %v2852
          %vm3012 = vweird.f32 %v3005
          %vm3013 = vmor %vm3011, %vm3012
          %v3014 = vsel %vm3013, %v3005, %v3010
          %v3015 = vrsqrt.pop %v2853
          %v3016 = vmul.f32 %v3015, %v2853
          %v3017 = vmul.f32 %v3016, %v3015
          %v3018 = vmul.f32 0.5, %v3017
          %v3019 = vsub.f32 1.5, %v3018
          %v3020 = vmul.f32 %v3015, %v3019
          %vm3021 = vweird.f32 %v2853
          %vm3022 = vweird.f32 %v3015
          %vm3023 = vmor %vm3021, %vm3022
          %v3024 = vsel %vm3023, %v3015, %v3020
          %v3025 = vrsqrt.pop %v2854
          %v3026 = vmul.f32 %v3025, %v2854
          %v3027 = vmul.f32 %v3026, %v3025
          %v3028 = vmul.f32 0.5, %v3027
          %v3029 = vsub.f32 1.5, %v3028
          %v3030 = vmul.f32 %v3025, %v3029
          %vm3031 = vweird.f32 %v2854
          %vm3032 = vweird.f32 %v3025
          %vm3033 = vmor %vm3031, %vm3032
          %v3034 = vsel %vm3033, %v3025, %v3030
          %v3035 = vrsqrt.pop %v2855
          %v3036 = vmul.f32 %v3035, %v2855
          %v3037 = vmul.f32 %v3036, %v3035
          %v3038 = vmul.f32 0.5, %v3037
          %v3039 = vsub.f32 1.5, %v3038
          %v3040 = vmul.f32 %v3035, %v3039
          %vm3041 = vweird.f32 %v2855
          %vm3042 = vweird.f32 %v3035
          %vm3043 = vmor %vm3041, %vm3042
          %v3044 = vsel %vm3043, %v3035, %v3040
          %v3045 = vrsqrt.pop %v2856
          %v3046 = vmul.f32 %v3045, %v2856
          %v3047 = vmul.f32 %v3046, %v3045
          %v3048 = vmul.f32 0.5, %v3047
          %v3049 = vsub.f32 1.5, %v3048
          %v3050 = vmul.f32 %v3045, %v3049
          %vm3051 = vweird.f32 %v2856
          %vm3052 = vweird.f32 %v3045
          %vm3053 = vmor %vm3051, %vm3052
          %v3054 = vsel %vm3053, %v3045, %v3050
          %v3055 = vrsqrt.pop %v2857
          %v3056 = vmul.f32 %v3055, %v2857
          %v3057 = vmul.f32 %v3056, %v3055
          %v3058 = vmul.f32 0.5, %v3057
          %v3059 = vsub.f32 1.5, %v3058
          %v3060 = vmul.f32 %v3055, %v3059
          %vm3061 = vweird.f32 %v2857
          %vm3062 = vweird.f32 %v3055
          %vm3063 = vmor %vm3061, %vm3062
          %v3064 = vsel %vm3063, %v3055, %v3060
          %v3065 = vrsqrt.pop %v2858
          %v3066 = vmul.f32 %v3065, %v2858
          %v3067 = vmul.f32 %v3066, %v3065
          %v3068 = vmul.f32 0.5, %v3067
          %v3069 = vsub.f32 1.5, %v3068
          %v3070 = vmul.f32 %v3065, %v3069
          %vm3071 = vweird.f32 %v2858
          %vm3072 = vweird.f32 %v3065
          %vm3073 = vmor %vm3071, %vm3072
          %v3074 = vsel %vm3073, %v3065, %v3070
          %v3075 = vrsqrt.pop %v2859
          %v3076 = vmul.f32 %v3075, %v2859
          %v3077 = vmul.f32 %v3076, %v3075
          %v3078 = vmul.f32 0.5, %v3077
          %v3079 = vsub.f32 1.5, %v3078
          %v3080 = vmul.f32 %v3075, %v3079
          %vm3081 = vweird.f32 %v2859
          %vm3082 = vweird.f32 %v3075
          %vm3083 = vmor %vm3081, %vm3082
          %v3084 = vsel %vm3083, %v3075, %v3080
          %v3085 = vrsqrt.pop %v2860
          %v3086 = vmul.f32 %v3085, %v2860
          %v3087 = vmul.f32 %v3086, %v3085
          %v3088 = vmul.f32 0.5, %v3087
          %v3089 = vsub.f32 1.5, %v3088
          %v3090 = vmul.f32 %v3085, %v3089
          %vm3091 = vweird.f32 %v2860
          %vm3092 = vweird.f32 %v3085
          %vm3093 = vmor %vm3091, %vm3092
          %v3094 = vsel %vm3093, %v3085, %v3090
          %v3095 = vrsqrt.pop %v2861
          %v3096 = vmul.f32 %v3095, %v2861
          %v3097 = vmul.f32 %v3096, %v3095
          %v3098 = vmul.f32 0.5, %v3097
          %v3099 = vsub.f32 1.5, %v3098
          %v3100 = vmul.f32 %v3095, %v3099
          %vm3101 = vweird.f32 %v2861
          %vm3102 = vweird.f32 %v3095
          %vm3103 = vmor %vm3101, %vm3102
          %v3104 = vsel %vm3103, %v3095, %v3100
          %v3105 = vrsqrt.pop %v2862
          %v3106 = vmul.f32 %v3105, %v2862
          %v3107 = vmul.f32 %v3106, %v3105
          %v3108 = vmul.f32 0.5, %v3107
          %v3109 = vsub.f32 1.5, %v3108
          %v3110 = vmul.f32 %v3105, %v3109
          %vm3111 = vweird.f32 %v2862
          %vm3112 = vweird.f32 %v3105
          %vm3113 = vmor %vm3111, %vm3112
          %v3114 = vsel %vm3113, %v3105, %v3110
          %v3115 = vrsqrt.pop %v2863
          %v3116 = vmul.f32 %v3115, %v2863
          %v3117 = vmul.f32 %v3116, %v3115
          %v3118 = vmul.f32 0.5, %v3117
          %v3119 = vsub.f32 1.5, %v3118
          %v3120 = vmul.f32 %v3115, %v3119
          %vm3121 = vweird.f32 %v2863
          %vm3122 = vweird.f32 %v3115
          %vm3123 = vmor %vm3121, %vm3122
          %v3124 = vsel %vm3123, %v3115, %v3120
          %v3125 = vrsqrt.pop %v2864
          %v3126 = vmul.f32 %v3125, %v2864
          %v3127 = vmul.f32 %v3126, %v3125
          %v3128 = vmul.f32 0.5, %v3127
          %v3129 = vsub.f32 1.5, %v3128
          %v3130 = vmul.f32 %v3125, %v3129
          %vm3131 = vweird.f32 %v2864
          %vm3132 = vweird.f32 %v3125
          %vm3133 = vmor %vm3131, %vm3132
          %v3134 = vsel %vm3133, %v3125, %v3130
          %v3135 = vmul.f32 %v2811, %v2874
          %v3136 = vmul.f32 %v2812, %v2884
          %v3137 = vmul.f32 %v2813, %v2894
          %v3138 = vmul.f32 %v2814, %v2904
          %v3139 = vmul.f32 %v2815, %v2914
          %v3140 = vmul.f32 %v2816, %v2924
          %v3141 = vmul.f32 %v2817, %v2934
          %v3142 = vmul.f32 %v2818, %v2944
          %v3143 = vmul.f32 %v2819, %v2954
          %v3144 = vmul.f32 %v2820, %v2964
          %v3145 = vmul.f32 %v2821, %v2974
          %v3146 = vmul.f32 %v2822, %v2984
          %v3147 = vmul.f32 %v2823, %v2994
          %v3148 = vmul.f32 %v2824, %v3004
          %v3149 = vmul.f32 %v2825, %v3014
          %v3150 = vmul.f32 %v2826, %v3024
          %v3151 = vmul.f32 %v2827, %v3034
          %v3152 = vmul.f32 %v2828, %v3044
          %v3153 = vmul.f32 %v2829, %v3054
          %v3154 = vmul.f32 %v2830, %v3064
          %v3155 = vmul.f32 %v2831, %v3074
          %v3156 = vmul.f32 %v2832, %v3084
          %v3157 = vmul.f32 %v2833, %v3094
          %v3158 = vmul.f32 %v2834, %v3104
          %v3159 = vmul.f32 %v2835, %v3114
          %v3160 = vmul.f32 %v2836, %v3124
          %v3161 = vmul.f32 %v2837, %v3134
          %v3162 = vld [vmem:[%s5] sm:$0xff]
          %v3163 = vld [vmem:[%s5 + $0x8] sm:$0xff]
          %v3164 = vld [vmem:[%s5 + $0x10] sm:$0xff]
          %v3165 = vld [vmem:[%s5 + $0x18] sm:$0xff]
          %v3166 = vld [vmem:[%s5 + $0x20] sm:$0xff]
          %v3167 = vld [vmem:[%s5 + $0x28] sm:$0xff]
          %v3168 = vld [vmem:[%s5 + $0x30] sm:$0xff]
          %v3169 = vld [vmem:[%s5 + $0x38] sm:$0xff]
          %v3170 = vld [vmem:[%s5 + $0x40] sm:$0xff]
          %v3171 = vld [vmem:[%s5 + $0x48] sm:$0xff]
          %v3172 = vld [vmem:[%s5 + $0x50] sm:$0xff]
          %v3173 = vld [vmem:[%s5 + $0x58] sm:$0xff]
          %v3174 = vld [vmem:[%s5 + $0x60] sm:$0xff]
          %v3175 = vld [vmem:[%s5 + $0x68] sm:$0xff]
          %v3176 = vld [vmem:[%s5 + $0x70] sm:$0xff]
          %v3177 = vld [vmem:[%s5 + $0x78] sm:$0xff]
          %v3178 = vld [vmem:[%s5 + $0x80] sm:$0xff]
          %v3179 = vld [vmem:[%s5 + $0x88] sm:$0xff]
          %v3180 = vld [vmem:[%s5 + $0x90] sm:$0xff]
          %v3181 = vld [vmem:[%s5 + $0x98] sm:$0xff]
          %v3182 = vld [vmem:[%s5 + $0xa0] sm:$0xff]
          %v3183 = vld [vmem:[%s5 + $0xa8] sm:$0xff]
          %v3184 = vld [vmem:[%s5 + $0xb0] sm:$0xff]
          %v3185 = vld [vmem:[%s5 + $0xb8] sm:$0xff]
          %v3186 = vld [vmem:[%s5 + $0xc0] sm:$0xff]
          %v3187 = vld [vmem:[%s5 + $0xc8] sm:$0xff]
          %v3188 = vld [vmem:[%s5 + $0xd0] sm:$0xff]
          %v3189 = vmul.f32 %v2784, %v3135
          %v3190 = vmul.f32 %v2785, %v3136
          %v3191 = vmul.f32 %v2786, %v3137
          %v3192 = vmul.f32 %v2787, %v3138
          %v3193 = vmul.f32 %v2788, %v3139
          %v3194 = vmul.f32 %v2789, %v3140
          %v3195 = vmul.f32 %v2790, %v3141
          %v3196 = vmul.f32 %v2791, %v3142
          %v3197 = vmul.f32 %v2792, %v3143
          %v3198 = vmul.f32 %v2793, %v3144
          %v3199 = vmul.f32 %v2794, %v3145
          %v3200 = vmul.f32 %v2795, %v3146
          %v3201 = vmul.f32 %v2796, %v3147
          %v3202 = vmul.f32 %v2797, %v3148
          %v3203 = vmul.f32 %v2798, %v3149
          %v3204 = vmul.f32 %v2799, %v3150
          %v3205 = vmul.f32 %v2800, %v3151
          %v3206 = vmul.f32 %v2801, %v3152
          %v3207 = vmul.f32 %v2802, %v3153
          %v3208 = vmul.f32 %v2803, %v3154
          %v3209 = vmul.f32 %v2804, %v3155
          %v3210 = vmul.f32 %v2805, %v3156
          %v3211 = vmul.f32 %v2806, %v3157
          %v3212 = vmul.f32 %v2807, %v3158
          %v3213 = vmul.f32 %v2808, %v3159
          %v3214 = vmul.f32 %v2809, %v3160
          %v3215 = vmul.f32 %v2810, %v3161
          %v3216 = vsub.f32 %v3162, %v3189
          %v3217 = vsub.f32 %v3163, %v3190
          %v3218 = vsub.f32 %v3164, %v3191
          %v3219 = vsub.f32 %v3165, %v3192
          %v3220 = vsub.f32 %v3166, %v3193
          %v3221 = vsub.f32 %v3167, %v3194
          %v3222 = vsub.f32 %v3168, %v3195
          %v3223 = vsub.f32 %v3169, %v3196
          %v3224 = vsub.f32 %v3170, %v3197
          %v3225 = vsub.f32 %v3171, %v3198
          %v3226 = vsub.f32 %v3172, %v3199
          %v3227 = vsub.f32 %v3173, %v3200
          %v3228 = vsub.f32 %v3174, %v3201
          %v3229 = vsub.f32 %v3175, %v3202
          %v3230 = vsub.f32 %v3176, %v3203
          %v3231 = vsub.f32 %v3177, %v3204
          %v3232 = vsub.f32 %v3178, %v3205
          %v3233 = vsub.f32 %v3179, %v3206
          %v3234 = vsub.f32 %v3180, %v3207
          %v3235 = vsub.f32 %v3181, %v3208
          %v3236 = vsub.f32 %v3182, %v3209
          %v3237 = vsub.f32 %v3183, %v3210
          %v3238 = vsub.f32 %v3184, %v3211
          %v3239 = vsub.f32 %v3185, %v3212
          %v3240 = vsub.f32 %v3186, %v3213
          %v3241 = vsub.f32 %v3187, %v3214
          %v3242 = vsub.f32 %v3188, %v3215
          %3243 = vst.msk [vmem:[#allocation5] sm:$0xff] %vm2293, %v3216
          %3244 = vst.msk [vmem:[#allocation5 + $0x8] sm:$0xff] %vm2293, %v3217
          %3245 = vst.msk [vmem:[#allocation5 + $0x10] sm:$0xff] %vm2293, %v3218
          %3246 = vst.msk [vmem:[#allocation5 + $0x18] sm:$0xff] %vm2293, %v3219
          %3247 = vst.msk [vmem:[#allocation5 + $0x20] sm:$0xff] %vm2293, %v3220
          %3248 = vst.msk [vmem:[#allocation5 + $0x28] sm:$0xff] %vm2293, %v3221
          %3249 = vst.msk [vmem:[#allocation5 + $0x30] sm:$0xff] %vm2293, %v3222
          %3250 = vst.msk [vmem:[#allocation5 + $0x38] sm:$0xff] %vm2293, %v3223
          %3251 = vst.msk [vmem:[#allocation5 + $0x40] sm:$0xff] %vm2293, %v3224
          %3252 = vst.msk [vmem:[#allocation5 + $0x48] sm:$0xff] %vm2293, %v3225
          %3253 = vst.msk [vmem:[#allocation5 + $0x50] sm:$0xff] %vm2293, %v3226
          %3254 = vst.msk [vmem:[#allocation5 + $0x58] sm:$0xff] %vm2293, %v3227
          %3255 = vst.msk [vmem:[#allocation5 + $0x60] sm:$0xff] %vm2293, %v3228
          %3256 = vst.msk [vmem:[#allocation5 + $0x68] sm:$0xff] %vm2293, %v3229
          %3257 = vst.msk [vmem:[#allocation5 + $0x70] sm:$0xff] %vm2293, %v3230
          %3258 = vst.msk [vmem:[#allocation5 + $0x78] sm:$0xff] %vm2293, %v3231
          %3259 = vst.msk [vmem:[#allocation5 + $0x80] sm:$0xff] %vm2293, %v3232
          %3260 = vst.msk [vmem:[#allocation5 + $0x88] sm:$0xff] %vm2293, %v3233
          %3261 = vst.msk [vmem:[#allocation5 + $0x90] sm:$0xff] %vm2293, %v3234
          %3262 = vst.msk [vmem:[#allocation5 + $0x98] sm:$0xff] %vm2293, %v3235
          %3263 = vst.msk [vmem:[#allocation5 + $0xa0] sm:$0xff] %vm2293, %v3236
          %3264 = vst.msk [vmem:[#allocation5 + $0xa8] sm:$0xff] %vm2293, %v3237
          %3265 = vst.msk [vmem:[#allocation5 + $0xb0] sm:$0xff] %vm2293, %v3238
          %3266 = vst.msk [vmem:[#allocation5 + $0xb8] sm:$0xff] %vm2293, %v3239
          %3267 = vst.msk [vmem:[#allocation5 + $0xc0] sm:$0xff] %vm2293, %v3240
          %3268 = vst.msk [vmem:[#allocation5 + $0xc8] sm:$0xff] %vm2293, %v3241
          %3269 = vst.msk [vmem:[#allocation5 + $0xd0] sm:$0xff] %vm2293, %v3242
          %v3270 = vld [vmem:[%s3] sm:$0xff]
          %v3271 = vld [vmem:[%s3 + $0x8] sm:$0xff]
          %v3272 = vld [vmem:[%s3 + $0x10] sm:$0xff]
          %v3273 = vld [vmem:[%s3 + $0x18] sm:$0xff]
          %v3274 = vld [vmem:[%s3 + $0x20] sm:$0xff]
          %v3275 = vld [vmem:[%s3 + $0x28] sm:$0xff]
          %v3276 = vld [vmem:[%s3 + $0x30] sm:$0xff]
          %v3277 = vld [vmem:[%s3 + $0x38] sm:$0xff]
          %v3278 = vld [vmem:[%s3 + $0x40] sm:$0xff]
          %v3279 = vld [vmem:[%s3 + $0x48] sm:$0xff]
          %v3280 = vld [vmem:[%s3 + $0x50] sm:$0xff]
          %v3281 = vld [vmem:[%s3 + $0x58] sm:$0xff]
          %v3282 = vld [vmem:[%s3 + $0x60] sm:$0xff]
          %v3283 = vld [vmem:[%s3 + $0x68] sm:$0xff]
          %v3284 = vld [vmem:[%s3 + $0x70] sm:$0xff]
          %v3285 = vld [vmem:[%s3 + $0x78] sm:$0xff]
          %v3286 = vld [vmem:[%s3 + $0x80] sm:$0xff]
          %v3287 = vld [vmem:[%s3 + $0x88] sm:$0xff]
          %v3288 = vld [vmem:[%s3 + $0x90] sm:$0xff]
          %v3289 = vld [vmem:[%s3 + $0x98] sm:$0xff]
          %v3290 = vld [vmem:[%s3 + $0xa0] sm:$0xff]
          %v3291 = vld [vmem:[%s3 + $0xa8] sm:$0xff]
          %v3292 = vld [vmem:[%s3 + $0xb0] sm:$0xff]
          %v3293 = vld [vmem:[%s3 + $0xb8] sm:$0xff]
          %v3294 = vld [vmem:[%s3 + $0xc0] sm:$0xff]
          %v3295 = vld [vmem:[%s3 + $0xc8] sm:$0xff]
          %v3296 = vld [vmem:[%s3 + $0xd0] sm:$0xff]
          %v3297 = vld [vmem:[%s3 + $0xd8] sm:$0xff]
          %v3298 = vld [vmem:[%s3 + $0xe0] sm:$0xff]
          %v3299 = vld [vmem:[%s3 + $0xe8] sm:$0xff]
          %v3300 = vld [vmem:[%s3 + $0xf0] sm:$0xff]
          %v3301 = vld [vmem:[%s3 + $0xf8] sm:$0xff]
          %v3302 = vld [vmem:[%s3 + $0x100] sm:$0xff]
          %v3303 = vld [vmem:[%s3 + $0x108] sm:$0xff]
          %v3304 = vld [vmem:[%s3 + $0x110] sm:$0xff]
          %v3305 = vld [vmem:[%s3 + $0x118] sm:$0xff]
          %v3306 = vld [vmem:[%s3 + $0x120] sm:$0xff]
          %v3307 = vld [vmem:[%s3 + $0x128] sm:$0xff]
          %v3308 = vld [vmem:[%s3 + $0x130] sm:$0xff]
          %v3309 = vld [vmem:[%s3 + $0x138] sm:$0xff]
          %v3310 = vld [vmem:[%s3 + $0x140] sm:$0xff]
          %v3311 = vld [vmem:[%s3 + $0x148] sm:$0xff]
          %v3312 = vld [vmem:[%s3 + $0x150] sm:$0xff]
          %v3313 = vld [vmem:[%s3 + $0x158] sm:$0xff]
          %v3314 = vld [vmem:[%s3 + $0x160] sm:$0xff]
          %v3315 = vld [vmem:[%s3 + $0x168] sm:$0xff]
          %v3316 = vld [vmem:[%s3 + $0x170] sm:$0xff]
          %v3317 = vld [vmem:[%s3 + $0x178] sm:$0xff]
          %v3318 = vld [vmem:[%s3 + $0x180] sm:$0xff]
          %v3319 = vld [vmem:[%s3 + $0x188] sm:$0xff]
          %v3320 = vld [vmem:[%s3 + $0x190] sm:$0xff]
          %v3321 = vld [vmem:[%s3 + $0x198] sm:$0xff]
          %v3322 = vld [vmem:[%s3 + $0x1a0] sm:$0xff]
          %v3323 = vld [vmem:[%s3 + $0x1a8] sm:$0xff]
          %3325 = vset.pattern.permute.xlu0 0
          %3326 = vperm.xlu0 %3325, %v3135
          %v3327 = vpop.permute.xlu0 %3326
          %3330 = vset.pattern.permute.xlu0 0
          %3331 = vperm.xlu0 %3330, %v3136
          %v3332 = vpop.permute.xlu0 %3331
          %3335 = vset.pattern.permute.xlu0 0
          %3336 = vperm.xlu0 %3335, %v3137
          %v3337 = vpop.permute.xlu0 %3336
          %3340 = vset.pattern.permute.xlu0 0
          %3341 = vperm.xlu0 %3340, %v3138
          %v3342 = vpop.permute.xlu0 %3341
          %3345 = vset.pattern.permute.xlu0 0
          %3346 = vperm.xlu0 %3345, %v3139
          %v3347 = vpop.permute.xlu0 %3346
          %3350 = vset.pattern.permute.xlu0 0
          %3351 = vperm.xlu0 %3350, %v3140
          %v3352 = vpop.permute.xlu0 %3351
          %3355 = vset.pattern.permute.xlu0 0
          %3356 = vperm.xlu0 %3355, %v3141
          %v3357 = vpop.permute.xlu0 %3356
          %3360 = vset.pattern.permute.xlu0 0
          %3361 = vperm.xlu0 %3360, %v3142
          %v3362 = vpop.permute.xlu0 %3361
          %3365 = vset.pattern.permute.xlu0 0
          %3366 = vperm.xlu0 %3365, %v3143
          %v3367 = vpop.permute.xlu0 %3366
          %3370 = vset.pattern.permute.xlu0 0
          %3371 = vperm.xlu0 %3370, %v3144
          %v3372 = vpop.permute.xlu0 %3371
          %3375 = vset.pattern.permute.xlu0 0
          %3376 = vperm.xlu0 %3375, %v3145
          %v3377 = vpop.permute.xlu0 %3376
          %3380 = vset.pattern.permute.xlu0 0
          %3381 = vperm.xlu0 %3380, %v3146
          %v3382 = vpop.permute.xlu0 %3381
          %3385 = vset.pattern.permute.xlu0 0
          %3386 = vperm.xlu0 %3385, %v3147
          %v3387 = vpop.permute.xlu0 %3386
          %3390 = vset.pattern.permute.xlu0 0
          %3391 = vperm.xlu0 %3390, %v3148
          %v3392 = vpop.permute.xlu0 %3391
          %3395 = vset.pattern.permute.xlu0 0
          %3396 = vperm.xlu0 %3395, %v3149
          %v3397 = vpop.permute.xlu0 %3396
          %3400 = vset.pattern.permute.xlu0 0
          %3401 = vperm.xlu0 %3400, %v3150
          %v3402 = vpop.permute.xlu0 %3401
          %3405 = vset.pattern.permute.xlu0 0
          %3406 = vperm.xlu0 %3405, %v3151
          %v3407 = vpop.permute.xlu0 %3406
          %3410 = vset.pattern.permute.xlu0 0
          %3411 = vperm.xlu0 %3410, %v3152
          %v3412 = vpop.permute.xlu0 %3411
          %3415 = vset.pattern.permute.xlu0 0
          %3416 = vperm.xlu0 %3415, %v3153
          %v3417 = vpop.permute.xlu0 %3416
          %3420 = vset.pattern.permute.xlu0 0
          %3421 = vperm.xlu0 %3420, %v3154
          %v3422 = vpop.permute.xlu0 %3421
          %3425 = vset.pattern.permute.xlu0 0
          %3426 = vperm.xlu0 %3425, %v3155
          %v3427 = vpop.permute.xlu0 %3426
          %3430 = vset.pattern.permute.xlu0 0
          %3431 = vperm.xlu0 %3430, %v3156
          %v3432 = vpop.permute.xlu0 %3431
          %3435 = vset.pattern.permute.xlu0 0
          %3436 = vperm.xlu0 %3435, %v3157
          %v3437 = vpop.permute.xlu0 %3436
          %3440 = vset.pattern.permute.xlu0 0
          %3441 = vperm.xlu0 %3440, %v3158
          %v3442 = vpop.permute.xlu0 %3441
          %3445 = vset.pattern.permute.xlu0 0
          %3446 = vperm.xlu0 %3445, %v3159
          %v3447 = vpop.permute.xlu0 %3446
          %3450 = vset.pattern.permute.xlu0 0
          %3451 = vperm.xlu0 %3450, %v3160
          %v3452 = vpop.permute.xlu0 %3451
          %3455 = vset.pattern.permute.xlu0 0
          %3456 = vperm.xlu0 %3455, %v3161
          %v3457 = vpop.permute.xlu0 %3456
          %v3459 = vmul.f32 %v3270, %v3327
          %v3460 = vmul.f32 %v3271, %v3327
          %v3461 = vmul.f32 %v3272, %v3332
          %v3462 = vmul.f32 %v3273, %v3332
          %v3463 = vmul.f32 %v3274, %v3337
          %v3464 = vmul.f32 %v3275, %v3337
          %v3465 = vmul.f32 %v3276, %v3342
          %v3466 = vmul.f32 %v3277, %v3342
          %v3467 = vmul.f32 %v3278, %v3347
          %v3468 = vmul.f32 %v3279, %v3347
          %v3469 = vmul.f32 %v3280, %v3352
          %v3470 = vmul.f32 %v3281, %v3352
          %v3471 = vmul.f32 %v3282, %v3357
          %v3472 = vmul.f32 %v3283, %v3357
          %v3473 = vmul.f32 %v3284, %v3362
          %v3474 = vmul.f32 %v3285, %v3362
          %v3475 = vmul.f32 %v3286, %v3367
          %v3476 = vmul.f32 %v3287, %v3367
          %v3477 = vmul.f32 %v3288, %v3372
          %v3478 = vmul.f32 %v3289, %v3372
          %v3479 = vmul.f32 %v3290, %v3377
          %v3480 = vmul.f32 %v3291, %v3377
          %v3481 = vmul.f32 %v3292, %v3382
          %v3482 = vmul.f32 %v3293, %v3382
          %v3483 = vmul.f32 %v3294, %v3387
          %v3484 = vmul.f32 %v3295, %v3387
          %v3485 = vmul.f32 %v3296, %v3392
          %v3486 = vmul.f32 %v3297, %v3392
          %v3487 = vmul.f32 %v3298, %v3397
          %v3488 = vmul.f32 %v3299, %v3397
          %v3489 = vmul.f32 %v3300, %v3402
          %v3490 = vmul.f32 %v3301, %v3402
          %v3491 = vmul.f32 %v3302, %v3407
          %v3492 = vmul.f32 %v3303, %v3407
          %v3493 = vmul.f32 %v3304, %v3412
          %v3494 = vmul.f32 %v3305, %v3412
          %v3495 = vmul.f32 %v3306, %v3417
          %v3496 = vmul.f32 %v3307, %v3417
          %v3497 = vmul.f32 %v3308, %v3422
          %v3498 = vmul.f32 %v3309, %v3422
          %v3499 = vmul.f32 %v3310, %v3427
          %v3500 = vmul.f32 %v3311, %v3427
          %v3501 = vmul.f32 %v3312, %v3432
          %v3502 = vmul.f32 %v3313, %v3432
          %v3503 = vmul.f32 %v3314, %v3437
          %v3504 = vmul.f32 %v3315, %v3437
          %v3505 = vmul.f32 %v3316, %v3442
          %v3506 = vmul.f32 %v3317, %v3442
          %v3507 = vmul.f32 %v3318, %v3447
          %v3508 = vmul.f32 %v3319, %v3447
          %v3509 = vmul.f32 %v3320, %v3452
          %v3510 = vmul.f32 %v3321, %v3452
          %v3511 = vmul.f32 %v3322, %v3457
          %v3512 = vmul.f32 %v3323, %v3457
          %3513 = vst [vmem:[#allocation6] sm:$0xff] %v3459
          %3514 = vst.msk [vmem:[#allocation6 + $0x8] sm:$0xff] %vm1157, %v3460
          %3515 = vst [vmem:[#allocation6 + $0x10] sm:$0xff] %v3461
          %3516 = vst.msk [vmem:[#allocation6 + $0x18] sm:$0xff] %vm1157, %v3462
          %3517 = vst [vmem:[#allocation6 + $0x20] sm:$0xff] %v3463
          %3518 = vst.msk [vmem:[#allocation6 + $0x28] sm:$0xff] %vm1157, %v3464
          %3519 = vst [vmem:[#allocation6 + $0x30] sm:$0xff] %v3465
          %3520 = vst.msk [vmem:[#allocation6 + $0x38] sm:$0xff] %vm1157, %v3466
          %3521 = vst [vmem:[#allocation6 + $0x40] sm:$0xff] %v3467
          %3522 = vst.msk [vmem:[#allocation6 + $0x48] sm:$0xff] %vm1157, %v3468
          %3523 = vst [vmem:[#allocation6 + $0x50] sm:$0xff] %v3469
          %3524 = vst.msk [vmem:[#allocation6 + $0x58] sm:$0xff] %vm1157, %v3470
          %3525 = vst [vmem:[#allocation6 + $0x60] sm:$0xff] %v3471
          %3526 = vst.msk [vmem:[#allocation6 + $0x68] sm:$0xff] %vm1157, %v3472
          %3527 = vst [vmem:[#allocation6 + $0x70] sm:$0xff] %v3473
          %3528 = vst.msk [vmem:[#allocation6 + $0x78] sm:$0xff] %vm1157, %v3474
          %3529 = vst [vmem:[#allocation6 + $0x80] sm:$0xff] %v3475
          %3530 = vst.msk [vmem:[#allocation6 + $0x88] sm:$0xff] %vm1157, %v3476
          %3531 = vst [vmem:[#allocation6 + $0x90] sm:$0xff] %v3477
          %3532 = vst.msk [vmem:[#allocation6 + $0x98] sm:$0xff] %vm1157, %v3478
          %3533 = vst [vmem:[#allocation6 + $0xa0] sm:$0xff] %v3479
          %3534 = vst.msk [vmem:[#allocation6 + $0xa8] sm:$0xff] %vm1157, %v3480
          %3535 = vst [vmem:[#allocation6 + $0xb0] sm:$0xff] %v3481
          %3536 = vst.msk [vmem:[#allocation6 + $0xb8] sm:$0xff] %vm1157, %v3482
          %3537 = vst [vmem:[#allocation6 + $0xc0] sm:$0xff] %v3483
          %3538 = vst.msk [vmem:[#allocation6 + $0xc8] sm:$0xff] %vm1157, %v3484
          %3539 = vst [vmem:[#allocation6 + $0xd0] sm:$0xff] %v3485
          %3540 = vst.msk [vmem:[#allocation6 + $0xd8] sm:$0xff] %vm1157, %v3486
          %3541 = vst [vmem:[#allocation6 + $0xe0] sm:$0xff] %v3487
          %3542 = vst.msk [vmem:[#allocation6 + $0xe8] sm:$0xff] %vm1157, %v3488
          %3543 = vst [vmem:[#allocation6 + $0xf0] sm:$0xff] %v3489
          %3544 = vst.msk [vmem:[#allocation6 + $0xf8] sm:$0xff] %vm1157, %v3490
          %3545 = vst [vmem:[#allocation6 + $0x100] sm:$0xff] %v3491
          %3546 = vst.msk [vmem:[#allocation6 + $0x108] sm:$0xff] %vm1157, %v3492
          %3547 = vst [vmem:[#allocation6 + $0x110] sm:$0xff] %v3493
          %3548 = vst.msk [vmem:[#allocation6 + $0x118] sm:$0xff] %vm1157, %v3494
          %3549 = vst [vmem:[#allocation6 + $0x120] sm:$0xff] %v3495
          %3550 = vst.msk [vmem:[#allocation6 + $0x128] sm:$0xff] %vm1157, %v3496
          %3551 = vst [vmem:[#allocation6 + $0x130] sm:$0xff] %v3497
          %3552 = vst.msk [vmem:[#allocation6 + $0x138] sm:$0xff] %vm1157, %v3498
          %3553 = vst [vmem:[#allocation6 + $0x140] sm:$0xff] %v3499
          %3554 = vst.msk [vmem:[#allocation6 + $0x148] sm:$0xff] %vm1157, %v3500
          %3555 = vst [vmem:[#allocation6 + $0x150] sm:$0xff] %v3501
          %3556 = vst.msk [vmem:[#allocation6 + $0x158] sm:$0xff] %vm1157, %v3502
          %3557 = vst [vmem:[#allocation6 + $0x160] sm:$0xff] %v3503
          %3558 = vst.msk [vmem:[#allocation6 + $0x168] sm:$0xff] %vm1157, %v3504
          %3559 = vst [vmem:[#allocation6 + $0x170] sm:$0xff] %v3505
          %3560 = vst.msk [vmem:[#allocation6 + $0x178] sm:$0xff] %vm1157, %v3506
          %3561 = vst [vmem:[#allocation6 + $0x180] sm:$0xff] %v3507
          %3562 = vst.msk [vmem:[#allocation6 + $0x188] sm:$0xff] %vm1157, %v3508
          %3563 = vst [vmem:[#allocation6 + $0x190] sm:$0xff] %v3509
          %3564 = vst.msk [vmem:[#allocation6 + $0x198] sm:$0xff] %vm1157, %v3510
          %3565 = vst [vmem:[#allocation6 + $0x1a0] sm:$0xff] %v3511
          %3566 = vst.msk [vmem:[#allocation6 + $0x1a8] sm:$0xff] %vm1157, %v3512
        $region56: #{tpu_custom_call.1} parent=47 // pred_fallthru
          _
      $region48: #{tpu_custom_call.1} parent=43 // pred_fallthru
        _
      %p3567 = scmp.eq.s32.totalorder %s21, 1
      // Predicated region
      $region57: #{tpu_custom_call.1} parent=43 // pred_check
        %p3568 = pneg %p3567
      $region58: #{tpu_custom_call.1} parent=43 // pred_check_branch
        %3570 = sbr.rel (%p3568) target = $region60
      $region59: #{tpu_custom_call.1} parent=43 // pred_region
        %v3571 = vld [vmem:[#allocation6] sm:$0xff]
        %v3572 = vld [vmem:[#allocation6 + $0x8] sm:$0xff]
        %v3573 = vld [vmem:[#allocation6 + $0x10] sm:$0xff]
        %v3574 = vld [vmem:[#allocation6 + $0x18] sm:$0xff]
        %v3575 = vld [vmem:[#allocation6 + $0x20] sm:$0xff]
        %v3576 = vld [vmem:[#allocation6 + $0x28] sm:$0xff]
        %v3577 = vld [vmem:[#allocation6 + $0x30] sm:$0xff]
        %v3578 = vld [vmem:[#allocation6 + $0x38] sm:$0xff]
        %v3579 = vld [vmem:[#allocation6 + $0x40] sm:$0xff]
        %v3580 = vld [vmem:[#allocation6 + $0x48] sm:$0xff]
        %v3581 = vld [vmem:[#allocation6 + $0x50] sm:$0xff]
        %v3582 = vld [vmem:[#allocation6 + $0x58] sm:$0xff]
        %v3583 = vld [vmem:[#allocation6 + $0x60] sm:$0xff]
        %v3584 = vld [vmem:[#allocation6 + $0x68] sm:$0xff]
        %v3585 = vld [vmem:[#allocation6 + $0x70] sm:$0xff]
        %v3586 = vld [vmem:[#allocation6 + $0x78] sm:$0xff]
        %v3587 = vld [vmem:[#allocation6 + $0x80] sm:$0xff]
        %v3588 = vld [vmem:[#allocation6 + $0x88] sm:$0xff]
        %v3589 = vld [vmem:[#allocation6 + $0x90] sm:$0xff]
        %v3590 = vld [vmem:[#allocation6 + $0x98] sm:$0xff]
        %v3591 = vld [vmem:[#allocation6 + $0xa0] sm:$0xff]
        %v3592 = vld [vmem:[#allocation6 + $0xa8] sm:$0xff]
        %v3593 = vld [vmem:[#allocation6 + $0xb0] sm:$0xff]
        %v3594 = vld [vmem:[#allocation6 + $0xb8] sm:$0xff]
        %v3595 = vld [vmem:[#allocation6 + $0xc0] sm:$0xff]
        %v3596 = vld [vmem:[#allocation6 + $0xc8] sm:$0xff]
        %v3597 = vld [vmem:[#allocation6 + $0xd0] sm:$0xff]
        %v3598 = vld [vmem:[#allocation6 + $0xd8] sm:$0xff]
        %v3599 = vld [vmem:[#allocation6 + $0xe0] sm:$0xff]
        %v3600 = vld [vmem:[#allocation6 + $0xe8] sm:$0xff]
        %v3601 = vld [vmem:[#allocation6 + $0xf0] sm:$0xff]
        %v3602 = vld [vmem:[#allocation6 + $0xf8] sm:$0xff]
        %v3603 = vld [vmem:[#allocation6 + $0x100] sm:$0xff]
        %v3604 = vld [vmem:[#allocation6 + $0x108] sm:$0xff]
        %v3605 = vld [vmem:[#allocation6 + $0x110] sm:$0xff]
        %v3606 = vld [vmem:[#allocation6 + $0x118] sm:$0xff]
        %v3607 = vld [vmem:[#allocation6 + $0x120] sm:$0xff]
        %v3608 = vld [vmem:[#allocation6 + $0x128] sm:$0xff]
        %v3609 = vld [vmem:[#allocation6 + $0x130] sm:$0xff]
        %v3610 = vld [vmem:[#allocation6 + $0x138] sm:$0xff]
        %v3611 = vld [vmem:[#allocation6 + $0x140] sm:$0xff]
        %v3612 = vld [vmem:[#allocation6 + $0x148] sm:$0xff]
        %v3613 = vld [vmem:[#allocation6 + $0x150] sm:$0xff]
        %v3614 = vld [vmem:[#allocation6 + $0x158] sm:$0xff]
        %v3615 = vld [vmem:[#allocation6 + $0x160] sm:$0xff]
        %v3616 = vld [vmem:[#allocation6 + $0x168] sm:$0xff]
        %v3617 = vld [vmem:[#allocation6 + $0x170] sm:$0xff]
        %v3618 = vld [vmem:[#allocation6 + $0x178] sm:$0xff]
        %v3619 = vld [vmem:[#allocation6 + $0x180] sm:$0xff]
        %v3620 = vld [vmem:[#allocation6 + $0x188] sm:$0xff]
        %v3621 = vld [vmem:[#allocation6 + $0x190] sm:$0xff]
        %v3622 = vld [vmem:[#allocation6 + $0x198] sm:$0xff]
        %v3623 = vld [vmem:[#allocation6 + $0x1a0] sm:$0xff]
        %v3624 = vld [vmem:[#allocation6 + $0x1a8] sm:$0xff]
        %vm3625 = vcmask 719872
        %v3627 = vsel %vm3625, %v3572, 0
        %v3630 = vsel %vm3625, %v3574, 0
        %v3633 = vsel %vm3625, %v3576, 0
        %v3636 = vsel %vm3625, %v3578, 0
        %v3639 = vsel %vm3625, %v3580, 0
        %v3642 = vsel %vm3625, %v3582, 0
        %v3645 = vsel %vm3625, %v3584, 0
        %v3648 = vsel %vm3625, %v3586, 0
        %v3651 = vsel %vm3625, %v3588, 0
        %v3654 = vsel %vm3625, %v3590, 0
        %v3657 = vsel %vm3625, %v3592, 0
        %v3660 = vsel %vm3625, %v3594, 0
        %v3663 = vsel %vm3625, %v3596, 0
        %v3666 = vsel %vm3625, %v3598, 0
        %v3669 = vsel %vm3625, %v3600, 0
        %v3672 = vsel %vm3625, %v3602, 0
        %v3675 = vsel %vm3625, %v3604, 0
        %v3678 = vsel %vm3625, %v3606, 0
        %v3681 = vsel %vm3625, %v3608, 0
        %v3684 = vsel %vm3625, %v3610, 0
        %v3687 = vsel %vm3625, %v3612, 0
        %v3690 = vsel %vm3625, %v3614, 0
        %v3693 = vsel %vm3625, %v3616, 0
        %v3696 = vsel %vm3625, %v3618, 0
        %v3699 = vsel %vm3625, %v3620, 0
        %v3702 = vsel %vm3625, %v3622, 0
        %v3705 = vsel %vm3625, %v3624, 0
        %3707 = vmatpush.msra.mxu0 %v1075
        %3708 = vmatpush.msra.mxu0 %v1073
        %3709 = vmatpush.msra.mxu0 %v1071
        %3710 = vmatpush.msra.mxu0 %v1069
        %3711 = vmatpush.msra.mxu0 %v1067
        %3712 = vmatpush.msra.mxu0 %v1065
        %3713 = vmatpush.msra.mxu0 %v1063
        %3714 = vmatpush.msra.mxu0 %v1061
        %3715 = vmatpush.msra.mxu0 %v1059
        %3716 = vmatpush.msra.mxu0 %v1057
        %3717 = vmatpush.msra.mxu0 %v1055
        %3718 = vmatpush.msra.mxu0 %v1053
        %3719 = vmatpush.msra.mxu0 %v1051
        %3720 = vmatpush.msra.mxu0 %v1049
        %3721 = vmatpush.msra.mxu0 %v1047
        %3722 = vmatpush.msra.mxu0 %v1045
        %3723 = vmatmul.f32.gmra.mxu0 %v3571
        %v3724 = vpop.f32.mrf.mxu0
        %v3725 = vadd.f32 0.0, %v3724
        %3726 = vmatmul.f32.gmra.mxu0 %v3573
        %v3727 = vpop.f32.mrf.mxu0
        %v3728 = vadd.f32 0.0, %v3727
        %3729 = vmatmul.f32.gmra.mxu0 %v3575
        %v3730 = vpop.f32.mrf.mxu0
        %v3731 = vadd.f32 0.0, %v3730
        %3732 = vmatmul.f32.gmra.mxu0 %v3577
        %v3733 = vpop.f32.mrf.mxu0
        %v3734 = vadd.f32 0.0, %v3733
        %3735 = vmatmul.f32.gmra.mxu0 %v3579
        %v3736 = vpop.f32.mrf.mxu0
        %v3737 = vadd.f32 0.0, %v3736
        %3738 = vmatmul.f32.gmra.mxu0 %v3581
        %v3739 = vpop.f32.mrf.mxu0
        %v3740 = vadd.f32 0.0, %v3739
        %3741 = vmatmul.f32.gmra.mxu0 %v3583
        %v3742 = vpop.f32.mrf.mxu0
        %v3743 = vadd.f32 0.0, %v3742
        %3744 = vmatmul.f32.gmra.mxu0 %v3585
        %v3745 = vpop.f32.mrf.mxu0
        %v3746 = vadd.f32 0.0, %v3745
        %3747 = vmatmul.f32.gmra.mxu0 %v3587
        %v3748 = vpop.f32.mrf.mxu0
        %v3749 = vadd.f32 0.0, %v3748
        %3750 = vmatmul.f32.gmra.mxu0 %v3589
        %v3751 = vpop.f32.mrf.mxu0
        %v3752 = vadd.f32 0.0, %v3751
        %3753 = vmatmul.f32.gmra.mxu0 %v3591
        %v3754 = vpop.f32.mrf.mxu0
        %v3755 = vadd.f32 0.0, %v3754
        %3756 = vmatmul.f32.gmra.mxu0 %v3593
        %v3757 = vpop.f32.mrf.mxu0
        %v3758 = vadd.f32 0.0, %v3757
        %3759 = vmatmul.f32.gmra.mxu0 %v3595
        %v3760 = vpop.f32.mrf.mxu0
        %v3761 = vadd.f32 0.0, %v3760
        %3762 = vmatmul.f32.gmra.mxu0 %v3597
        %v3763 = vpop.f32.mrf.mxu0
        %v3764 = vadd.f32 0.0, %v3763
        %3765 = vmatmul.f32.gmra.mxu0 %v3599
        %v3766 = vpop.f32.mrf.mxu0
        %v3767 = vadd.f32 0.0, %v3766
        %3768 = vmatmul.f32.gmra.mxu0 %v3601
        %v3769 = vpop.f32.mrf.mxu0
        %v3770 = vadd.f32 0.0, %v3769
        %3771 = vmatmul.f32.gmra.mxu0 %v3603
        %v3772 = vpop.f32.mrf.mxu0
        %v3773 = vadd.f32 0.0, %v3772
        %3774 = vmatmul.f32.gmra.mxu0 %v3605
        %v3775 = vpop.f32.mrf.mxu0
        %v3776 = vadd.f32 0.0, %v3775
        %3777 = vmatmul.f32.gmra.mxu0 %v3607
        %v3778 = vpop.f32.mrf.mxu0
        %v3779 = vadd.f32 0.0, %v3778
        %3780 = vmatmul.f32.gmra.mxu0 %v3609
        %v3781 = vpop.f32.mrf.mxu0
        %v3782 = vadd.f32 0.0, %v3781
        %3783 = vmatmul.f32.gmra.mxu0 %v3611
        %v3784 = vpop.f32.mrf.mxu0
        %v3785 = vadd.f32 0.0, %v3784
        %3786 = vmatmul.f32.gmra.mxu0 %v3613
        %v3787 = vpop.f32.mrf.mxu0
        %v3788 = vadd.f32 0.0, %v3787
        %3789 = vmatmul.f32.gmra.mxu0 %v3615
        %v3790 = vpop.f32.mrf.mxu0
        %v3791 = vadd.f32 0.0, %v3790
        %3792 = vmatmul.f32.gmra.mxu0 %v3617
        %v3793 = vpop.f32.mrf.mxu0
        %v3794 = vadd.f32 0.0, %v3793
        %3795 = vmatmul.f32.gmra.mxu0 %v3619
        %v3796 = vpop.f32.mrf.mxu0
        %v3797 = vadd.f32 0.0, %v3796
        %3798 = vmatmul.f32.gmra.mxu0 %v3621
        %v3799 = vpop.f32.mrf.mxu0
        %v3800 = vadd.f32 0.0, %v3799
        %3801 = vmatmul.f32.gmra.mxu0 %v3623
        %v3802 = vpop.f32.mrf.mxu0
        %v3803 = vadd.f32 0.0, %v3802
        %3804 = vdwg.mxu0
        %3805 = vmatpush.msra.mxu0 0.0
        %3806 = vmatpush.msra.mxu0 0.0
        %3807 = vmatpush.msra.mxu0 0.0
        %3808 = vmatpush.msra.mxu0 0.0
        %3809 = vmatpush.msra.mxu0 0.0
        %3810 = vmatpush.msra.mxu0 %v1097
        %3811 = vmatpush.msra.mxu0 %v1095
        %3812 = vmatpush.msra.mxu0 %v1093
        %3813 = vmatpush.msra.mxu0 %v1091
        %3814 = vmatpush.msra.mxu0 %v1089
        %3815 = vmatpush.msra.mxu0 %v1087
        %3816 = vmatpush.msra.mxu0 %v1085
        %3817 = vmatpush.msra.mxu0 %v1083
        %3818 = vmatpush.msra.mxu0 %v1081
        %3819 = vmatpush.msra.mxu0 %v1079
        %3820 = vmatpush.msra.mxu0 %v1077
        %3821 = vmatmul.f32.gmra.mxu0 %v3627
        %v3822 = vpop.f32.mrf.mxu0
        %v3823 = vadd.f32 %v3725, %v3822
        %3824 = vmatmul.f32.gmra.mxu0 %v3630
        %v3825 = vpop.f32.mrf.mxu0
        %v3826 = vadd.f32 %v3728, %v3825
        %3827 = vmatmul.f32.gmra.mxu0 %v3633
        %v3828 = vpop.f32.mrf.mxu0
        %v3829 = vadd.f32 %v3731, %v3828
        %3830 = vmatmul.f32.gmra.mxu0 %v3636
        %v3831 = vpop.f32.mrf.mxu0
        %v3832 = vadd.f32 %v3734, %v3831
        %3833 = vmatmul.f32.gmra.mxu0 %v3639
        %v3834 = vpop.f32.mrf.mxu0
        %v3835 = vadd.f32 %v3737, %v3834
        %3836 = vmatmul.f32.gmra.mxu0 %v3642
        %v3837 = vpop.f32.mrf.mxu0
        %v3838 = vadd.f32 %v3740, %v3837
        %3839 = vmatmul.f32.gmra.mxu0 %v3645
        %v3840 = vpop.f32.mrf.mxu0
        %v3841 = vadd.f32 %v3743, %v3840
        %3842 = vmatmul.f32.gmra.mxu0 %v3648
        %v3843 = vpop.f32.mrf.mxu0
        %v3844 = vadd.f32 %v3746, %v3843
        %3845 = vmatmul.f32.gmra.mxu0 %v3651
        %v3846 = vpop.f32.mrf.mxu0
        %v3847 = vadd.f32 %v3749, %v3846
        %3848 = vmatmul.f32.gmra.mxu0 %v3654
        %v3849 = vpop.f32.mrf.mxu0
        %v3850 = vadd.f32 %v3752, %v3849
        %3851 = vmatmul.f32.gmra.mxu0 %v3657
        %v3852 = vpop.f32.mrf.mxu0
        %v3853 = vadd.f32 %v3755, %v3852
        %3854 = vmatmul.f32.gmra.mxu0 %v3660
        %v3855 = vpop.f32.mrf.mxu0
        %v3856 = vadd.f32 %v3758, %v3855
        %3857 = vmatmul.f32.gmra.mxu0 %v3663
        %v3858 = vpop.f32.mrf.mxu0
        %v3859 = vadd.f32 %v3761, %v3858
        %3860 = vmatmul.f32.gmra.mxu0 %v3666
        %v3861 = vpop.f32.mrf.mxu0
        %v3862 = vadd.f32 %v3764, %v3861
        %3863 = vmatmul.f32.gmra.mxu0 %v3669
        %v3864 = vpop.f32.mrf.mxu0
        %v3865 = vadd.f32 %v3767, %v3864
        %3866 = vmatmul.f32.gmra.mxu0 %v3672
        %v3867 = vpop.f32.mrf.mxu0
        %v3868 = vadd.f32 %v3770, %v3867
        %3869 = vmatmul.f32.gmra.mxu0 %v3675
        %v3870 = vpop.f32.mrf.mxu0
        %v3871 = vadd.f32 %v3773, %v3870
        %3872 = vmatmul.f32.gmra.mxu0 %v3678
        %v3873 = vpop.f32.mrf.mxu0
        %v3874 = vadd.f32 %v3776, %v3873
        %3875 = vmatmul.f32.gmra.mxu0 %v3681
        %v3876 = vpop.f32.mrf.mxu0
        %v3877 = vadd.f32 %v3779, %v3876
        %3878 = vmatmul.f32.gmra.mxu0 %v3684
        %v3879 = vpop.f32.mrf.mxu0
        %v3880 = vadd.f32 %v3782, %v3879
        %3881 = vmatmul.f32.gmra.mxu0 %v3687
        %v3882 = vpop.f32.mrf.mxu0
        %v3883 = vadd.f32 %v3785, %v3882
        %3884 = vmatmul.f32.gmra.mxu0 %v3690
        %v3885 = vpop.f32.mrf.mxu0
        %v3886 = vadd.f32 %v3788, %v3885
        %3887 = vmatmul.f32.gmra.mxu0 %v3693
        %v3888 = vpop.f32.mrf.mxu0
        %v3889 = vadd.f32 %v3791, %v3888
        %3890 = vmatmul.f32.gmra.mxu0 %v3696
        %v3891 = vpop.f32.mrf.mxu0
        %v3892 = vadd.f32 %v3794, %v3891
        %3893 = vmatmul.f32.gmra.mxu0 %v3699
        %v3894 = vpop.f32.mrf.mxu0
        %v3895 = vadd.f32 %v3797, %v3894
        %3896 = vmatmul.f32.gmra.mxu0 %v3702
        %v3897 = vpop.f32.mrf.mxu0
        %v3898 = vadd.f32 %v3800, %v3897
        %3899 = vmatmul.f32.gmra.mxu0 %v3705
        %v3900 = vpop.f32.mrf.mxu0
        %v3901 = vadd.f32 %v3803, %v3900
        %3902 = vdwg.mxu0
        %3903 = vmatpush.msra.mxu0 %v1076
        %3904 = vmatpush.msra.mxu0 %v1074
        %3905 = vmatpush.msra.mxu0 %v1072
        %3906 = vmatpush.msra.mxu0 %v1070
        %3907 = vmatpush.msra.mxu0 %v1068
        %3908 = vmatpush.msra.mxu0 %v1066
        %3909 = vmatpush.msra.mxu0 %v1064
        %3910 = vmatpush.msra.mxu0 %v1062
        %3911 = vmatpush.msra.mxu0 %v1060
        %3912 = vmatpush.msra.mxu0 %v1058
        %3913 = vmatpush.msra.mxu0 %v1056
        %3914 = vmatpush.msra.mxu0 %v1054
        %3915 = vmatpush.msra.mxu0 %v1052
        %3916 = vmatpush.msra.mxu0 %v1050
        %3917 = vmatpush.msra.mxu0 %v1048
        %3918 = vmatpush.msra.mxu0 %v1046
        %3919 = vmatmul.f32.gmra.mxu0 %v3571
        %v3920 = vpop.f32.mrf.mxu0
        %v3921 = vadd.f32 0.0, %v3920
        %3922 = vmatmul.f32.gmra.mxu0 %v3573
        %v3923 = vpop.f32.mrf.mxu0
        %v3924 = vadd.f32 0.0, %v3923
        %3925 = vmatmul.f32.gmra.mxu0 %v3575
        %v3926 = vpop.f32.mrf.mxu0
        %v3927 = vadd.f32 0.0, %v3926
        %3928 = vmatmul.f32.gmra.mxu0 %v3577
        %v3929 = vpop.f32.mrf.mxu0
        %v3930 = vadd.f32 0.0, %v3929
        %3931 = vmatmul.f32.gmra.mxu0 %v3579
        %v3932 = vpop.f32.mrf.mxu0
        %v3933 = vadd.f32 0.0, %v3932
        %3934 = vmatmul.f32.gmra.mxu0 %v3581
        %v3935 = vpop.f32.mrf.mxu0
        %v3936 = vadd.f32 0.0, %v3935
        %3937 = vmatmul.f32.gmra.mxu0 %v3583
        %v3938 = vpop.f32.mrf.mxu0
        %v3939 = vadd.f32 0.0, %v3938
        %3940 = vmatmul.f32.gmra.mxu0 %v3585
        %v3941 = vpop.f32.mrf.mxu0
        %v3942 = vadd.f32 0.0, %v3941
        %3943 = vmatmul.f32.gmra.mxu0 %v3587
        %v3944 = vpop.f32.mrf.mxu0
        %v3945 = vadd.f32 0.0, %v3944
        %3946 = vmatmul.f32.gmra.mxu0 %v3589
        %v3947 = vpop.f32.mrf.mxu0
        %v3948 = vadd.f32 0.0, %v3947
        %3949 = vmatmul.f32.gmra.mxu0 %v3591
        %v3950 = vpop.f32.mrf.mxu0
        %v3951 = vadd.f32 0.0, %v3950
        %3952 = vmatmul.f32.gmra.mxu0 %v3593
        %v3953 = vpop.f32.mrf.mxu0
        %v3954 = vadd.f32 0.0, %v3953
        %3955 = vmatmul.f32.gmra.mxu0 %v3595
        %v3956 = vpop.f32.mrf.mxu0
        %v3957 = vadd.f32 0.0, %v3956
        %3958 = vmatmul.f32.gmra.mxu0 %v3597
        %v3959 = vpop.f32.mrf.mxu0
        %v3960 = vadd.f32 0.0, %v3959
        %3961 = vmatmul.f32.gmra.mxu0 %v3599
        %v3962 = vpop.f32.mrf.mxu0
        %v3963 = vadd.f32 0.0, %v3962
        %3964 = vmatmul.f32.gmra.mxu0 %v3601
        %v3965 = vpop.f32.mrf.mxu0
        %v3966 = vadd.f32 0.0, %v3965
        %3967 = vmatmul.f32.gmra.mxu0 %v3603
        %v3968 = vpop.f32.mrf.mxu0
        %v3969 = vadd.f32 0.0, %v3968
        %3970 = vmatmul.f32.gmra.mxu0 %v3605
        %v3971 = vpop.f32.mrf.mxu0
        %v3972 = vadd.f32 0.0, %v3971
        %3973 = vmatmul.f32.gmra.mxu0 %v3607
        %v3974 = vpop.f32.mrf.mxu0
        %v3975 = vadd.f32 0.0, %v3974
        %3976 = vmatmul.f32.gmra.mxu0 %v3609
        %v3977 = vpop.f32.mrf.mxu0
        %v3978 = vadd.f32 0.0, %v3977
        %3979 = vmatmul.f32.gmra.mxu0 %v3611
        %v3980 = vpop.f32.mrf.mxu0
        %v3981 = vadd.f32 0.0, %v3980
        %3982 = vmatmul.f32.gmra.mxu0 %v3613
        %v3983 = vpop.f32.mrf.mxu0
        %v3984 = vadd.f32 0.0, %v3983
        %3985 = vmatmul.f32.gmra.mxu0 %v3615
        %v3986 = vpop.f32.mrf.mxu0
        %v3987 = vadd.f32 0.0, %v3986
        %3988 = vmatmul.f32.gmra.mxu0 %v3617
        %v3989 = vpop.f32.mrf.mxu0
        %v3990 = vadd.f32 0.0, %v3989
        %3991 = vmatmul.f32.gmra.mxu0 %v3619
        %v3992 = vpop.f32.mrf.mxu0
        %v3993 = vadd.f32 0.0, %v3992
        %3994 = vmatmul.f32.gmra.mxu0 %v3621
        %v3995 = vpop.f32.mrf.mxu0
        %v3996 = vadd.f32 0.0, %v3995
        %3997 = vmatmul.f32.gmra.mxu0 %v3623
        %v3998 = vpop.f32.mrf.mxu0
        %v3999 = vadd.f32 0.0, %v3998
        %4000 = vdwg.mxu0
        %4001 = vmatpush.msra.mxu0 0.0
        %4002 = vmatpush.msra.mxu0 0.0
        %4003 = vmatpush.msra.mxu0 0.0
        %4004 = vmatpush.msra.mxu0 0.0
        %4005 = vmatpush.msra.mxu0 0.0
        %4006 = vmatpush.msra.mxu0 %v1098
        %4007 = vmatpush.msra.mxu0 %v1096
        %4008 = vmatpush.msra.mxu0 %v1094
        %4009 = vmatpush.msra.mxu0 %v1092
        %4010 = vmatpush.msra.mxu0 %v1090
        %4011 = vmatpush.msra.mxu0 %v1088
        %4012 = vmatpush.msra.mxu0 %v1086
        %4013 = vmatpush.msra.mxu0 %v1084
        %4014 = vmatpush.msra.mxu0 %v1082
        %4015 = vmatpush.msra.mxu0 %v1080
        %4016 = vmatpush.msra.mxu0 %v1078
        %4017 = vmatmul.f32.gmra.mxu0 %v3627
        %v4018 = vpop.f32.mrf.mxu0
        %v4019 = vadd.f32 %v3921, %v4018
        %4020 = vmatmul.f32.gmra.mxu0 %v3630
        %v4021 = vpop.f32.mrf.mxu0
        %v4022 = vadd.f32 %v3924, %v4021
        %4023 = vmatmul.f32.gmra.mxu0 %v3633
        %v4024 = vpop.f32.mrf.mxu0
        %v4025 = vadd.f32 %v3927, %v4024
        %4026 = vmatmul.f32.gmra.mxu0 %v3636
        %v4027 = vpop.f32.mrf.mxu0
        %v4028 = vadd.f32 %v3930, %v4027
        %4029 = vmatmul.f32.gmra.mxu0 %v3639
        %v4030 = vpop.f32.mrf.mxu0
        %v4031 = vadd.f32 %v3933, %v4030
        %4032 = vmatmul.f32.gmra.mxu0 %v3642
        %v4033 = vpop.f32.mrf.mxu0
        %v4034 = vadd.f32 %v3936, %v4033
        %4035 = vmatmul.f32.gmra.mxu0 %v3645
        %v4036 = vpop.f32.mrf.mxu0
        %v4037 = vadd.f32 %v3939, %v4036
        %4038 = vmatmul.f32.gmra.mxu0 %v3648
        %v4039 = vpop.f32.mrf.mxu0
        %v4040 = vadd.f32 %v3942, %v4039
        %4041 = vmatmul.f32.gmra.mxu0 %v3651
        %v4042 = vpop.f32.mrf.mxu0
        %v4043 = vadd.f32 %v3945, %v4042
        %4044 = vmatmul.f32.gmra.mxu0 %v3654
        %v4045 = vpop.f32.mrf.mxu0
        %v4046 = vadd.f32 %v3948, %v4045
        %4047 = vmatmul.f32.gmra.mxu0 %v3657
        %v4048 = vpop.f32.mrf.mxu0
        %v4049 = vadd.f32 %v3951, %v4048
        %4050 = vmatmul.f32.gmra.mxu0 %v3660
        %v4051 = vpop.f32.mrf.mxu0
        %v4052 = vadd.f32 %v3954, %v4051
        %4053 = vmatmul.f32.gmra.mxu0 %v3663
        %v4054 = vpop.f32.mrf.mxu0
        %v4055 = vadd.f32 %v3957, %v4054
        %4056 = vmatmul.f32.gmra.mxu0 %v3666
        %v4057 = vpop.f32.mrf.mxu0
        %v4058 = vadd.f32 %v3960, %v4057
        %4059 = vmatmul.f32.gmra.mxu0 %v3669
        %v4060 = vpop.f32.mrf.mxu0
        %v4061 = vadd.f32 %v3963, %v4060
        %4062 = vmatmul.f32.gmra.mxu0 %v3672
        %v4063 = vpop.f32.mrf.mxu0
        %v4064 = vadd.f32 %v3966, %v4063
        %4065 = vmatmul.f32.gmra.mxu0 %v3675
        %v4066 = vpop.f32.mrf.mxu0
        %v4067 = vadd.f32 %v3969, %v4066
        %4068 = vmatmul.f32.gmra.mxu0 %v3678
        %v4069 = vpop.f32.mrf.mxu0
        %v4070 = vadd.f32 %v3972, %v4069
        %4071 = vmatmul.f32.gmra.mxu0 %v3681
        %v4072 = vpop.f32.mrf.mxu0
        %v4073 = vadd.f32 %v3975, %v4072
        %4074 = vmatmul.f32.gmra.mxu0 %v3684
        %v4075 = vpop.f32.mrf.mxu0
        %v4076 = vadd.f32 %v3978, %v4075
        %4077 = vmatmul.f32.gmra.mxu0 %v3687
        %v4078 = vpop.f32.mrf.mxu0
        %v4079 = vadd.f32 %v3981, %v4078
        %4080 = vmatmul.f32.gmra.mxu0 %v3690
        %v4081 = vpop.f32.mrf.mxu0
        %v4082 = vadd.f32 %v3984, %v4081
        %4083 = vmatmul.f32.gmra.mxu0 %v3693
        %v4084 = vpop.f32.mrf.mxu0
        %v4085 = vadd.f32 %v3987, %v4084
        %4086 = vmatmul.f32.gmra.mxu0 %v3696
        %v4087 = vpop.f32.mrf.mxu0
        %v4088 = vadd.f32 %v3990, %v4087
        %4089 = vmatmul.f32.gmra.mxu0 %v3699
        %v4090 = vpop.f32.mrf.mxu0
        %v4091 = vadd.f32 %v3993, %v4090
        %4092 = vmatmul.f32.gmra.mxu0 %v3702
        %v4093 = vpop.f32.mrf.mxu0
        %v4094 = vadd.f32 %v3996, %v4093
        %4095 = vmatmul.f32.gmra.mxu0 %v3705
        %v4096 = vpop.f32.mrf.mxu0
        %v4097 = vadd.f32 %v3999, %v4096
        %4098 = vdwg.mxu0
        %v4099 = vld [vmem:[%s307] sm:$0xff]
        %v4100 = vld [vmem:[%s307 + $0x8] sm:$0xff]
        %v4101 = vld [vmem:[%s307 + $0x10] sm:$0xff]
        %v4102 = vld [vmem:[%s307 + $0x18] sm:$0xff]
        %v4103 = vld [vmem:[%s307 + $0x20] sm:$0xff]
        %v4104 = vld [vmem:[%s307 + $0x28] sm:$0xff]
        %v4105 = vld [vmem:[%s307 + $0x30] sm:$0xff]
        %v4106 = vld [vmem:[%s307 + $0x38] sm:$0xff]
        %v4107 = vld [vmem:[%s307 + $0x40] sm:$0xff]
        %v4108 = vld [vmem:[%s307 + $0x48] sm:$0xff]
        %v4109 = vld [vmem:[%s307 + $0x50] sm:$0xff]
        %v4110 = vld [vmem:[%s307 + $0x58] sm:$0xff]
        %v4111 = vld [vmem:[%s307 + $0x60] sm:$0xff]
        %v4112 = vld [vmem:[%s307 + $0x68] sm:$0xff]
        %v4113 = vld [vmem:[%s307 + $0x70] sm:$0xff]
        %v4114 = vld [vmem:[%s307 + $0x78] sm:$0xff]
        %v4115 = vld [vmem:[%s307 + $0x80] sm:$0xff]
        %v4116 = vld [vmem:[%s307 + $0x88] sm:$0xff]
        %v4117 = vld [vmem:[%s307 + $0x90] sm:$0xff]
        %v4118 = vld [vmem:[%s307 + $0x98] sm:$0xff]
        %v4119 = vld [vmem:[%s307 + $0xa0] sm:$0xff]
        %v4120 = vld [vmem:[%s307 + $0xa8] sm:$0xff]
        %v4121 = vld [vmem:[%s307 + $0xb0] sm:$0xff]
        %v4122 = vld [vmem:[%s307 + $0xb8] sm:$0xff]
        %v4123 = vld [vmem:[%s307 + $0xc0] sm:$0xff]
        %v4124 = vld [vmem:[%s307 + $0xc8] sm:$0xff]
        %v4125 = vld [vmem:[%s307 + $0xd0] sm:$0xff]
        %v4126 = vld [vmem:[%s307 + $0xd8] sm:$0xff]
        %v4127 = vld [vmem:[%s307 + $0xe0] sm:$0xff]
        %v4128 = vld [vmem:[%s307 + $0xe8] sm:$0xff]
        %v4129 = vld [vmem:[%s307 + $0xf0] sm:$0xff]
        %v4130 = vld [vmem:[%s307 + $0xf8] sm:$0xff]
        %v4131 = vld [vmem:[%s307 + $0x100] sm:$0xff]
        %v4132 = vld [vmem:[%s307 + $0x108] sm:$0xff]
        %v4133 = vld [vmem:[%s307 + $0x110] sm:$0xff]
        %v4134 = vld [vmem:[%s307 + $0x118] sm:$0xff]
        %v4135 = vld [vmem:[%s307 + $0x120] sm:$0xff]
        %v4136 = vld [vmem:[%s307 + $0x128] sm:$0xff]
        %v4137 = vld [vmem:[%s307 + $0x130] sm:$0xff]
        %v4138 = vld [vmem:[%s307 + $0x138] sm:$0xff]
        %v4139 = vld [vmem:[%s307 + $0x140] sm:$0xff]
        %v4140 = vld [vmem:[%s307 + $0x148] sm:$0xff]
        %v4141 = vld [vmem:[%s307 + $0x150] sm:$0xff]
        %v4142 = vld [vmem:[%s307 + $0x158] sm:$0xff]
        %v4143 = vld [vmem:[%s307 + $0x160] sm:$0xff]
        %v4144 = vld [vmem:[%s307 + $0x168] sm:$0xff]
        %v4145 = vld [vmem:[%s307 + $0x170] sm:$0xff]
        %v4146 = vld [vmem:[%s307 + $0x178] sm:$0xff]
        %v4147 = vld [vmem:[%s307 + $0x180] sm:$0xff]
        %v4148 = vld [vmem:[%s307 + $0x188] sm:$0xff]
        %v4149 = vld [vmem:[%s307 + $0x190] sm:$0xff]
        %v4150 = vld [vmem:[%s307 + $0x198] sm:$0xff]
        %v4151 = vld [vmem:[%s307 + $0x1a0] sm:$0xff]
        %v4152 = vld [vmem:[%s307 + $0x1a8] sm:$0xff]
        %v4153 = vadd.f32 %v4099, %v3823
        %v4154 = vadd.f32 %v4100, %v4019
        %v4155 = vadd.f32 %v4101, %v3826
        %v4156 = vadd.f32 %v4102, %v4022
        %v4157 = vadd.f32 %v4103, %v3829
        %v4158 = vadd.f32 %v4104, %v4025
        %v4159 = vadd.f32 %v4105, %v3832
        %v4160 = vadd.f32 %v4106, %v4028
        %v4161 = vadd.f32 %v4107, %v3835
        %v4162 = vadd.f32 %v4108, %v4031
        %v4163 = vadd.f32 %v4109, %v3838
        %v4164 = vadd.f32 %v4110, %v4034
        %v4165 = vadd.f32 %v4111, %v3841
        %v4166 = vadd.f32 %v4112, %v4037
        %v4167 = vadd.f32 %v4113, %v3844
        %v4168 = vadd.f32 %v4114, %v4040
        %v4169 = vadd.f32 %v4115, %v3847
        %v4170 = vadd.f32 %v4116, %v4043
        %v4171 = vadd.f32 %v4117, %v3850
        %v4172 = vadd.f32 %v4118, %v4046
        %v4173 = vadd.f32 %v4119, %v3853
        %v4174 = vadd.f32 %v4120, %v4049
        %v4175 = vadd.f32 %v4121, %v3856
        %v4176 = vadd.f32 %v4122, %v4052
        %v4177 = vadd.f32 %v4123, %v3859
        %v4178 = vadd.f32 %v4124, %v4055
        %v4179 = vadd.f32 %v4125, %v3862
        %v4180 = vadd.f32 %v4126, %v4058
        %v4181 = vadd.f32 %v4127, %v3865
        %v4182 = vadd.f32 %v4128, %v4061
        %v4183 = vadd.f32 %v4129, %v3868
        %v4184 = vadd.f32 %v4130, %v4064
        %v4185 = vadd.f32 %v4131, %v3871
        %v4186 = vadd.f32 %v4132, %v4067
        %v4187 = vadd.f32 %v4133, %v3874
        %v4188 = vadd.f32 %v4134, %v4070
        %v4189 = vadd.f32 %v4135, %v3877
        %v4190 = vadd.f32 %v4136, %v4073
        %v4191 = vadd.f32 %v4137, %v3880
        %v4192 = vadd.f32 %v4138, %v4076
        %v4193 = vadd.f32 %v4139, %v3883
        %v4194 = vadd.f32 %v4140, %v4079
        %v4195 = vadd.f32 %v4141, %v3886
        %v4196 = vadd.f32 %v4142, %v4082
        %v4197 = vadd.f32 %v4143, %v3889
        %v4198 = vadd.f32 %v4144, %v4085
        %v4199 = vadd.f32 %v4145, %v3892
        %v4200 = vadd.f32 %v4146, %v4088
        %v4201 = vadd.f32 %v4147, %v3895
        %v4202 = vadd.f32 %v4148, %v4091
        %v4203 = vadd.f32 %v4149, %v3898
        %v4204 = vadd.f32 %v4150, %v4094
        %v4205 = vadd.f32 %v4151, %v3901
        %v4206 = vadd.f32 %v4152, %v4097
        %v4207 = vld [vmem:[#allocation5] sm:$0xff]
        %v4208 = vld [vmem:[#allocation5 + $0x8] sm:$0xff]
        %v4209 = vld [vmem:[#allocation5 + $0x10] sm:$0xff]
        %v4210 = vld [vmem:[#allocation5 + $0x18] sm:$0xff]
        %v4211 = vld [vmem:[#allocation5 + $0x20] sm:$0xff]
        %v4212 = vld [vmem:[#allocation5 + $0x28] sm:$0xff]
        %v4213 = vld [vmem:[#allocation5 + $0x30] sm:$0xff]
        %v4214 = vld [vmem:[#allocation5 + $0x38] sm:$0xff]
        %v4215 = vld [vmem:[#allocation5 + $0x40] sm:$0xff]
        %v4216 = vld [vmem:[#allocation5 + $0x48] sm:$0xff]
        %v4217 = vld [vmem:[#allocation5 + $0x50] sm:$0xff]
        %v4218 = vld [vmem:[#allocation5 + $0x58] sm:$0xff]
        %v4219 = vld [vmem:[#allocation5 + $0x60] sm:$0xff]
        %v4220 = vld [vmem:[#allocation5 + $0x68] sm:$0xff]
        %v4221 = vld [vmem:[#allocation5 + $0x70] sm:$0xff]
        %v4222 = vld [vmem:[#allocation5 + $0x78] sm:$0xff]
        %v4223 = vld [vmem:[#allocation5 + $0x80] sm:$0xff]
        %v4224 = vld [vmem:[#allocation5 + $0x88] sm:$0xff]
        %v4225 = vld [vmem:[#allocation5 + $0x90] sm:$0xff]
        %v4226 = vld [vmem:[#allocation5 + $0x98] sm:$0xff]
        %v4227 = vld [vmem:[#allocation5 + $0xa0] sm:$0xff]
        %v4228 = vld [vmem:[#allocation5 + $0xa8] sm:$0xff]
        %v4229 = vld [vmem:[#allocation5 + $0xb0] sm:$0xff]
        %v4230 = vld [vmem:[#allocation5 + $0xb8] sm:$0xff]
        %v4231 = vld [vmem:[#allocation5 + $0xc0] sm:$0xff]
        %v4232 = vld [vmem:[#allocation5 + $0xc8] sm:$0xff]
        %v4233 = vld [vmem:[#allocation5 + $0xd0] sm:$0xff]
        %4235 = vset.pattern.permute.xlu0 0
        %4236 = vperm.xlu0 %4235, %v4207
        %v4237 = vpop.permute.xlu0 %4236
        %4240 = vset.pattern.permute.xlu0 0
        %4241 = vperm.xlu0 %4240, %v4208
        %v4242 = vpop.permute.xlu0 %4241
        %4245 = vset.pattern.permute.xlu0 0
        %4246 = vperm.xlu0 %4245, %v4209
        %v4247 = vpop.permute.xlu0 %4246
        %4250 = vset.pattern.permute.xlu0 0
        %4251 = vperm.xlu0 %4250, %v4210
        %v4252 = vpop.permute.xlu0 %4251
        %4255 = vset.pattern.permute.xlu0 0
        %4256 = vperm.xlu0 %4255, %v4211
        %v4257 = vpop.permute.xlu0 %4256
        %4260 = vset.pattern.permute.xlu0 0
        %4261 = vperm.xlu0 %4260, %v4212
        %v4262 = vpop.permute.xlu0 %4261
        %4265 = vset.pattern.permute.xlu0 0
        %4266 = vperm.xlu0 %4265, %v4213
        %v4267 = vpop.permute.xlu0 %4266
        %4270 = vset.pattern.permute.xlu0 0
        %4271 = vperm.xlu0 %4270, %v4214
        %v4272 = vpop.permute.xlu0 %4271
        %4275 = vset.pattern.permute.xlu0 0
        %4276 = vperm.xlu0 %4275, %v4215
        %v4277 = vpop.permute.xlu0 %4276
        %4280 = vset.pattern.permute.xlu0 0
        %4281 = vperm.xlu0 %4280, %v4216
        %v4282 = vpop.permute.xlu0 %4281
        %4285 = vset.pattern.permute.xlu0 0
        %4286 = vperm.xlu0 %4285, %v4217
        %v4287 = vpop.permute.xlu0 %4286
        %4290 = vset.pattern.permute.xlu0 0
        %4291 = vperm.xlu0 %4290, %v4218
        %v4292 = vpop.permute.xlu0 %4291
        %4295 = vset.pattern.permute.xlu0 0
        %4296 = vperm.xlu0 %4295, %v4219
        %v4297 = vpop.permute.xlu0 %4296
        %4300 = vset.pattern.permute.xlu0 0
        %4301 = vperm.xlu0 %4300, %v4220
        %v4302 = vpop.permute.xlu0 %4301
        %4305 = vset.pattern.permute.xlu0 0
        %4306 = vperm.xlu0 %4305, %v4221
        %v4307 = vpop.permute.xlu0 %4306
        %4310 = vset.pattern.permute.xlu0 0
        %4311 = vperm.xlu0 %4310, %v4222
        %v4312 = vpop.permute.xlu0 %4311
        %4315 = vset.pattern.permute.xlu0 0
        %4316 = vperm.xlu0 %4315, %v4223
        %v4317 = vpop.permute.xlu0 %4316
        %4320 = vset.pattern.permute.xlu0 0
        %4321 = vperm.xlu0 %4320, %v4224
        %v4322 = vpop.permute.xlu0 %4321
        %4325 = vset.pattern.permute.xlu0 0
        %4326 = vperm.xlu0 %4325, %v4225
        %v4327 = vpop.permute.xlu0 %4326
        %4330 = vset.pattern.permute.xlu0 0
        %4331 = vperm.xlu0 %4330, %v4226
        %v4332 = vpop.permute.xlu0 %4331
        %4335 = vset.pattern.permute.xlu0 0
        %4336 = vperm.xlu0 %4335, %v4227
        %v4337 = vpop.permute.xlu0 %4336
        %4340 = vset.pattern.permute.xlu0 0
        %4341 = vperm.xlu0 %4340, %v4228
        %v4342 = vpop.permute.xlu0 %4341
        %4345 = vset.pattern.permute.xlu0 0
        %4346 = vperm.xlu0 %4345, %v4229
        %v4347 = vpop.permute.xlu0 %4346
        %4350 = vset.pattern.permute.xlu0 0
        %4351 = vperm.xlu0 %4350, %v4230
        %v4352 = vpop.permute.xlu0 %4351
        %4355 = vset.pattern.permute.xlu0 0
        %4356 = vperm.xlu0 %4355, %v4231
        %v4357 = vpop.permute.xlu0 %4356
        %4360 = vset.pattern.permute.xlu0 0
        %4361 = vperm.xlu0 %4360, %v4232
        %v4362 = vpop.permute.xlu0 %4361
        %4365 = vset.pattern.permute.xlu0 0
        %4366 = vperm.xlu0 %4365, %v4233
        %v4367 = vpop.permute.xlu0 %4366
        %v4369 = vadd.f32 %v4153, %v4237
        %v4370 = vadd.f32 %v4154, %v4237
        %v4371 = vadd.f32 %v4155, %v4242
        %v4372 = vadd.f32 %v4156, %v4242
        %v4373 = vadd.f32 %v4157, %v4247
        %v4374 = vadd.f32 %v4158, %v4247
        %v4375 = vadd.f32 %v4159, %v4252
        %v4376 = vadd.f32 %v4160, %v4252
        %v4377 = vadd.f32 %v4161, %v4257
        %v4378 = vadd.f32 %v4162, %v4257
        %v4379 = vadd.f32 %v4163, %v4262
        %v4380 = vadd.f32 %v4164, %v4262
        %v4381 = vadd.f32 %v4165, %v4267
        %v4382 = vadd.f32 %v4166, %v4267
        %v4383 = vadd.f32 %v4167, %v4272
        %v4384 = vadd.f32 %v4168, %v4272
        %v4385 = vadd.f32 %v4169, %v4277
        %v4386 = vadd.f32 %v4170, %v4277
        %v4387 = vadd.f32 %v4171, %v4282
        %v4388 = vadd.f32 %v4172, %v4282
        %v4389 = vadd.f32 %v4173, %v4287
        %v4390 = vadd.f32 %v4174, %v4287
        %v4391 = vadd.f32 %v4175, %v4292
        %v4392 = vadd.f32 %v4176, %v4292
        %v4393 = vadd.f32 %v4177, %v4297
        %v4394 = vadd.f32 %v4178, %v4297
        %v4395 = vadd.f32 %v4179, %v4302
        %v4396 = vadd.f32 %v4180, %v4302
        %v4397 = vadd.f32 %v4181, %v4307
        %v4398 = vadd.f32 %v4182, %v4307
        %v4399 = vadd.f32 %v4183, %v4312
        %v4400 = vadd.f32 %v4184, %v4312
        %v4401 = vadd.f32 %v4185, %v4317
        %v4402 = vadd.f32 %v4186, %v4317
        %v4403 = vadd.f32 %v4187, %v4322
        %v4404 = vadd.f32 %v4188, %v4322
        %v4405 = vadd.f32 %v4189, %v4327
        %v4406 = vadd.f32 %v4190, %v4327
        %v4407 = vadd.f32 %v4191, %v4332
        %v4408 = vadd.f32 %v4192, %v4332
        %v4409 = vadd.f32 %v4193, %v4337
        %v4410 = vadd.f32 %v4194, %v4337
        %v4411 = vadd.f32 %v4195, %v4342
        %v4412 = vadd.f32 %v4196, %v4342
        %v4413 = vadd.f32 %v4197, %v4347
        %v4414 = vadd.f32 %v4198, %v4347
        %v4415 = vadd.f32 %v4199, %v4352
        %v4416 = vadd.f32 %v4200, %v4352
        %v4417 = vadd.f32 %v4201, %v4357
        %v4418 = vadd.f32 %v4202, %v4357
        %v4419 = vadd.f32 %v4203, %v4362
        %v4420 = vadd.f32 %v4204, %v4362
        %v4421 = vadd.f32 %v4205, %v4367
        %v4422 = vadd.f32 %v4206, %v4367
        %v4423 = vmax.f32 %v4369, 0.0
        %v4424 = vmax.f32 %v4370, 0.0
        %v4425 = vmax.f32 %v4371, 0.0
        %v4426 = vmax.f32 %v4372, 0.0
        %v4427 = vmax.f32 %v4373, 0.0
        %v4428 = vmax.f32 %v4374, 0.0
        %v4429 = vmax.f32 %v4375, 0.0
        %v4430 = vmax.f32 %v4376, 0.0
        %v4431 = vmax.f32 %v4377, 0.0
        %v4432 = vmax.f32 %v4378, 0.0
        %v4433 = vmax.f32 %v4379, 0.0
        %v4434 = vmax.f32 %v4380, 0.0
        %v4435 = vmax.f32 %v4381, 0.0
        %v4436 = vmax.f32 %v4382, 0.0
        %v4437 = vmax.f32 %v4383, 0.0
        %v4438 = vmax.f32 %v4384, 0.0
        %v4439 = vmax.f32 %v4385, 0.0
        %v4440 = vmax.f32 %v4386, 0.0
        %v4441 = vmax.f32 %v4387, 0.0
        %v4442 = vmax.f32 %v4388, 0.0
        %v4443 = vmax.f32 %v4389, 0.0
        %v4444 = vmax.f32 %v4390, 0.0
        %v4445 = vmax.f32 %v4391, 0.0
        %v4446 = vmax.f32 %v4392, 0.0
        %v4447 = vmax.f32 %v4393, 0.0
        %v4448 = vmax.f32 %v4394, 0.0
        %v4449 = vmax.f32 %v4395, 0.0
        %v4450 = vmax.f32 %v4396, 0.0
        %v4451 = vmax.f32 %v4397, 0.0
        %v4452 = vmax.f32 %v4398, 0.0
        %v4453 = vmax.f32 %v4399, 0.0
        %v4454 = vmax.f32 %v4400, 0.0
        %v4455 = vmax.f32 %v4401, 0.0
        %v4456 = vmax.f32 %v4402, 0.0
        %v4457 = vmax.f32 %v4403, 0.0
        %v4458 = vmax.f32 %v4404, 0.0
        %v4459 = vmax.f32 %v4405, 0.0
        %v4460 = vmax.f32 %v4406, 0.0
        %v4461 = vmax.f32 %v4407, 0.0
        %v4462 = vmax.f32 %v4408, 0.0
        %v4463 = vmax.f32 %v4409, 0.0
        %v4464 = vmax.f32 %v4410, 0.0
        %v4465 = vmax.f32 %v4411, 0.0
        %v4466 = vmax.f32 %v4412, 0.0
        %v4467 = vmax.f32 %v4413, 0.0
        %v4468 = vmax.f32 %v4414, 0.0
        %v4469 = vmax.f32 %v4415, 0.0
        %v4470 = vmax.f32 %v4416, 0.0
        %v4471 = vmax.f32 %v4417, 0.0
        %v4472 = vmax.f32 %v4418, 0.0
        %v4473 = vmax.f32 %v4419, 0.0
        %v4474 = vmax.f32 %v4420, 0.0
        %v4475 = vmax.f32 %v4421, 0.0
        %v4476 = vmax.f32 %v4422, 0.0
        %4477 = vst [vmem:[%s314] sm:$0xff] %v4423
        %vm4478 = vcmask 556032
        %4479 = vst.msk [vmem:[%s314 + $0x8] sm:$0xff] %vm4478, %v4424
        %4480 = vst [vmem:[%s314 + $0x10] sm:$0xff] %v4425
        %4481 = vst.msk [vmem:[%s314 + $0x18] sm:$0xff] %vm4478, %v4426
        %4482 = vst [vmem:[%s314 + $0x20] sm:$0xff] %v4427
        %4483 = vst.msk [vmem:[%s314 + $0x28] sm:$0xff] %vm4478, %v4428
        %4484 = vst [vmem:[%s314 + $0x30] sm:$0xff] %v4429
        %4485 = vst.msk [vmem:[%s314 + $0x38] sm:$0xff] %vm4478, %v4430
        %4486 = vst [vmem:[%s314 + $0x40] sm:$0xff] %v4431
        %4487 = vst.msk [vmem:[%s314 + $0x48] sm:$0xff] %vm4478, %v4432
        %4488 = vst [vmem:[%s314 + $0x50] sm:$0xff] %v4433
        %4489 = vst.msk [vmem:[%s314 + $0x58] sm:$0xff] %vm4478, %v4434
        %4490 = vst [vmem:[%s314 + $0x60] sm:$0xff] %v4435
        %4491 = vst.msk [vmem:[%s314 + $0x68] sm:$0xff] %vm4478, %v4436
        %4492 = vst [vmem:[%s314 + $0x70] sm:$0xff] %v4437
        %4493 = vst.msk [vmem:[%s314 + $0x78] sm:$0xff] %vm4478, %v4438
        %4494 = vst [vmem:[%s314 + $0x80] sm:$0xff] %v4439
        %4495 = vst.msk [vmem:[%s314 + $0x88] sm:$0xff] %vm4478, %v4440
        %4496 = vst [vmem:[%s314 + $0x90] sm:$0xff] %v4441
        %4497 = vst.msk [vmem:[%s314 + $0x98] sm:$0xff] %vm4478, %v4442
        %4498 = vst [vmem:[%s314 + $0xa0] sm:$0xff] %v4443
        %4499 = vst.msk [vmem:[%s314 + $0xa8] sm:$0xff] %vm4478, %v4444
        %4500 = vst [vmem:[%s314 + $0xb0] sm:$0xff] %v4445
        %4501 = vst.msk [vmem:[%s314 + $0xb8] sm:$0xff] %vm4478, %v4446
        %4502 = vst [vmem:[%s314 + $0xc0] sm:$0xff] %v4447
        %4503 = vst.msk [vmem:[%s314 + $0xc8] sm:$0xff] %vm4478, %v4448
        %4504 = vst [vmem:[%s314 + $0xd0] sm:$0xff] %v4449
        %4505 = vst.msk [vmem:[%s314 + $0xd8] sm:$0xff] %vm4478, %v4450
        %4506 = vst [vmem:[%s314 + $0xe0] sm:$0xff] %v4451
        %4507 = vst.msk [vmem:[%s314 + $0xe8] sm:$0xff] %vm4478, %v4452
        %4508 = vst [vmem:[%s314 + $0xf0] sm:$0xff] %v4453
        %4509 = vst.msk [vmem:[%s314 + $0xf8] sm:$0xff] %vm4478, %v4454
        %4510 = vst [vmem:[%s314 + $0x100] sm:$0xff] %v4455
        %4511 = vst.msk [vmem:[%s314 + $0x108] sm:$0xff] %vm4478, %v4456
        %4512 = vst [vmem:[%s314 + $0x110] sm:$0xff] %v4457
        %4513 = vst.msk [vmem:[%s314 + $0x118] sm:$0xff] %vm4478, %v4458
        %4514 = vst [vmem:[%s314 + $0x120] sm:$0xff] %v4459
        %4515 = vst.msk [vmem:[%s314 + $0x128] sm:$0xff] %vm4478, %v4460
        %4516 = vst [vmem:[%s314 + $0x130] sm:$0xff] %v4461
        %4517 = vst.msk [vmem:[%s314 + $0x138] sm:$0xff] %vm4478, %v4462
        %4518 = vst [vmem:[%s314 + $0x140] sm:$0xff] %v4463
        %4519 = vst.msk [vmem:[%s314 + $0x148] sm:$0xff] %vm4478, %v4464
        %4520 = vst [vmem:[%s314 + $0x150] sm:$0xff] %v4465
        %4521 = vst.msk [vmem:[%s314 + $0x158] sm:$0xff] %vm4478, %v4466
        %4522 = vst [vmem:[%s314 + $0x160] sm:$0xff] %v4467
        %4523 = vst.msk [vmem:[%s314 + $0x168] sm:$0xff] %vm4478, %v4468
        %4524 = vst [vmem:[%s314 + $0x170] sm:$0xff] %v4469
        %4525 = vst.msk [vmem:[%s314 + $0x178] sm:$0xff] %vm4478, %v4470
        %4526 = vst [vmem:[%s314 + $0x180] sm:$0xff] %v4471
        %4527 = vst.msk [vmem:[%s314 + $0x188] sm:$0xff] %vm4478, %v4472
        %4528 = vst [vmem:[%s314 + $0x190] sm:$0xff] %v4473
        %4529 = vst.msk [vmem:[%s314 + $0x198] sm:$0xff] %vm4478, %v4474
        %4530 = vst [vmem:[%s314 + $0x1a0] sm:$0xff] %v4475
        %4531 = vst.msk [vmem:[%s314 + $0x1a8] sm:$0xff] %vm4478, %v4476
      $region60: #{tpu_custom_call.1} parent=43 // pred_fallthru
        _
      %s4532 = smul.u32 %s22, %s21
      %p4533 = scmp.lt.s32.totalorder %s4532, 1
      %s4534 = scalar_select %p4533, %s4532, 1
      %s4535 = smul.addr %s4534, 54
      %s4536 = smul.addr %s4535, 8
      %s4537 = scalar_lea.vmem %s6, %s4536
      // Predicated region
      $region61: #{tpu_custom_call.1} parent=43 // pred_check
        %p4538 = pneg %p192
      $region62: #{tpu_custom_call.1} parent=43 // pred_check_branch
        %4540 = sbr.rel (%p4538) target = $region64
      $region63: #{tpu_custom_call.1} parent=43 // pred_region
        %s4541 = smul.u32 %s22, %s21
      $region64: #{tpu_custom_call.1} parent=43 // pred_fallthru
        _
    $region44: #{tpu_custom_call.1} parent=5 // pred_fallthru
      _
    %p4542 = scmp.le.s32.totalorder 2, %s12
    // Predicated region
    $region65: #{tpu_custom_call.1} parent=5 // pred_check
      %p4543 = pneg %p4542
    $region66: #{tpu_custom_call.1} parent=5 // pred_check_branch
      %4545 = sbr.rel (%p4543) target = $region68
    $region67: #{tpu_custom_call.1} parent=5 // pred_region
      %s4546 = ssub.s32 %s12, 2
      // Predicated region
      $region69: #{tpu_custom_call.1} parent=67 // pred_check
        %p4547 = pneg %p198
      $region70: #{tpu_custom_call.1} parent=67 // pred_check_branch
        %4549 = sbr.rel (%p4547) target = $region72
      $region71: #{tpu_custom_call.1} parent=67 // pred_region
        %s4550 = smul.u32 %s24, %s23
        %p4551 = scmp.lt.s32.totalorder %s4550, 1
        %s4552 = scalar_select %p4551, %s4550, 1
        %s4553 = smul.addr %s4552, 54
        %s4554 = smul.addr %s4553, 8
        %s4555 = scalar_lea.vmem %s6, %s4554
      $region72: #{tpu_custom_call.1} parent=67 // pred_fallthru
        _
    $region68: #{tpu_custom_call.1} parent=5 // pred_fallthru
      _
  $region6: #{tpu_custom_call.1} parent=0 // loop_footer
    %s16 = sadd.s32 1, %s12
  $region7: #{tpu_custom_call.1} parent=0 // loop_footer_branch
    %11 = sbr.rel target = $region3
  $region8: #{tpu_custom_call.1} parent=0 // loop_exit
    _

</llo_original>
